<compile_context>
chip_gen: v6e
topology: v6e:2x2x1
jax: 0.10.0
libtpu: 0.0.40
codegen_flags: <defaults>
</compile_context>

<pallas_src>
import jax
import jax.numpy as jnp
from jax.experimental import pallas as pl
from jax.experimental.pallas import tpu as pltpu

_TAPS = tuple((di, dj) for di in range(3) for dj in range(3))
_EPS = 1e-5


def relation_network_kernel(x_ref, w1_ref, b1_ref, w2_ref, b2_ref,
                            w3_ref, b3_ref, w4_ref, b4_ref, out_ref,
                            pad2_ref):
    # x_ref: (7, 7, TN, 64) -- spatially zero-padded input tile, (H, W, N, C).
    TN = x_ref.shape[2]
    C = x_ref.shape[3]            # 64

    # ---- layer1: 3x3 conv (64->64, pad 1) + folded BN + ReLU ----------------
    # One MXU matmul per filter tap over the whole batch tile:
    # (25*TN, 64) @ (64, 64).  The reshape is tile-aligned (TN % 8 == 0).
    acc = jnp.zeros((25 * TN, C), jnp.float32)
    for k, (di, dj) in enumerate(_TAPS):
        lhs = x_ref[di:di + 5, dj:dj + 5, :, :].reshape(25 * TN, C)
        acc = acc + jnp.dot(lhs, w1_ref[k], preferred_element_type=jnp.float32)
    y1 = jnp.maximum(acc + b1_ref[...], 0.0).reshape(5, 5, TN, C)

    # ---- maxpool1: kernel 2, stride 2, padding 1 : 5x5 -> 3x3 ---------------
    # PyTorch pads max-pool with -inf (padded positions never win), so we take
    # the max over the valid elements of each window only.
    r0 = y1[0]                                   # (5, TN, C)
    r1 = jnp.maximum(y1[1], y1[2])
    r2 = jnp.maximum(y1[3], y1[4])

    # Zero only the halo of the conv2 input buffer (the 3x3 interior is fully
    # overwritten below).  Done every grid step so the kernel stays correct
    # when the batch axis is sharded across TensorCores ("parallel" semantics);
    # the halo is only 16 * TN * 64 floats, negligible vs. the conv traffic.
    zrow = jnp.zeros((5, TN, C), jnp.float32)
    zcol = jnp.zeros((3, TN, C), jnp.float32)
    pad2_ref[0] = zrow
    pad2_ref[4] = zrow
    pad2_ref[1:4, 0] = zcol
    pad2_ref[1:4, 4] = zcol

    for oh, r in enumerate((r0, r1, r2)):        # r: (5, TN, C)
        pad2_ref[oh + 1, 1] = r[0]
        pad2_ref[oh + 1, 2] = jnp.maximum(r[1], r[2])
        pad2_ref[oh + 1, 3] = jnp.maximum(r[3], r[4])

    # ---- layer2: 3x3 conv (64->1, pad 1) + folded BN + ReLU -----------------
    # Accumulate the 9 weighted tap slabs on the VPU, then one cross-lane
    # reduction over the 64 input channels.
    w2_all = w2_ref[...]                                        # (9, 64)
    acc2 = jnp.zeros((3, 3, TN, C), jnp.float32)
    for k, (di, dj) in enumerate(_TAPS):
        acc2 = acc2 + pad2_ref[di:di + 3, dj:dj + 3, :, :] * w2_all[k:k + 1, :]
    y2 = jnp.maximum(jnp.sum(acc2, axis=-1) + b2_ref[...], 0.0)  # (3, 3, TN)

    # ---- maxpool2 (3x3 -> 2x2, pad 1), flatten, fc3+ReLU, fc4 ---------------
    # Batch stays on the lane axis -> lane-dense (1, TN) output store.
    f00 = y2[0, 0:1, :]                                          # (1, TN)
    f01 = jnp.maximum(y2[0, 1:2, :], y2[0, 2:3, :])
    f10 = jnp.maximum(y2[1, 0:1, :], y2[2, 0:1, :])
    f11 = jnp.maximum(jnp.maximum(y2[1, 1:2, :], y2[1, 2:3, :]),
                      jnp.maximum(y2[2, 1:2, :], y2[2, 2:3, :]))

    h = (w3_ref[:, 0:1] * f00 + w3_ref[:, 1:2] * f01 +
         w3_ref[:, 2:3] * f10 + w3_ref[:, 3:4] * f11 + b3_ref[...])   # (8, TN)
    h = jnp.maximum(h, 0.0)
    out_ref[...] = (jnp.sum(h * w4_ref[...], axis=0, keepdims=True)
                    + b4_ref[...])                                    # (1, TN)


def _full_spec(shape):
    nd = len(shape)
    return pl.BlockSpec(shape, lambda i, _nd=nd: (0,) * _nd)


def _batch_tile(n):
    # Tile of 128 images (~8 MiB peak VMEM per tile: fits every generation's
    # scoped default); for small batches round up to the 8-sublane granule.
    if n >= 128:
        return 128
    return max(8, ((n + 7) // 8) * 8)


def init_params(key):
    ks = jax.random.split(key, 16)
    u = lambda k, s, lo=-0.1, hi=0.1: jax.random.uniform(k, s, jnp.float32, lo, hi)
    return {
        "conv1_w": u(ks[0], (64, 64, 3, 3)), "conv1_b": u(ks[1], (64,)),
        "bn1_g": 1.0 + u(ks[2], (64,)), "bn1_b": u(ks[3], (64,)),
        "bn1_m": u(ks[4], (64,)),
        "bn1_v": jax.random.uniform(ks[5], (64,), jnp.float32, 0.5, 1.5),
        "conv2_w": u(ks[6], (1, 64, 3, 3)), "conv2_b": u(ks[7], (1,)),
        "bn2_g": 1.0 + u(ks[8], (1,)), "bn2_b": u(ks[9], (1,)),
        "bn2_m": u(ks[10], (1,)),
        "bn2_v": jax.random.uniform(ks[11], (1,), jnp.float32, 0.5, 1.5),
        "fc3_w": u(ks[12], (8, 4)), "fc3_b": u(ks[13], (8,)),
        "fc4_w": u(ks[14], (1, 8)), "fc4_b": u(ks[15], (1,)),
    }


def _fold_params(p):
    # Fold inference-mode BatchNorm (+ conv bias) into per-channel scale/bias.
    s1 = p["bn1_g"] / jnp.sqrt(p["bn1_v"] + _EPS)                 # (64,)
    w1 = p["conv1_w"] * s1[:, None, None, None]                   # (64,64,3,3)
    b1 = (p["conv1_b"] - p["bn1_m"]) * s1 + p["bn1_b"]            # (64,)
    w1_k = jnp.transpose(w1, (2, 3, 1, 0)).reshape(9, 64, 64)     # (tap,cin,cout)
    b1_k = b1.reshape(1, 64)

    s2 = p["bn2_g"] / jnp.sqrt(p["bn2_v"] + _EPS)                 # (1,)
    w2 = p["conv2_w"][0] * s2[0]                                  # (64,3,3)
    b2 = (p["conv2_b"] - p["bn2_m"]) * s2 + p["bn2_b"]            # (1,)
    w2_k = jnp.transpose(w2, (1, 2, 0)).reshape(9, 64)            # (tap, cin)
    b2_k = b2.reshape(1, 1)

    w3_k = p["fc3_w"]                                             # (8, 4)
    b3_k = p["fc3_b"].reshape(8, 1)
    w4_k = p["fc4_w"].reshape(8, 1)                               # (8, 1)
    b4_k = p["fc4_b"].reshape(1, 1)
    return w1_k, b1_k, w2_k, b2_k, w3_k, b3_k, w4_k, b4_k


@jax.jit
def relation_network_forward(x, params):
    # Mirror `x.view(-1, 64, 5, 5)`, go NCHW -> (H, W, N, C) and add the conv1
    # zero halo + batch padding here in glue (cheap XLA ops, no in-kernel copy).
    x = x.reshape(-1, 64, 5, 5).astype(jnp.float32)
    n = x.shape[0]
    tn = _batch_tile(n)
    n_pad = ((n + tn - 1) // tn) * tn

    x_hwnc = jnp.transpose(x, (2, 3, 0, 1))                       # (5, 5, N, 64)
    x_hwnc = jnp.pad(x_hwnc, ((1, 1), (1, 1), (0, n_pad - n), (0, 0)))

    args = (x_hwnc,) + _fold_params(params)
    in_specs = [pl.BlockSpec((7, 7, tn, 64), lambda i: (0, 0, i, 0))]
    in_specs += [_full_spec(a.shape) for a in args[1:]]

    out = pl.pallas_call(
        relation_network_kernel,
        out_shape=jax.ShapeDtypeStruct((1, n_pad), jnp.float32),
        grid=(n_pad // tn,),
        in_specs=in_specs,
        out_specs=pl.BlockSpec((1, tn), lambda i: (0, i)),
        scratch_shapes=[
            pltpu.VMEM((5, 5, tn, 64), jnp.float32),   # zero-haloed conv2 input
        ],
        compiler_params=pltpu.CompilerParams(
            dimension_semantics=("parallel",),         # v7x: shard tiles on 2 TCs
            vmem_limit_bytes=32 * 1024 * 1024,
        ),
    )(*args)
    return out[0, :n].reshape(n, 1)


def reference_forward(x, p):
    """Pure-JAX reference mirroring the PyTorch forward (inference-mode BN)."""
    xr = x.reshape(-1, 64, 5, 5).astype(jnp.float32)

    def conv(inp, w, b):
        y = jax.lax.conv_general_dilated(
            inp, w, window_strides=(1, 1), padding=((1, 1), (1, 1)),
            dimension_numbers=("NCHW", "OIHW", "NCHW"),
            precision=jax.lax.Precision.HIGHEST)
        return y + b[None, :, None, None]

    def bn(y, g, b, m, v):
        inv = g / jnp.sqrt(v + _EPS)
        return (y - m[None, :, None, None]) * inv[None, :, None, None] + b[None, :, None, None]

    def maxpool_k2_p1(y):
        return jax.lax.reduce_window(
            y, -jnp.inf, jax.lax.max,
            window_dimensions=(1, 1, 2, 2), window_strides=(1, 1, 2, 2),
            padding=((0, 0), (0, 0), (1, 1), (1, 1)))

    o = jnp.maximum(bn(conv(xr, p["conv1_w"], p["conv1_b"]),
                       p["bn1_g"], p["bn1_b"], p["bn1_m"], p["bn1_v"]), 0.0)
    o = maxpool_k2_p1(o)
    o = jnp.maximum(bn(conv(o, p["conv2_w"], p["conv2_b"]),
                       p["bn2_g"], p["bn2_b"], p["bn2_m"], p["bn2_v"]), 0.0)
    o = maxpool_k2_p1(o)
    o = o.reshape(o.shape[0], -1)                 # (N, 4)
    o = jnp.maximum(o @ p["fc3_w"].T + p["fc3_b"], 0.0)
    o = o @ p["fc4_w"].T + p["fc4_b"]
    return o.reshape(o.shape[0], -1)              # (N, 1)


if __name__ == "__main__":
    key = jax.random.PRNGKey(0)
    kx, kp = jax.random.split(key)
    x = jax.random.normal(kx, (2, 64, 5, 5), jnp.float32)   # batch of 2, 64ch, 5x5
    params = init_params(kp)

    out = jax.block_until_ready(relation_network_forward(x, params))
    assert out.shape == (2, 1) and out.dtype == jnp.float32

    ref = jax.block_until_ready(reference_forward(x, params))
    if not jnp.allclose(out, ref, atol=1e-3, rtol=1e-3):
        raise AssertionError(
            "Pallas kernel mismatch vs reference: max|diff|="
            f"{float(jnp.max(jnp.abs(out - ref)))}")
    print("KERNEL_OK")
</pallas_src>

<mosaic_0001>
module attributes {stable_mosaic.version = 11 : i64} {
  func.func @relation_network_kernel(%arg0: i32, %arg1: memref<7x7x8x64xf32, #tpu.memory_space<vmem>>, %arg2: memref<9x64x64xf32, #tpu.memory_space<vmem>>, %arg3: memref<1x64xf32, #tpu.memory_space<vmem>>, %arg4: memref<9x64xf32, #tpu.memory_space<vmem>>, %arg5: memref<1x1xf32, #tpu.memory_space<vmem>>, %arg6: memref<8x4xf32, #tpu.memory_space<vmem>>, %arg7: memref<8x1xf32, #tpu.memory_space<vmem>>, %arg8: memref<8x1xf32, #tpu.memory_space<vmem>>, %arg9: memref<1x1xf32, #tpu.memory_space<vmem>>, %arg10: memref<1x8xf32, #tpu.memory_space<vmem>>, %arg11: memref<5x5x8x64xf32, #tpu.memory_space<vmem>>) attributes {dimension_semantics = [#tpu.dimension_semantics<parallel>], iteration_bounds = array<i64: 1>, scalar_prefetch = 0 : i64, scratch_operands = 1 : i64, tpu.core_type = #tpu.core_type<tc>, window_params = [{transform_indices = @transform_0, window_bounds = array<i64: 7, 7, 8, 64>}, {pipeline_mode = #tpu.pipeline_mode<synchronous>, transform_indices = @transform_1, window_bounds = array<i64: 9, 64, 64>}, {pipeline_mode = #tpu.pipeline_mode<synchronous>, transform_indices = @transform_2, window_bounds = array<i64: 1, 64>}, {pipeline_mode = #tpu.pipeline_mode<synchronous>, transform_indices = @transform_3, window_bounds = array<i64: 9, 64>}, {pipeline_mode = #tpu.pipeline_mode<synchronous>, transform_indices = @transform_4, window_bounds = array<i64: 1, 1>}, {pipeline_mode = #tpu.pipeline_mode<synchronous>, transform_indices = @transform_5, window_bounds = array<i64: 8, 4>}, {pipeline_mode = #tpu.pipeline_mode<synchronous>, transform_indices = @transform_6, window_bounds = array<i64: 8, 1>}, {pipeline_mode = #tpu.pipeline_mode<synchronous>, transform_indices = @transform_7, window_bounds = array<i64: 8, 1>}, {pipeline_mode = #tpu.pipeline_mode<synchronous>, transform_indices = @transform_8, window_bounds = array<i64: 1, 1>}, {transform_indices = @transform_9, window_bounds = array<i64: 1, 8>}]} {
    %cst = arith.constant 0.000000e+00 : f32
    %0 = vector.broadcast %cst : f32 to vector<200x64xf32>
    %c0 = arith.constant 0 : index
    %c0_0 = arith.constant 0 : index
    %c0_1 = arith.constant 0 : index
    %c0_2 = arith.constant 0 : index
    %1 = vector.load %arg1[%c0, %c0_0, %c0_1, %c0_2] : memref<7x7x8x64xf32, #tpu.memory_space<vmem>>, vector<5x5x8x64xf32>
    %2 = vector.shape_cast %1 : vector<5x5x8x64xf32> to vector<200x64xf32>
    %c0_3 = arith.constant 0 : index
    %c0_4 = arith.constant 0 : index
    %c0_5 = arith.constant 0 : index
    %3 = vector.load %arg2[%c0_3, %c0_4, %c0_5] : memref<9x64x64xf32, #tpu.memory_space<vmem>>, vector<1x64x64xf32>
    %4 = vector.shape_cast %3 : vector<1x64x64xf32> to vector<64x64xf32>
    %cst_6 = arith.constant dense<0.000000e+00> : vector<200x64xf32>
    %5 = tpu.matmul %2, %4, %cst_6 {dimension_numbers = #tpu.dot_dimension_numbers<[1], [0], [0], [1], [0, 0, 1, 1], [], []>} : vector<200x64xf32>, vector<64x64xf32>, vector<200x64xf32> -> vector<200x64xf32>
    %6 = arith.addf %0, %5 : vector<200x64xf32>
    %c0_7 = arith.constant 0 : index
    %c1 = arith.constant 1 : index
    %c0_8 = arith.constant 0 : index
    %c0_9 = arith.constant 0 : index
    %7 = vector.load %arg1[%c0_7, %c1, %c0_8, %c0_9] : memref<7x7x8x64xf32, #tpu.memory_space<vmem>>, vector<5x5x8x64xf32>
    %8 = vector.shape_cast %7 : vector<5x5x8x64xf32> to vector<200x64xf32>
    %c1_10 = arith.constant 1 : index
    %c0_11 = arith.constant 0 : index
    %c0_12 = arith.constant 0 : index
    %9 = vector.load %arg2[%c1_10, %c0_11, %c0_12] : memref<9x64x64xf32, #tpu.memory_space<vmem>>, vector<1x64x64xf32>
    %10 = vector.shape_cast %9 : vector<1x64x64xf32> to vector<64x64xf32>
    %cst_13 = arith.constant dense<0.000000e+00> : vector<200x64xf32>
    %11 = tpu.matmul %8, %10, %cst_13 {dimension_numbers = #tpu.dot_dimension_numbers<[1], [0], [0], [1], [0, 0, 1, 1], [], []>} : vector<200x64xf32>, vector<64x64xf32>, vector<200x64xf32> -> vector<200x64xf32>
    %12 = arith.addf %6, %11 : vector<200x64xf32>
    %c0_14 = arith.constant 0 : index
    %c2 = arith.constant 2 : index
    %c0_15 = arith.constant 0 : index
    %c0_16 = arith.constant 0 : index
    %13 = vector.load %arg1[%c0_14, %c2, %c0_15, %c0_16] : memref<7x7x8x64xf32, #tpu.memory_space<vmem>>, vector<5x5x8x64xf32>
    %14 = vector.shape_cast %13 : vector<5x5x8x64xf32> to vector<200x64xf32>
    %c2_17 = arith.constant 2 : index
    %c0_18 = arith.constant 0 : index
    %c0_19 = arith.constant 0 : index
    %15 = vector.load %arg2[%c2_17, %c0_18, %c0_19] : memref<9x64x64xf32, #tpu.memory_space<vmem>>, vector<1x64x64xf32>
    %16 = vector.shape_cast %15 : vector<1x64x64xf32> to vector<64x64xf32>
    %cst_20 = arith.constant dense<0.000000e+00> : vector<200x64xf32>
    %17 = tpu.matmul %14, %16, %cst_20 {dimension_numbers = #tpu.dot_dimension_numbers<[1], [0], [0], [1], [0, 0, 1, 1], [], []>} : vector<200x64xf32>, vector<64x64xf32>, vector<200x64xf32> -> vector<200x64xf32>
    %18 = arith.addf %12, %17 : vector<200x64xf32>
    %c1_21 = arith.constant 1 : index
    %c0_22 = arith.constant 0 : index
    %c0_23 = arith.constant 0 : index
    %c0_24 = arith.constant 0 : index
    %19 = vector.load %arg1[%c1_21, %c0_22, %c0_23, %c0_24] : memref<7x7x8x64xf32, #tpu.memory_space<vmem>>, vector<5x5x8x64xf32>
    %20 = vector.shape_cast %19 : vector<5x5x8x64xf32> to vector<200x64xf32>
    %c3 = arith.constant 3 : index
    %c0_25 = arith.constant 0 : index
    %c0_26 = arith.constant 0 : index
    %21 = vector.load %arg2[%c3, %c0_25, %c0_26] : memref<9x64x64xf32, #tpu.memory_space<vmem>>, vector<1x64x64xf32>
    %22 = vector.shape_cast %21 : vector<1x64x64xf32> to vector<64x64xf32>
    %cst_27 = arith.constant dense<0.000000e+00> : vector<200x64xf32>
    %23 = tpu.matmul %20, %22, %cst_27 {dimension_numbers = #tpu.dot_dimension_numbers<[1], [0], [0], [1], [0, 0, 1, 1], [], []>} : vector<200x64xf32>, vector<64x64xf32>, vector<200x64xf32> -> vector<200x64xf32>
    %24 = arith.addf %18, %23 : vector<200x64xf32>
    %c1_28 = arith.constant 1 : index
    %c1_29 = arith.constant 1 : index
    %c0_30 = arith.constant 0 : index
    %c0_31 = arith.constant 0 : index
    %25 = vector.load %arg1[%c1_28, %c1_29, %c0_30, %c0_31] : memref<7x7x8x64xf32, #tpu.memory_space<vmem>>, vector<5x5x8x64xf32>
    %26 = vector.shape_cast %25 : vector<5x5x8x64xf32> to vector<200x64xf32>
    %c4 = arith.constant 4 : index
    %c0_32 = arith.constant 0 : index
    %c0_33 = arith.constant 0 : index
    %27 = vector.load %arg2[%c4, %c0_32, %c0_33] : memref<9x64x64xf32, #tpu.memory_space<vmem>>, vector<1x64x64xf32>
    %28 = vector.shape_cast %27 : vector<1x64x64xf32> to vector<64x64xf32>
    %cst_34 = arith.constant dense<0.000000e+00> : vector<200x64xf32>
    %29 = tpu.matmul %26, %28, %cst_34 {dimension_numbers = #tpu.dot_dimension_numbers<[1], [0], [0], [1], [0, 0, 1, 1], [], []>} : vector<200x64xf32>, vector<64x64xf32>, vector<200x64xf32> -> vector<200x64xf32>
    %30 = arith.addf %24, %29 : vector<200x64xf32>
    %c1_35 = arith.constant 1 : index
    %c2_36 = arith.constant 2 : index
    %c0_37 = arith.constant 0 : index
    %c0_38 = arith.constant 0 : index
    %31 = vector.load %arg1[%c1_35, %c2_36, %c0_37, %c0_38] : memref<7x7x8x64xf32, #tpu.memory_space<vmem>>, vector<5x5x8x64xf32>
    %32 = vector.shape_cast %31 : vector<5x5x8x64xf32> to vector<200x64xf32>
    %c5 = arith.constant 5 : index
    %c0_39 = arith.constant 0 : index
    %c0_40 = arith.constant 0 : index
    %33 = vector.load %arg2[%c5, %c0_39, %c0_40] : memref<9x64x64xf32, #tpu.memory_space<vmem>>, vector<1x64x64xf32>
    %34 = vector.shape_cast %33 : vector<1x64x64xf32> to vector<64x64xf32>
    %cst_41 = arith.constant dense<0.000000e+00> : vector<200x64xf32>
    %35 = tpu.matmul %32, %34, %cst_41 {dimension_numbers = #tpu.dot_dimension_numbers<[1], [0], [0], [1], [0, 0, 1, 1], [], []>} : vector<200x64xf32>, vector<64x64xf32>, vector<200x64xf32> -> vector<200x64xf32>
    %36 = arith.addf %30, %35 : vector<200x64xf32>
    %c2_42 = arith.constant 2 : index
    %c0_43 = arith.constant 0 : index
    %c0_44 = arith.constant 0 : index
    %c0_45 = arith.constant 0 : index
    %37 = vector.load %arg1[%c2_42, %c0_43, %c0_44, %c0_45] : memref<7x7x8x64xf32, #tpu.memory_space<vmem>>, vector<5x5x8x64xf32>
    %38 = vector.shape_cast %37 : vector<5x5x8x64xf32> to vector<200x64xf32>
    %c6 = arith.constant 6 : index
    %c0_46 = arith.constant 0 : index
    %c0_47 = arith.constant 0 : index
    %39 = vector.load %arg2[%c6, %c0_46, %c0_47] : memref<9x64x64xf32, #tpu.memory_space<vmem>>, vector<1x64x64xf32>
    %40 = vector.shape_cast %39 : vector<1x64x64xf32> to vector<64x64xf32>
    %cst_48 = arith.constant dense<0.000000e+00> : vector<200x64xf32>
    %41 = tpu.matmul %38, %40, %cst_48 {dimension_numbers = #tpu.dot_dimension_numbers<[1], [0], [0], [1], [0, 0, 1, 1], [], []>} : vector<200x64xf32>, vector<64x64xf32>, vector<200x64xf32> -> vector<200x64xf32>
    %42 = arith.addf %36, %41 : vector<200x64xf32>
    %c2_49 = arith.constant 2 : index
    %c1_50 = arith.constant 1 : index
    %c0_51 = arith.constant 0 : index
    %c0_52 = arith.constant 0 : index
    %43 = vector.load %arg1[%c2_49, %c1_50, %c0_51, %c0_52] : memref<7x7x8x64xf32, #tpu.memory_space<vmem>>, vector<5x5x8x64xf32>
    %44 = vector.shape_cast %43 : vector<5x5x8x64xf32> to vector<200x64xf32>
    %c7 = arith.constant 7 : index
    %c0_53 = arith.constant 0 : index
    %c0_54 = arith.constant 0 : index
    %45 = vector.load %arg2[%c7, %c0_53, %c0_54] : memref<9x64x64xf32, #tpu.memory_space<vmem>>, vector<1x64x64xf32>
    %46 = vector.shape_cast %45 : vector<1x64x64xf32> to vector<64x64xf32>
    %cst_55 = arith.constant dense<0.000000e+00> : vector<200x64xf32>
    %47 = tpu.matmul %44, %46, %cst_55 {dimension_numbers = #tpu.dot_dimension_numbers<[1], [0], [0], [1], [0, 0, 1, 1], [], []>} : vector<200x64xf32>, vector<64x64xf32>, vector<200x64xf32> -> vector<200x64xf32>
    %48 = arith.addf %42, %47 : vector<200x64xf32>
    %c2_56 = arith.constant 2 : index
    %c2_57 = arith.constant 2 : index
    %c0_58 = arith.constant 0 : index
    %c0_59 = arith.constant 0 : index
    %49 = vector.load %arg1[%c2_56, %c2_57, %c0_58, %c0_59] : memref<7x7x8x64xf32, #tpu.memory_space<vmem>>, vector<5x5x8x64xf32>
    %50 = vector.shape_cast %49 : vector<5x5x8x64xf32> to vector<200x64xf32>
    %c8 = arith.constant 8 : index
    %c0_60 = arith.constant 0 : index
    %c0_61 = arith.constant 0 : index
    %51 = vector.load %arg2[%c8, %c0_60, %c0_61] : memref<9x64x64xf32, #tpu.memory_space<vmem>>, vector<1x64x64xf32>
    %52 = vector.shape_cast %51 : vector<1x64x64xf32> to vector<64x64xf32>
    %cst_62 = arith.constant dense<0.000000e+00> : vector<200x64xf32>
    %53 = tpu.matmul %50, %52, %cst_62 {dimension_numbers = #tpu.dot_dimension_numbers<[1], [0], [0], [1], [0, 0, 1, 1], [], []>} : vector<200x64xf32>, vector<64x64xf32>, vector<200x64xf32> -> vector<200x64xf32>
    %54 = arith.addf %48, %53 : vector<200x64xf32>
    %c0_63 = arith.constant 0 : index
    %c0_64 = arith.constant 0 : index
    %55 = vector.load %arg3[%c0_63, %c0_64] : memref<1x64xf32, #tpu.memory_space<vmem>>, vector<1x64xf32>
    %56 = vector.broadcast %55 : vector<1x64xf32> to vector<200x64xf32>
    %57 = arith.addf %54, %56 : vector<200x64xf32>
    %cst_65 = arith.constant 0.000000e+00 : f32
    %58 = vector.broadcast %cst_65 : f32 to vector<200x64xf32>
    %59 = arith.maximumf %57, %58 : vector<200x64xf32>
    %60 = vector.shape_cast %59 : vector<200x64xf32> to vector<5x5x8x64xf32>
    %61 = vector.extract_strided_slice %60 {offsets = [0, 0, 0, 0], sizes = [1, 5, 8, 64], strides = [1, 1, 1, 1]} : vector<5x5x8x64xf32> to vector<1x5x8x64xf32>
    %62 = vector.shape_cast %61 : vector<1x5x8x64xf32> to vector<5x8x64xf32>
    %63 = vector.extract_strided_slice %60 {offsets = [1, 0, 0, 0], sizes = [1, 5, 8, 64], strides = [1, 1, 1, 1]} : vector<5x5x8x64xf32> to vector<1x5x8x64xf32>
    %64 = vector.shape_cast %63 : vector<1x5x8x64xf32> to vector<5x8x64xf32>
    %65 = vector.extract_strided_slice %60 {offsets = [2, 0, 0, 0], sizes = [1, 5, 8, 64], strides = [1, 1, 1, 1]} : vector<5x5x8x64xf32> to vector<1x5x8x64xf32>
    %66 = vector.shape_cast %65 : vector<1x5x8x64xf32> to vector<5x8x64xf32>
    %67 = arith.maximumf %64, %66 : vector<5x8x64xf32>
    %68 = vector.extract_strided_slice %60 {offsets = [3, 0, 0, 0], sizes = [1, 5, 8, 64], strides = [1, 1, 1, 1]} : vector<5x5x8x64xf32> to vector<1x5x8x64xf32>
    %69 = vector.shape_cast %68 : vector<1x5x8x64xf32> to vector<5x8x64xf32>
    %70 = vector.extract_strided_slice %60 {offsets = [4, 0, 0, 0], sizes = [1, 5, 8, 64], strides = [1, 1, 1, 1]} : vector<5x5x8x64xf32> to vector<1x5x8x64xf32>
    %71 = vector.shape_cast %70 : vector<1x5x8x64xf32> to vector<5x8x64xf32>
    %72 = arith.maximumf %69, %71 : vector<5x8x64xf32>
    %cst_66 = arith.constant 0.000000e+00 : f32
    %73 = vector.broadcast %cst_66 : f32 to vector<5x8x64xf32>
    %cst_67 = arith.constant 0.000000e+00 : f32
    %74 = vector.broadcast %cst_67 : f32 to vector<3x8x64xf32>
    %c0_68 = arith.constant 0 : index
    %c0_69 = arith.constant 0 : index
    %c0_70 = arith.constant 0 : index
    %c0_71 = arith.constant 0 : index
    %75 = vector.load %arg11[%c0_68, %c0_69, %c0_70, %c0_71] : memref<5x5x8x64xf32, #tpu.memory_space<vmem>>, vector<1x5x8x64xf32>
    %76 = vector.shape_cast %75 : vector<1x5x8x64xf32> to vector<5x8x64xf32>
    %77 = vector.shape_cast %73 : vector<5x8x64xf32> to vector<1x5x8x64xf32>
    tpu.vector_store %arg11[%c0_68, %c0_69, %c0_70, %c0_71], %77 {strides = array<i32>} : memref<5x5x8x64xf32, #tpu.memory_space<vmem>>, vector<1x5x8x64xf32>,
    %c4_72 = arith.constant 4 : index
    %c0_73 = arith.constant 0 : index
    %c0_74 = arith.constant 0 : index
    %c0_75 = arith.constant 0 : index
    %78 = vector.load %arg11[%c4_72, %c0_73, %c0_74, %c0_75] : memref<5x5x8x64xf32, #tpu.memory_space<vmem>>, vector<1x5x8x64xf32>
    %79 = vector.shape_cast %78 : vector<1x5x8x64xf32> to vector<5x8x64xf32>
    %80 = vector.shape_cast %73 : vector<5x8x64xf32> to vector<1x5x8x64xf32>
    tpu.vector_store %arg11[%c4_72, %c0_73, %c0_74, %c0_75], %80 {strides = array<i32>} : memref<5x5x8x64xf32, #tpu.memory_space<vmem>>, vector<1x5x8x64xf32>,
    %c1_76 = arith.constant 1 : index
    %c0_77 = arith.constant 0 : index
    %c0_78 = arith.constant 0 : index
    %c0_79 = arith.constant 0 : index
    %81 = vector.load %arg11[%c1_76, %c0_77, %c0_78, %c0_79] : memref<5x5x8x64xf32, #tpu.memory_space<vmem>>, vector<3x1x8x64xf32>
    %82 = vector.shape_cast %81 : vector<3x1x8x64xf32> to vector<3x8x64xf32>
    %83 = vector.shape_cast %74 : vector<3x8x64xf32> to vector<3x1x8x64xf32>
    tpu.vector_store %arg11[%c1_76, %c0_77, %c0_78, %c0_79], %83 {strides = array<i32>} : memref<5x5x8x64xf32, #tpu.memory_space<vmem>>, vector<3x1x8x64xf32>,
    %c1_80 = arith.constant 1 : index
    %c4_81 = arith.constant 4 : index
    %c0_82 = arith.constant 0 : index
    %c0_83 = arith.constant 0 : index
    %84 = vector.load %arg11[%c1_80, %c4_81, %c0_82, %c0_83] : memref<5x5x8x64xf32, #tpu.memory_space<vmem>>, vector<3x1x8x64xf32>
    %85 = vector.shape_cast %84 : vector<3x1x8x64xf32> to vector<3x8x64xf32>
    %86 = vector.shape_cast %74 : vector<3x8x64xf32> to vector<3x1x8x64xf32>
    tpu.vector_store %arg11[%c1_80, %c4_81, %c0_82, %c0_83], %86 {strides = array<i32>} : memref<5x5x8x64xf32, #tpu.memory_space<vmem>>, vector<3x1x8x64xf32>,
    %87 = vector.extract_strided_slice %62 {offsets = [0, 0, 0], sizes = [1, 8, 64], strides = [1, 1, 1]} : vector<5x8x64xf32> to vector<1x8x64xf32>
    %88 = vector.shape_cast %87 : vector<1x8x64xf32> to vector<8x64xf32>
    %c1_84 = arith.constant 1 : index
    %c1_85 = arith.constant 1 : index
    %c0_86 = arith.constant 0 : index
    %c0_87 = arith.constant 0 : index
    %89 = vector.load %arg11[%c1_84, %c1_85, %c0_86, %c0_87] : memref<5x5x8x64xf32, #tpu.memory_space<vmem>>, vector<1x1x8x64xf32>
    %90 = vector.shape_cast %89 : vector<1x1x8x64xf32> to vector<8x64xf32>
    %91 = vector.shape_cast %88 : vector<8x64xf32> to vector<1x1x8x64xf32>
    tpu.vector_store %arg11[%c1_84, %c1_85, %c0_86, %c0_87], %91 {strides = array<i32>} : memref<5x5x8x64xf32, #tpu.memory_space<vmem>>, vector<1x1x8x64xf32>,
    %92 = vector.extract_strided_slice %62 {offsets = [1, 0, 0], sizes = [1, 8, 64], strides = [1, 1, 1]} : vector<5x8x64xf32> to vector<1x8x64xf32>
    %93 = vector.shape_cast %92 : vector<1x8x64xf32> to vector<8x64xf32>
    %94 = vector.extract_strided_slice %62 {offsets = [2, 0, 0], sizes = [1, 8, 64], strides = [1, 1, 1]} : vector<5x8x64xf32> to vector<1x8x64xf32>
    %95 = vector.shape_cast %94 : vector<1x8x64xf32> to vector<8x64xf32>
    %96 = arith.maximumf %93, %95 : vector<8x64xf32>
    %c1_88 = arith.constant 1 : index
    %c2_89 = arith.constant 2 : index
    %c0_90 = arith.constant 0 : index
    %c0_91 = arith.constant 0 : index
    %97 = vector.load %arg11[%c1_88, %c2_89, %c0_90, %c0_91] : memref<5x5x8x64xf32, #tpu.memory_space<vmem>>, vector<1x1x8x64xf32>
    %98 = vector.shape_cast %97 : vector<1x1x8x64xf32> to vector<8x64xf32>
    %99 = vector.shape_cast %96 : vector<8x64xf32> to vector<1x1x8x64xf32>
    tpu.vector_store %arg11[%c1_88, %c2_89, %c0_90, %c0_91], %99 {strides = array<i32>} : memref<5x5x8x64xf32, #tpu.memory_space<vmem>>, vector<1x1x8x64xf32>,
    %100 = vector.extract_strided_slice %62 {offsets = [3, 0, 0], sizes = [1, 8, 64], strides = [1, 1, 1]} : vector<5x8x64xf32> to vector<1x8x64xf32>
    %101 = vector.shape_cast %100 : vector<1x8x64xf32> to vector<8x64xf32>
    %102 = vector.extract_strided_slice %62 {offsets = [4, 0, 0], sizes = [1, 8, 64], strides = [1, 1, 1]} : vector<5x8x64xf32> to vector<1x8x64xf32>
    %103 = vector.shape_cast %102 : vector<1x8x64xf32> to vector<8x64xf32>
    %104 = arith.maximumf %101, %103 : vector<8x64xf32>
    %c1_92 = arith.constant 1 : index
    %c3_93 = arith.constant 3 : index
    %c0_94 = arith.constant 0 : index
    %c0_95 = arith.constant 0 : index
    %105 = vector.load %arg11[%c1_92, %c3_93, %c0_94, %c0_95] : memref<5x5x8x64xf32, #tpu.memory_space<vmem>>, vector<1x1x8x64xf32>
    %106 = vector.shape_cast %105 : vector<1x1x8x64xf32> to vector<8x64xf32>
    %107 = vector.shape_cast %104 : vector<8x64xf32> to vector<1x1x8x64xf32>
    tpu.vector_store %arg11[%c1_92, %c3_93, %c0_94, %c0_95], %107 {strides = array<i32>} : memref<5x5x8x64xf32, #tpu.memory_space<vmem>>, vector<1x1x8x64xf32>,
    %108 = vector.extract_strided_slice %67 {offsets = [0, 0, 0], sizes = [1, 8, 64], strides = [1, 1, 1]} : vector<5x8x64xf32> to vector<1x8x64xf32>
    %109 = vector.shape_cast %108 : vector<1x8x64xf32> to vector<8x64xf32>
    %c2_96 = arith.constant 2 : index
    %c1_97 = arith.constant 1 : index
    %c0_98 = arith.constant 0 : index
    %c0_99 = arith.constant 0 : index
    %110 = vector.load %arg11[%c2_96, %c1_97, %c0_98, %c0_99] : memref<5x5x8x64xf32, #tpu.memory_space<vmem>>, vector<1x1x8x64xf32>
    %111 = vector.shape_cast %110 : vector<1x1x8x64xf32> to vector<8x64xf32>
    %112 = vector.shape_cast %109 : vector<8x64xf32> to vector<1x1x8x64xf32>
    tpu.vector_store %arg11[%c2_96, %c1_97, %c0_98, %c0_99], %112 {strides = array<i32>} : memref<5x5x8x64xf32, #tpu.memory_space<vmem>>, vector<1x1x8x64xf32>,
    %113 = vector.extract_strided_slice %67 {offsets = [1, 0, 0], sizes = [1, 8, 64], strides = [1, 1, 1]} : vector<5x8x64xf32> to vector<1x8x64xf32>
    %114 = vector.shape_cast %113 : vector<1x8x64xf32> to vector<8x64xf32>
    %115 = vector.extract_strided_slice %67 {offsets = [2, 0, 0], sizes = [1, 8, 64], strides = [1, 1, 1]} : vector<5x8x64xf32> to vector<1x8x64xf32>
    %116 = vector.shape_cast %115 : vector<1x8x64xf32> to vector<8x64xf32>
    %117 = arith.maximumf %114, %116 : vector<8x64xf32>
    %c2_100 = arith.constant 2 : index
    %c2_101 = arith.constant 2 : index
    %c0_102 = arith.constant 0 : index
    %c0_103 = arith.constant 0 : index
    %118 = vector.load %arg11[%c2_100, %c2_101, %c0_102, %c0_103] : memref<5x5x8x64xf32, #tpu.memory_space<vmem>>, vector<1x1x8x64xf32>
    %119 = vector.shape_cast %118 : vector<1x1x8x64xf32> to vector<8x64xf32>
    %120 = vector.shape_cast %117 : vector<8x64xf32> to vector<1x1x8x64xf32>
    tpu.vector_store %arg11[%c2_100, %c2_101, %c0_102, %c0_103], %120 {strides = array<i32>} : memref<5x5x8x64xf32, #tpu.memory_space<vmem>>, vector<1x1x8x64xf32>,
    %121 = vector.extract_strided_slice %67 {offsets = [3, 0, 0], sizes = [1, 8, 64], strides = [1, 1, 1]} : vector<5x8x64xf32> to vector<1x8x64xf32>
    %122 = vector.shape_cast %121 : vector<1x8x64xf32> to vector<8x64xf32>
    %123 = vector.extract_strided_slice %67 {offsets = [4, 0, 0], sizes = [1, 8, 64], strides = [1, 1, 1]} : vector<5x8x64xf32> to vector<1x8x64xf32>
    %124 = vector.shape_cast %123 : vector<1x8x64xf32> to vector<8x64xf32>
    %125 = arith.maximumf %122, %124 : vector<8x64xf32>
    %c2_104 = arith.constant 2 : index
    %c3_105 = arith.constant 3 : index
    %c0_106 = arith.constant 0 : index
    %c0_107 = arith.constant 0 : index
    %126 = vector.load %arg11[%c2_104, %c3_105, %c0_106, %c0_107] : memref<5x5x8x64xf32, #tpu.memory_space<vmem>>, vector<1x1x8x64xf32>
    %127 = vector.shape_cast %126 : vector<1x1x8x64xf32> to vector<8x64xf32>
    %128 = vector.shape_cast %125 : vector<8x64xf32> to vector<1x1x8x64xf32>
    tpu.vector_store %arg11[%c2_104, %c3_105, %c0_106, %c0_107], %128 {strides = array<i32>} : memref<5x5x8x64xf32, #tpu.memory_space<vmem>>, vector<1x1x8x64xf32>,
    %129 = vector.extract_strided_slice %72 {offsets = [0, 0, 0], sizes = [1, 8, 64], strides = [1, 1, 1]} : vector<5x8x64xf32> to vector<1x8x64xf32>
    %130 = vector.shape_cast %129 : vector<1x8x64xf32> to vector<8x64xf32>
    %c3_108 = arith.constant 3 : index
    %c1_109 = arith.constant 1 : index
    %c0_110 = arith.constant 0 : index
    %c0_111 = arith.constant 0 : index
    %131 = vector.load %arg11[%c3_108, %c1_109, %c0_110, %c0_111] : memref<5x5x8x64xf32, #tpu.memory_space<vmem>>, vector<1x1x8x64xf32>
    %132 = vector.shape_cast %131 : vector<1x1x8x64xf32> to vector<8x64xf32>
    %133 = vector.shape_cast %130 : vector<8x64xf32> to vector<1x1x8x64xf32>
    tpu.vector_store %arg11[%c3_108, %c1_109, %c0_110, %c0_111], %133 {strides = array<i32>} : memref<5x5x8x64xf32, #tpu.memory_space<vmem>>, vector<1x1x8x64xf32>,
    %134 = vector.extract_strided_slice %72 {offsets = [1, 0, 0], sizes = [1, 8, 64], strides = [1, 1, 1]} : vector<5x8x64xf32> to vector<1x8x64xf32>
    %135 = vector.shape_cast %134 : vector<1x8x64xf32> to vector<8x64xf32>
    %136 = vector.extract_strided_slice %72 {offsets = [2, 0, 0], sizes = [1, 8, 64], strides = [1, 1, 1]} : vector<5x8x64xf32> to vector<1x8x64xf32>
    %137 = vector.shape_cast %136 : vector<1x8x64xf32> to vector<8x64xf32>
    %138 = arith.maximumf %135, %137 : vector<8x64xf32>
    %c3_112 = arith.constant 3 : index
    %c2_113 = arith.constant 2 : index
    %c0_114 = arith.constant 0 : index
    %c0_115 = arith.constant 0 : index
    %139 = vector.load %arg11[%c3_112, %c2_113, %c0_114, %c0_115] : memref<5x5x8x64xf32, #tpu.memory_space<vmem>>, vector<1x1x8x64xf32>
    %140 = vector.shape_cast %139 : vector<1x1x8x64xf32> to vector<8x64xf32>
    %141 = vector.shape_cast %138 : vector<8x64xf32> to vector<1x1x8x64xf32>
    tpu.vector_store %arg11[%c3_112, %c2_113, %c0_114, %c0_115], %141 {strides = array<i32>} : memref<5x5x8x64xf32, #tpu.memory_space<vmem>>, vector<1x1x8x64xf32>,
    %142 = vector.extract_strided_slice %72 {offsets = [3, 0, 0], sizes = [1, 8, 64], strides = [1, 1, 1]} : vector<5x8x64xf32> to vector<1x8x64xf32>
    %143 = vector.shape_cast %142 : vector<1x8x64xf32> to vector<8x64xf32>
    %144 = vector.extract_strided_slice %72 {offsets = [4, 0, 0], sizes = [1, 8, 64], strides = [1, 1, 1]} : vector<5x8x64xf32> to vector<1x8x64xf32>
    %145 = vector.shape_cast %144 : vector<1x8x64xf32> to vector<8x64xf32>
    %146 = arith.maximumf %143, %145 : vector<8x64xf32>
    %c3_116 = arith.constant 3 : index
    %c3_117 = arith.constant 3 : index
    %c0_118 = arith.constant 0 : index
    %c0_119 = arith.constant 0 : index
    %147 = vector.load %arg11[%c3_116, %c3_117, %c0_118, %c0_119] : memref<5x5x8x64xf32, #tpu.memory_space<vmem>>, vector<1x1x8x64xf32>
    %148 = vector.shape_cast %147 : vector<1x1x8x64xf32> to vector<8x64xf32>
    %149 = vector.shape_cast %146 : vector<8x64xf32> to vector<1x1x8x64xf32>
    tpu.vector_store %arg11[%c3_116, %c3_117, %c0_118, %c0_119], %149 {strides = array<i32>} : memref<5x5x8x64xf32, #tpu.memory_space<vmem>>, vector<1x1x8x64xf32>,
    %c0_120 = arith.constant 0 : index
    %c0_121 = arith.constant 0 : index
    %150 = vector.load %arg4[%c0_120, %c0_121] : memref<9x64xf32, #tpu.memory_space<vmem>>, vector<9x64xf32>
    %cst_122 = arith.constant 0.000000e+00 : f32
    %151 = vector.broadcast %cst_122 : f32 to vector<3x3x8x64xf32>
    %c0_123 = arith.constant 0 : index
    %c0_124 = arith.constant 0 : index
    %c0_125 = arith.constant 0 : index
    %c0_126 = arith.constant 0 : index
    %152 = vector.load %arg11[%c0_123, %c0_124, %c0_125, %c0_126] : memref<5x5x8x64xf32, #tpu.memory_space<vmem>>, vector<3x3x8x64xf32>
    %153 = vector.extract_strided_slice %150 {offsets = [0, 0], sizes = [1, 64], strides = [1, 1]} : vector<9x64xf32> to vector<1x64xf32>
    %154 = vector.shape_cast %153 : vector<1x64xf32> to vector<1x1x1x64xf32>
    %155 = vector.broadcast %154 : vector<1x1x1x64xf32> to vector<3x3x8x64xf32>
    %156 = arith.mulf %152, %155 : vector<3x3x8x64xf32>
    %157 = arith.addf %151, %156 : vector<3x3x8x64xf32>
    %c0_127 = arith.constant 0 : index
    %c1_128 = arith.constant 1 : index
    %c0_129 = arith.constant 0 : index
    %c0_130 = arith.constant 0 : index
    %158 = vector.load %arg11[%c0_127, %c1_128, %c0_129, %c0_130] : memref<5x5x8x64xf32, #tpu.memory_space<vmem>>, vector<3x3x8x64xf32>
    %159 = vector.extract_strided_slice %150 {offsets = [1, 0], sizes = [1, 64], strides = [1, 1]} : vector<9x64xf32> to vector<1x64xf32>
    %160 = vector.shape_cast %159 : vector<1x64xf32> to vector<1x1x1x64xf32>
    %161 = vector.broadcast %160 : vector<1x1x1x64xf32> to vector<3x3x8x64xf32>
    %162 = arith.mulf %158, %161 : vector<3x3x8x64xf32>
    %163 = arith.addf %157, %162 : vector<3x3x8x64xf32>
    %c0_131 = arith.constant 0 : index
    %c2_132 = arith.constant 2 : index
    %c0_133 = arith.constant 0 : index
    %c0_134 = arith.constant 0 : index
    %164 = vector.load %arg11[%c0_131, %c2_132, %c0_133, %c0_134] : memref<5x5x8x64xf32, #tpu.memory_space<vmem>>, vector<3x3x8x64xf32>
    %165 = vector.extract_strided_slice %150 {offsets = [2, 0], sizes = [1, 64], strides = [1, 1]} : vector<9x64xf32> to vector<1x64xf32>
    %166 = vector.shape_cast %165 : vector<1x64xf32> to vector<1x1x1x64xf32>
    %167 = vector.broadcast %166 : vector<1x1x1x64xf32> to vector<3x3x8x64xf32>
    %168 = arith.mulf %164, %167 : vector<3x3x8x64xf32>
    %169 = arith.addf %163, %168 : vector<3x3x8x64xf32>
    %c1_135 = arith.constant 1 : index
    %c0_136 = arith.constant 0 : index
    %c0_137 = arith.constant 0 : index
    %c0_138 = arith.constant 0 : index
    %170 = vector.load %arg11[%c1_135, %c0_136, %c0_137, %c0_138] : memref<5x5x8x64xf32, #tpu.memory_space<vmem>>, vector<3x3x8x64xf32>
    %171 = vector.extract_strided_slice %150 {offsets = [3, 0], sizes = [1, 64], strides = [1, 1]} : vector<9x64xf32> to vector<1x64xf32>
    %172 = vector.shape_cast %171 : vector<1x64xf32> to vector<1x1x1x64xf32>
    %173 = vector.broadcast %172 : vector<1x1x1x64xf32> to vector<3x3x8x64xf32>
    %174 = arith.mulf %170, %173 : vector<3x3x8x64xf32>
    %175 = arith.addf %169, %174 : vector<3x3x8x64xf32>
    %c1_139 = arith.constant 1 : index
    %c1_140 = arith.constant 1 : index
    %c0_141 = arith.constant 0 : index
    %c0_142 = arith.constant 0 : index
    %176 = vector.load %arg11[%c1_139, %c1_140, %c0_141, %c0_142] : memref<5x5x8x64xf32, #tpu.memory_space<vmem>>, vector<3x3x8x64xf32>
    %177 = vector.extract_strided_slice %150 {offsets = [4, 0], sizes = [1, 64], strides = [1, 1]} : vector<9x64xf32> to vector<1x64xf32>
    %178 = vector.shape_cast %177 : vector<1x64xf32> to vector<1x1x1x64xf32>
    %179 = vector.broadcast %178 : vector<1x1x1x64xf32> to vector<3x3x8x64xf32>
    %180 = arith.mulf %176, %179 : vector<3x3x8x64xf32>
    %181 = arith.addf %175, %180 : vector<3x3x8x64xf32>
    %c1_143 = arith.constant 1 : index
    %c2_144 = arith.constant 2 : index
    %c0_145 = arith.constant 0 : index
    %c0_146 = arith.constant 0 : index
    %182 = vector.load %arg11[%c1_143, %c2_144, %c0_145, %c0_146] : memref<5x5x8x64xf32, #tpu.memory_space<vmem>>, vector<3x3x8x64xf32>
    %183 = vector.extract_strided_slice %150 {offsets = [5, 0], sizes = [1, 64], strides = [1, 1]} : vector<9x64xf32> to vector<1x64xf32>
    %184 = vector.shape_cast %183 : vector<1x64xf32> to vector<1x1x1x64xf32>
    %185 = vector.broadcast %184 : vector<1x1x1x64xf32> to vector<3x3x8x64xf32>
    %186 = arith.mulf %182, %185 : vector<3x3x8x64xf32>
    %187 = arith.addf %181, %186 : vector<3x3x8x64xf32>
    %c2_147 = arith.constant 2 : index
    %c0_148 = arith.constant 0 : index
    %c0_149 = arith.constant 0 : index
    %c0_150 = arith.constant 0 : index
    %188 = vector.load %arg11[%c2_147, %c0_148, %c0_149, %c0_150] : memref<5x5x8x64xf32, #tpu.memory_space<vmem>>, vector<3x3x8x64xf32>
    %189 = vector.extract_strided_slice %150 {offsets = [6, 0], sizes = [1, 64], strides = [1, 1]} : vector<9x64xf32> to vector<1x64xf32>
    %190 = vector.shape_cast %189 : vector<1x64xf32> to vector<1x1x1x64xf32>
    %191 = vector.broadcast %190 : vector<1x1x1x64xf32> to vector<3x3x8x64xf32>
    %192 = arith.mulf %188, %191 : vector<3x3x8x64xf32>
    %193 = arith.addf %187, %192 : vector<3x3x8x64xf32>
    %c2_151 = arith.constant 2 : index
    %c1_152 = arith.constant 1 : index
    %c0_153 = arith.constant 0 : index
    %c0_154 = arith.constant 0 : index
    %194 = vector.load %arg11[%c2_151, %c1_152, %c0_153, %c0_154] : memref<5x5x8x64xf32, #tpu.memory_space<vmem>>, vector<3x3x8x64xf32>
    %195 = vector.extract_strided_slice %150 {offsets = [7, 0], sizes = [1, 64], strides = [1, 1]} : vector<9x64xf32> to vector<1x64xf32>
    %196 = vector.shape_cast %195 : vector<1x64xf32> to vector<1x1x1x64xf32>
    %197 = vector.broadcast %196 : vector<1x1x1x64xf32> to vector<3x3x8x64xf32>
    %198 = arith.mulf %194, %197 : vector<3x3x8x64xf32>
    %199 = arith.addf %193, %198 : vector<3x3x8x64xf32>
    %c2_155 = arith.constant 2 : index
    %c2_156 = arith.constant 2 : index
    %c0_157 = arith.constant 0 : index
    %c0_158 = arith.constant 0 : index
    %200 = vector.load %arg11[%c2_155, %c2_156, %c0_157, %c0_158] : memref<5x5x8x64xf32, #tpu.memory_space<vmem>>, vector<3x3x8x64xf32>
    %201 = vector.extract_strided_slice %150 {offsets = [8, 0], sizes = [1, 64], strides = [1, 1]} : vector<9x64xf32> to vector<1x64xf32>
    %202 = vector.shape_cast %201 : vector<1x64xf32> to vector<1x1x1x64xf32>
    %203 = vector.broadcast %202 : vector<1x1x1x64xf32> to vector<3x3x8x64xf32>
    %204 = arith.mulf %200, %203 : vector<3x3x8x64xf32>
    %205 = arith.addf %199, %204 : vector<3x3x8x64xf32>
    %cst_159 = arith.constant dense<0.000000e+00> : vector<3x3x8xf32>
    %206 = vector.multi_reduction <add>, %205, %cst_159 [3] : vector<3x3x8x64xf32> to vector<3x3x8xf32>
    %c0_160 = arith.constant 0 : index
    %c0_161 = arith.constant 0 : index
    %207 = vector.load %arg5[%c0_160, %c0_161] : memref<1x1xf32, #tpu.memory_space<vmem>>, vector<1x1xf32>
    %208 = vector.shape_cast %207 : vector<1x1xf32> to vector<1x1x1xf32>
    %209 = vector.broadcast %208 : vector<1x1x1xf32> to vector<3x3x8xf32>
    %210 = arith.addf %206, %209 : vector<3x3x8xf32>
    %cst_162 = arith.constant 0.000000e+00 : f32
    %211 = vector.broadcast %cst_162 : f32 to vector<3x3x8xf32>
    %212 = arith.maximumf %210, %211 : vector<3x3x8xf32>
    %213 = vector.extract_strided_slice %212 {offsets = [0, 0, 0], sizes = [1, 1, 8], strides = [1, 1, 1]} : vector<3x3x8xf32> to vector<1x1x8xf32>
    %214 = vector.shape_cast %213 : vector<1x1x8xf32> to vector<1x8xf32>
    %215 = vector.extract_strided_slice %212 {offsets = [0, 1, 0], sizes = [1, 1, 8], strides = [1, 1, 1]} : vector<3x3x8xf32> to vector<1x1x8xf32>
    %216 = vector.shape_cast %215 : vector<1x1x8xf32> to vector<1x8xf32>
    %217 = vector.extract_strided_slice %212 {offsets = [0, 2, 0], sizes = [1, 1, 8], strides = [1, 1, 1]} : vector<3x3x8xf32> to vector<1x1x8xf32>
    %218 = vector.shape_cast %217 : vector<1x1x8xf32> to vector<1x8xf32>
    %219 = arith.maximumf %216, %218 : vector<1x8xf32>
    %220 = vector.extract_strided_slice %212 {offsets = [1, 0, 0], sizes = [1, 1, 8], strides = [1, 1, 1]} : vector<3x3x8xf32> to vector<1x1x8xf32>
    %221 = vector.shape_cast %220 : vector<1x1x8xf32> to vector<1x8xf32>
    %222 = vector.extract_strided_slice %212 {offsets = [2, 0, 0], sizes = [1, 1, 8], strides = [1, 1, 1]} : vector<3x3x8xf32> to vector<1x1x8xf32>
    %223 = vector.shape_cast %222 : vector<1x1x8xf32> to vector<1x8xf32>
    %224 = arith.maximumf %221, %223 : vector<1x8xf32>
    %225 = vector.extract_strided_slice %212 {offsets = [1, 1, 0], sizes = [1, 1, 8], strides = [1, 1, 1]} : vector<3x3x8xf32> to vector<1x1x8xf32>
    %226 = vector.shape_cast %225 : vector<1x1x8xf32> to vector<1x8xf32>
    %227 = vector.extract_strided_slice %212 {offsets = [1, 2, 0], sizes = [1, 1, 8], strides = [1, 1, 1]} : vector<3x3x8xf32> to vector<1x1x8xf32>
    %228 = vector.shape_cast %227 : vector<1x1x8xf32> to vector<1x8xf32>
    %229 = arith.maximumf %226, %228 : vector<1x8xf32>
    %230 = vector.extract_strided_slice %212 {offsets = [2, 1, 0], sizes = [1, 1, 8], strides = [1, 1, 1]} : vector<3x3x8xf32> to vector<1x1x8xf32>
    %231 = vector.shape_cast %230 : vector<1x1x8xf32> to vector<1x8xf32>
    %232 = vector.extract_strided_slice %212 {offsets = [2, 2, 0], sizes = [1, 1, 8], strides = [1, 1, 1]} : vector<3x3x8xf32> to vector<1x1x8xf32>
    %233 = vector.shape_cast %232 : vector<1x1x8xf32> to vector<1x8xf32>
    %234 = arith.maximumf %231, %233 : vector<1x8xf32>
    %235 = arith.maximumf %229, %234 : vector<1x8xf32>
    %c0_163 = arith.constant 0 : index
    %c0_164 = arith.constant 0 : index
    %236 = vector.load %arg6[%c0_163, %c0_164] : memref<8x4xf32, #tpu.memory_space<vmem>>, vector<8x1xf32>
    %237 = vector.broadcast %236 : vector<8x1xf32> to vector<8x8xf32>
    %238 = vector.broadcast %214 : vector<1x8xf32> to vector<8x8xf32>
    %239 = arith.mulf %237, %238 : vector<8x8xf32>
    %c0_165 = arith.constant 0 : index
    %c1_166 = arith.constant 1 : index
    %240 = vector.load %arg6[%c0_165, %c1_166] : memref<8x4xf32, #tpu.memory_space<vmem>>, vector<8x1xf32>
    %241 = vector.broadcast %240 : vector<8x1xf32> to vector<8x8xf32>
    %242 = vector.broadcast %219 : vector<1x8xf32> to vector<8x8xf32>
    %243 = arith.mulf %241, %242 : vector<8x8xf32>
    %244 = arith.addf %239, %243 : vector<8x8xf32>
    %c0_167 = arith.constant 0 : index
    %c2_168 = arith.constant 2 : index
    %245 = vector.load %arg6[%c0_167, %c2_168] : memref<8x4xf32, #tpu.memory_space<vmem>>, vector<8x1xf32>
    %246 = vector.broadcast %245 : vector<8x1xf32> to vector<8x8xf32>
    %247 = vector.broadcast %224 : vector<1x8xf32> to vector<8x8xf32>
    %248 = arith.mulf %246, %247 : vector<8x8xf32>
    %249 = arith.addf %244, %248 : vector<8x8xf32>
    %c0_169 = arith.constant 0 : index
    %c3_170 = arith.constant 3 : index
    %250 = vector.load %arg6[%c0_169, %c3_170] : memref<8x4xf32, #tpu.memory_space<vmem>>, vector<8x1xf32>
    %251 = vector.broadcast %250 : vector<8x1xf32> to vector<8x8xf32>
    %252 = vector.broadcast %235 : vector<1x8xf32> to vector<8x8xf32>
    %253 = arith.mulf %251, %252 : vector<8x8xf32>
    %254 = arith.addf %249, %253 : vector<8x8xf32>
    %c0_171 = arith.constant 0 : index
    %c0_172 = arith.constant 0 : index
    %255 = vector.load %arg7[%c0_171, %c0_172] : memref<8x1xf32, #tpu.memory_space<vmem>>, vector<8x1xf32>
    %256 = vector.broadcast %255 : vector<8x1xf32> to vector<8x8xf32>
    %257 = arith.addf %254, %256 : vector<8x8xf32>
    %cst_173 = arith.constant 0.000000e+00 : f32
    %258 = vector.broadcast %cst_173 : f32 to vector<8x8xf32>
    %259 = arith.maximumf %257, %258 : vector<8x8xf32>
    %c0_174 = arith.constant 0 : index
    %c0_175 = arith.constant 0 : index
    %260 = vector.load %arg8[%c0_174, %c0_175] : memref<8x1xf32, #tpu.memory_space<vmem>>, vector<8x1xf32>
    %261 = vector.broadcast %260 : vector<8x1xf32> to vector<8x8xf32>
    %262 = arith.mulf %259, %261 : vector<8x8xf32>
    %cst_176 = arith.constant dense<0.000000e+00> : vector<8xf32>
    %263 = vector.multi_reduction <add>, %262, %cst_176 [0] : vector<8x8xf32> to vector<8xf32>
    %264 = vector.shape_cast %263 : vector<8xf32> to vector<1x8xf32>
    %c0_177 = arith.constant 0 : index
    %c0_178 = arith.constant 0 : index
    %265 = vector.load %arg9[%c0_177, %c0_178] : memref<1x1xf32, #tpu.memory_space<vmem>>, vector<1x1xf32>
    %266 = vector.broadcast %265 : vector<1x1xf32> to vector<1x8xf32>
    %267 = arith.addf %264, %266 : vector<1x8xf32>
    %c0_179 = arith.constant 0 : index
    %c0_180 = arith.constant 0 : index
    %268 = vector.load %arg10[%c0_179, %c0_180] : memref<1x8xf32, #tpu.memory_space<vmem>>, vector<1x8xf32>
    tpu.vector_store %arg10[%c0_179, %c0_180], %267 {strides = array<i32>} : memref<1x8xf32, #tpu.memory_space<vmem>>, vector<1x8xf32>,
    return
  }
  func.func @transform_0(%arg0: i32) -> (i32, i32, i32, i32) {
    %c0_i32 = arith.constant 0 : i32
    %c0_i32_0 = arith.constant 0 : i32
    %c0_i32_1 = arith.constant 0 : i32
    %c0_i32_2 = arith.constant 0 : i32
    return %c0_i32, %c0_i32_0, %arg0, %c0_i32_1 : i32, i32, i32, i32
  }
  func.func @transform_1(%arg0: i32) -> (i32, i32, i32) {
    %c0_i32 = arith.constant 0 : i32
    %c0_i32_0 = arith.constant 0 : i32
    %c0_i32_1 = arith.constant 0 : i32
    %c0_i32_2 = arith.constant 0 : i32
    return %c0_i32, %c0_i32_0, %c0_i32_1 : i32, i32, i32
  }
  func.func @transform_2(%arg0: i32) -> (i32, i32) {
    %c0_i32 = arith.constant 0 : i32
    %c0_i32_0 = arith.constant 0 : i32
    %c0_i32_1 = arith.constant 0 : i32
    return %c0_i32, %c0_i32_0 : i32, i32
  }
  func.func @transform_3(%arg0: i32) -> (i32, i32) {
    %c0_i32 = arith.constant 0 : i32
    %c0_i32_0 = arith.constant 0 : i32
    %c0_i32_1 = arith.constant 0 : i32
    return %c0_i32, %c0_i32_0 : i32, i32
  }
  func.func @transform_4(%arg0: i32) -> (i32, i32) {
    %c0_i32 = arith.constant 0 : i32
    %c0_i32_0 = arith.constant 0 : i32
    %c0_i32_1 = arith.constant 0 : i32
    return %c0_i32, %c0_i32_0 : i32, i32
  }
  func.func @transform_5(%arg0: i32) -> (i32, i32) {
    %c0_i32 = arith.constant 0 : i32
    %c0_i32_0 = arith.constant 0 : i32
    %c0_i32_1 = arith.constant 0 : i32
    return %c0_i32, %c0_i32_0 : i32, i32
  }
  func.func @transform_6(%arg0: i32) -> (i32, i32) {
    %c0_i32 = arith.constant 0 : i32
    %c0_i32_0 = arith.constant 0 : i32
    %c0_i32_1 = arith.constant 0 : i32
    return %c0_i32, %c0_i32_0 : i32, i32
  }
  func.func @transform_7(%arg0: i32) -> (i32, i32) {
    %c0_i32 = arith.constant 0 : i32
    %c0_i32_0 = arith.constant 0 : i32
    %c0_i32_1 = arith.constant 0 : i32
    return %c0_i32, %c0_i32_0 : i32, i32
  }
  func.func @transform_8(%arg0: i32) -> (i32, i32) {
    %c0_i32 = arith.constant 0 : i32
    %c0_i32_0 = arith.constant 0 : i32
    %c0_i32_1 = arith.constant 0 : i32
    return %c0_i32, %c0_i32_0 : i32, i32
  }
  func.func @transform_9(%arg0: i32) -> (i32, i32) {
    %c0_i32 = arith.constant 0 : i32
    %c0_i32_0 = arith.constant 0 : i32
    return %c0_i32, %arg0 : i32, i32
  }
}

</mosaic_0001>

<llo_original>
// kernel: relation_network_forward.1
$region0: #{relation_network_forward.1}
  #allocation0 [shape = 'u32[]', space=smem, size = 0x4, offset = 0x4, fixed_abs, tag = 'smem constant byte address 0x4 - core index']
  #allocation1 [shape = 'u32[144,128]{1,0:T(1,128)}', space=vmem, size = 0x12000, scoped, tag = 'internal scratch']
  #allocation2 [shape = 'f32[5,5,8,64]{3,2,1,0:T(8,128)}', space=vmem, size = 0x19000, scoped, tag = 'scratch operand']
  #allocation3 [shape = 'f32[1,1]{1,0:T(1,128)S(1)}', space=vmem, size = 0x200, scoped, tag = 'scoped memory for relation_network_forward.1']
  #allocation4 [shape = 'f32[1,1]{1,0:T(1,128)S(1)}', space=vmem, size = 0x200, scoped, tag = 'scoped memory for relation_network_forward.1']
  %s0 = inlined_call_operand.vmem [shape: f32[7,7,8,64], index: 0, kind: input, shape index: {}]
  %s1 = inlined_call_operand.vmem [shape: f32[9,64,64], index: 1, kind: input, shape index: {}]
  %s2 = inlined_call_operand.vmem [shape: f32[1,64], index: 2, kind: input, shape index: {}]
  %s3 = inlined_call_operand.vmem [shape: f32[9,64], index: 3, kind: input, shape index: {}]
  %s4 = inlined_call_operand.<no memory space> [shape: f32[1,1], index: 4, kind: input, shape index: {}]
  %s5 = inlined_call_operand.vmem [shape: f32[8,4], index: 5, kind: input, shape index: {}]
  %s6 = inlined_call_operand.vmem [shape: f32[8,1], index: 6, kind: input, shape index: {}]
  %s7 = inlined_call_operand.vmem [shape: f32[8,1], index: 7, kind: input, shape index: {}]
  %s8 = inlined_call_operand.<no memory space> [shape: f32[1,1], index: 8, kind: input, shape index: {}]
  %s9 = inlined_call_operand.vmem [shape: f32[1,8], index: 9, kind: output, shape index: {}]
  %s10 = sld [smem:[#allocation0]]
  $region46: #{relation_network_forward.1} parent=0
    _
  %s12 = ssub.s32 1, %s10
  %s13 = scalar_select 0, %s12, %s10
  %v14 = vstv %s4
  %15 = vst [vmem:[#allocation3] sm:$0x1] %v14
  %v16 = vstv %s8
  %17 = vst [vmem:[#allocation4] sm:$0x1] %v16
  // Predicated region
  $region2: #{relation_network_forward.1} parent=0 // pred_check
    _
  $region3: #{relation_network_forward.1} parent=0 // pred_check_branch
    %19 = sbr.rel (0) target = $region5
  $region4: #{relation_network_forward.1} parent=0 // pred_region
    _
  $region5: #{relation_network_forward.1} parent=0 // pred_fallthru
    _
  // Predicated region
  $region6: #{relation_network_forward.1} parent=0 // pred_check
    _
  $region7: #{relation_network_forward.1} parent=0 // pred_check_branch
    %21 = sbr.rel (0) target = $region9
  $region8: #{relation_network_forward.1} parent=0 // pred_region
    _
  $region9: #{relation_network_forward.1} parent=0 // pred_fallthru
    _
  // Predicated region
  $region10: #{relation_network_forward.1} parent=0 // pred_check
    _
  $region11: #{relation_network_forward.1} parent=0 // pred_check_branch
    %23 = sbr.rel (0) target = $region13
  $region12: #{relation_network_forward.1} parent=0 // pred_region
    _
  $region13: #{relation_network_forward.1} parent=0 // pred_fallthru
    _
  // Predicated region
  $region14: #{relation_network_forward.1} parent=0 // pred_check
    _
  $region15: #{relation_network_forward.1} parent=0 // pred_check_branch
    %25 = sbr.rel (0) target = $region17
  $region16: #{relation_network_forward.1} parent=0 // pred_region
    _
  $region17: #{relation_network_forward.1} parent=0 // pred_fallthru
    _
  // Predicated region
  $region18: #{relation_network_forward.1} parent=0 // pred_check
    _
  $region19: #{relation_network_forward.1} parent=0 // pred_check_branch
    %27 = sbr.rel (0) target = $region21
  $region20: #{relation_network_forward.1} parent=0 // pred_region
    _
  $region21: #{relation_network_forward.1} parent=0 // pred_fallthru
    _
  // Predicated region
  $region22: #{relation_network_forward.1} parent=0 // pred_check
    _
  $region23: #{relation_network_forward.1} parent=0 // pred_check_branch
    %29 = sbr.rel (0) target = $region25
  $region24: #{relation_network_forward.1} parent=0 // pred_region
    _
  $region25: #{relation_network_forward.1} parent=0 // pred_fallthru
    _
  // Predicated region
  $region26: #{relation_network_forward.1} parent=0 // pred_check
    _
  $region27: #{relation_network_forward.1} parent=0 // pred_check_branch
    %31 = sbr.rel (0) target = $region29
  $region28: #{relation_network_forward.1} parent=0 // pred_region
    _
  $region29: #{relation_network_forward.1} parent=0 // pred_fallthru
    _
  // Predicated region
  $region30: #{relation_network_forward.1} parent=0 // pred_check
    _
  $region31: #{relation_network_forward.1} parent=0 // pred_check_branch
    %33 = sbr.rel (0) target = $region33
  $region32: #{relation_network_forward.1} parent=0 // pred_region
    _
  $region33: #{relation_network_forward.1} parent=0 // pred_fallthru
    _
  // Predicated region
  $region34: #{relation_network_forward.1} parent=0 // pred_check
    _
  $region35: #{relation_network_forward.1} parent=0 // pred_check_branch
    %35 = sbr.rel (0) target = $region37
  $region36: #{relation_network_forward.1} parent=0 // pred_region
    _
  $region37: #{relation_network_forward.1} parent=0 // pred_fallthru
    _
  %v36 = vld [vmem:[%s0] sm:$0xff]
  %v37 = vld [vmem:[%s0 + $0x8] sm:$0xff]
  %v38 = vld [vmem:[%s0 + $0x10] sm:$0xff]
  %v39 = vld [vmem:[%s0 + $0x18] sm:$0xff]
  %v40 = vld [vmem:[%s0 + $0x20] sm:$0xff]
  %v41 = vld [vmem:[%s0 + $0x38] sm:$0xff]
  %v42 = vld [vmem:[%s0 + $0x40] sm:$0xff]
  %v43 = vld [vmem:[%s0 + $0x48] sm:$0xff]
  %v44 = vld [vmem:[%s0 + $0x50] sm:$0xff]
  %v45 = vld [vmem:[%s0 + $0x58] sm:$0xff]
  %v46 = vld [vmem:[%s0 + $0x70] sm:$0xff]
  %v47 = vld [vmem:[%s0 + $0x78] sm:$0xff]
  %v48 = vld [vmem:[%s0 + $0x80] sm:$0xff]
  %v49 = vld [vmem:[%s0 + $0x88] sm:$0xff]
  %v50 = vld [vmem:[%s0 + $0x90] sm:$0xff]
  %v51 = vld [vmem:[%s0 + $0xa8] sm:$0xff]
  %v52 = vld [vmem:[%s0 + $0xb0] sm:$0xff]
  %v53 = vld [vmem:[%s0 + $0xb8] sm:$0xff]
  %v54 = vld [vmem:[%s0 + $0xc0] sm:$0xff]
  %v55 = vld [vmem:[%s0 + $0xc8] sm:$0xff]
  %v56 = vld [vmem:[%s0 + $0xe0] sm:$0xff]
  %v57 = vld [vmem:[%s0 + $0xe8] sm:$0xff]
  %v58 = vld [vmem:[%s0 + $0xf0] sm:$0xff]
  %v59 = vld [vmem:[%s0 + $0xf8] sm:$0xff]
  %v60 = vld [vmem:[%s0 + $0x100] sm:$0xff]
  %v61 = vld [vmem:[%s1] sm:$0xff]
  %v62 = vld [vmem:[%s1 + $0x8] sm:$0xff]
  %v63 = vld [vmem:[%s1 + $0x10] sm:$0xff]
  %v64 = vld [vmem:[%s1 + $0x18] sm:$0xff]
  %v65 = vld [vmem:[%s1 + $0x20] sm:$0xff]
  %v66 = vld [vmem:[%s1 + $0x28] sm:$0xff]
  %v67 = vld [vmem:[%s1 + $0x30] sm:$0xff]
  %v68 = vld [vmem:[%s1 + $0x38] sm:$0xff]
  %s69 = scalar_lea.vmem %s0, 8
  %v70 = vld [vmem:[%s69] sm:$0xff]
  %v71 = vld [vmem:[%s69 + $0x8] sm:$0xff]
  %v72 = vld [vmem:[%s69 + $0x10] sm:$0xff]
  %v73 = vld [vmem:[%s69 + $0x18] sm:$0xff]
  %v74 = vld [vmem:[%s69 + $0x20] sm:$0xff]
  %v75 = vld [vmem:[%s69 + $0x38] sm:$0xff]
  %v76 = vld [vmem:[%s69 + $0x40] sm:$0xff]
  %v77 = vld [vmem:[%s69 + $0x48] sm:$0xff]
  %v78 = vld [vmem:[%s69 + $0x50] sm:$0xff]
  %v79 = vld [vmem:[%s69 + $0x58] sm:$0xff]
  %v80 = vld [vmem:[%s69 + $0x70] sm:$0xff]
  %v81 = vld [vmem:[%s69 + $0x78] sm:$0xff]
  %v82 = vld [vmem:[%s69 + $0x80] sm:$0xff]
  %v83 = vld [vmem:[%s69 + $0x88] sm:$0xff]
  %v84 = vld [vmem:[%s69 + $0x90] sm:$0xff]
  %v85 = vld [vmem:[%s69 + $0xa8] sm:$0xff]
  %v86 = vld [vmem:[%s69 + $0xb0] sm:$0xff]
  %v87 = vld [vmem:[%s69 + $0xb8] sm:$0xff]
  %v88 = vld [vmem:[%s69 + $0xc0] sm:$0xff]
  %v89 = vld [vmem:[%s69 + $0xc8] sm:$0xff]
  %v90 = vld [vmem:[%s69 + $0xe0] sm:$0xff]
  %v91 = vld [vmem:[%s69 + $0xe8] sm:$0xff]
  %v92 = vld [vmem:[%s69 + $0xf0] sm:$0xff]
  %v93 = vld [vmem:[%s69 + $0xf8] sm:$0xff]
  %v94 = vld [vmem:[%s69 + $0x100] sm:$0xff]
  %s95 = scalar_lea.vmem %s1, 64
  %v96 = vld [vmem:[%s95] sm:$0xff]
  %v97 = vld [vmem:[%s95 + $0x8] sm:$0xff]
  %v98 = vld [vmem:[%s95 + $0x10] sm:$0xff]
  %v99 = vld [vmem:[%s95 + $0x18] sm:$0xff]
  %v100 = vld [vmem:[%s95 + $0x20] sm:$0xff]
  %v101 = vld [vmem:[%s95 + $0x28] sm:$0xff]
  %v102 = vld [vmem:[%s95 + $0x30] sm:$0xff]
  %v103 = vld [vmem:[%s95 + $0x38] sm:$0xff]
  %vm104 = vcmask 523264
  %v106 = vsel %vm104, %v70, 0
  %v109 = vsel %vm104, %v71, 0
  %v112 = vsel %vm104, %v72, 0
  %v115 = vsel %vm104, %v73, 0
  %v118 = vsel %vm104, %v74, 0
  %v121 = vsel %vm104, %v75, 0
  %v124 = vsel %vm104, %v76, 0
  %v127 = vsel %vm104, %v77, 0
  %v130 = vsel %vm104, %v78, 0
  %v133 = vsel %vm104, %v79, 0
  %v136 = vsel %vm104, %v80, 0
  %v139 = vsel %vm104, %v81, 0
  %v142 = vsel %vm104, %v82, 0
  %v145 = vsel %vm104, %v83, 0
  %v148 = vsel %vm104, %v84, 0
  %v151 = vsel %vm104, %v85, 0
  %v154 = vsel %vm104, %v86, 0
  %v157 = vsel %vm104, %v87, 0
  %v160 = vsel %vm104, %v88, 0
  %v163 = vsel %vm104, %v89, 0
  %v166 = vsel %vm104, %v90, 0
  %v169 = vsel %vm104, %v91, 0
  %v172 = vsel %vm104, %v92, 0
  %v175 = vsel %vm104, %v93, 0
  %v178 = vsel %vm104, %v94, 0
  %180 = vmatprep.subr.mxu0 0.0
  %181 = vmatpush1.msra.mxu0 0.0
  %182 = vmatprep.subr.mxu0 0.0
  %183 = vmatpush1.msra.mxu0 0.0
  %184 = vmatprep.subr.mxu0 0.0
  %185 = vmatpush1.msra.mxu0 0.0
  %186 = vmatprep.subr.mxu0 0.0
  %187 = vmatpush1.msra.mxu0 0.0
  %188 = vmatprep.subr.mxu0 0.0
  %189 = vmatpush1.msra.mxu0 0.0
  %190 = vmatprep.subr.mxu0 0.0
  %191 = vmatpush1.msra.mxu0 0.0
  %192 = vmatprep.subr.mxu0 0.0
  %193 = vmatpush1.msra.mxu0 0.0
  %194 = vmatprep.subr.mxu0 0.0
  %195 = vmatpush1.msra.mxu0 0.0
  %196 = vmatprep.subr.mxu0 0.0
  %197 = vmatpush1.msra.mxu0 %v103
  %198 = vmatprep.subr.mxu0 0.0
  %199 = vmatpush1.msra.mxu0 %v102
  %200 = vmatprep.subr.mxu0 0.0
  %201 = vmatpush1.msra.mxu0 %v101
  %202 = vmatprep.subr.mxu0 0.0
  %203 = vmatpush1.msra.mxu0 %v100
  %204 = vmatprep.subr.mxu0 0.0
  %205 = vmatpush1.msra.mxu0 %v99
  %206 = vmatprep.subr.mxu0 0.0
  %207 = vmatpush1.msra.mxu0 %v98
  %208 = vmatprep.subr.mxu0 0.0
  %209 = vmatpush1.msra.mxu0 %v97
  %210 = vmatprep.subr.mxu0 0.0
  %211 = vmatpush1.msra.mxu0 %v96
  %212 = vmatprep.subr.mxu0 0.0
  %213 = vmatpush2.msra.mxu0 0.0
  %214 = vmatprep.subr.mxu0 0.0
  %215 = vmatpush2.msra.mxu0 0.0
  %216 = vmatprep.subr.mxu0 0.0
  %217 = vmatpush2.msra.mxu0 0.0
  %218 = vmatprep.subr.mxu0 0.0
  %219 = vmatpush2.msra.mxu0 0.0
  %220 = vmatprep.subr.mxu0 0.0
  %221 = vmatpush2.msra.mxu0 0.0
  %222 = vmatprep.subr.mxu0 0.0
  %223 = vmatpush2.msra.mxu0 0.0
  %224 = vmatprep.subr.mxu0 0.0
  %225 = vmatpush2.msra.mxu0 0.0
  %226 = vmatprep.subr.mxu0 0.0
  %227 = vmatpush2.msra.mxu0 0.0
  %228 = vmatprep.subr.mxu0 0.0
  %229 = vmatpush2.msra.mxu0 0.0
  %230 = vmatprep.subr.mxu0 0.0
  %231 = vmatpush2.msra.mxu0 0.0
  %232 = vmatprep.subr.mxu0 0.0
  %233 = vmatpush2.msra.mxu0 0.0
  %234 = vmatprep.subr.mxu0 0.0
  %235 = vmatpush2.msra.mxu0 0.0
  %236 = vmatprep.subr.mxu0 0.0
  %237 = vmatpush2.msra.mxu0 0.0
  %238 = vmatprep.subr.mxu0 0.0
  %239 = vmatpush2.msra.mxu0 0.0
  %240 = vmatprep.subr.mxu0 0.0
  %241 = vmatpush2.msra.mxu0 0.0
  %242 = vmatprep.subr.mxu0 0.0
  %243 = vmatpush2.msra.mxu0 0.0
  %244 = vmatprep.mubr.f32.mxu0 0.0
  %245 = vmatmul.mubr.f32.gmra.mxu0 %v106
  %v246 = vpop.f32.mrf.mxu0
  %v247 = vadd.f32 0.0, %v246
  %v248 = vpop.f32.mrf.mxu0
  %249 = vmatprep.mubr.f32.mxu0 0.0
  %250 = vmatmul.mubr.f32.gmra.mxu0 %v109
  %v251 = vpop.f32.mrf.mxu0
  %v252 = vadd.f32 0.0, %v251
  %v253 = vpop.f32.mrf.mxu0
  %254 = vmatprep.mubr.f32.mxu0 0.0
  %255 = vmatmul.mubr.f32.gmra.mxu0 %v112
  %v256 = vpop.f32.mrf.mxu0
  %v257 = vadd.f32 0.0, %v256
  %v258 = vpop.f32.mrf.mxu0
  %259 = vmatprep.mubr.f32.mxu0 0.0
  %260 = vmatmul.mubr.f32.gmra.mxu0 %v115
  %v261 = vpop.f32.mrf.mxu0
  %v262 = vadd.f32 0.0, %v261
  %v263 = vpop.f32.mrf.mxu0
  %264 = vmatprep.mubr.f32.mxu0 0.0
  %265 = vmatmul.mubr.f32.gmra.mxu0 %v118
  %v266 = vpop.f32.mrf.mxu0
  %v267 = vadd.f32 0.0, %v266
  %v268 = vpop.f32.mrf.mxu0
  %269 = vmatprep.mubr.f32.mxu0 0.0
  %270 = vmatmul.mubr.f32.gmra.mxu0 %v121
  %v271 = vpop.f32.mrf.mxu0
  %v272 = vadd.f32 0.0, %v271
  %v273 = vpop.f32.mrf.mxu0
  %274 = vmatprep.mubr.f32.mxu0 0.0
  %275 = vmatmul.mubr.f32.gmra.mxu0 %v124
  %v276 = vpop.f32.mrf.mxu0
  %v277 = vadd.f32 0.0, %v276
  %v278 = vpop.f32.mrf.mxu0
  %279 = vmatprep.mubr.f32.mxu0 0.0
  %280 = vmatmul.mubr.f32.gmra.mxu0 %v127
  %v281 = vpop.f32.mrf.mxu0
  %v282 = vadd.f32 0.0, %v281
  %v283 = vpop.f32.mrf.mxu0
  %284 = vmatprep.mubr.f32.mxu0 0.0
  %285 = vmatmul.mubr.f32.gmra.mxu0 %v130
  %v286 = vpop.f32.mrf.mxu0
  %v287 = vadd.f32 0.0, %v286
  %v288 = vpop.f32.mrf.mxu0
  %289 = vmatprep.mubr.f32.mxu0 0.0
  %290 = vmatmul.mubr.f32.gmra.mxu0 %v133
  %v291 = vpop.f32.mrf.mxu0
  %v292 = vadd.f32 0.0, %v291
  %v293 = vpop.f32.mrf.mxu0
  %294 = vmatprep.mubr.f32.mxu0 0.0
  %295 = vmatmul.mubr.f32.gmra.mxu0 %v136
  %v296 = vpop.f32.mrf.mxu0
  %v297 = vadd.f32 0.0, %v296
  %v298 = vpop.f32.mrf.mxu0
  %299 = vmatprep.mubr.f32.mxu0 0.0
  %300 = vmatmul.mubr.f32.gmra.mxu0 %v139
  %v301 = vpop.f32.mrf.mxu0
  %v302 = vadd.f32 0.0, %v301
  %v303 = vpop.f32.mrf.mxu0
  %304 = vmatprep.mubr.f32.mxu0 0.0
  %305 = vmatmul.mubr.f32.gmra.mxu0 %v142
  %v306 = vpop.f32.mrf.mxu0
  %v307 = vadd.f32 0.0, %v306
  %v308 = vpop.f32.mrf.mxu0
  %309 = vmatprep.mubr.f32.mxu0 0.0
  %310 = vmatmul.mubr.f32.gmra.mxu0 %v145
  %v311 = vpop.f32.mrf.mxu0
  %v312 = vadd.f32 0.0, %v311
  %v313 = vpop.f32.mrf.mxu0
  %314 = vmatprep.mubr.f32.mxu0 0.0
  %315 = vmatmul.mubr.f32.gmra.mxu0 %v148
  %v316 = vpop.f32.mrf.mxu0
  %v317 = vadd.f32 0.0, %v316
  %v318 = vpop.f32.mrf.mxu0
  %319 = vmatprep.mubr.f32.mxu0 0.0
  %320 = vmatmul.mubr.f32.gmra.mxu0 %v151
  %v321 = vpop.f32.mrf.mxu0
  %v322 = vadd.f32 0.0, %v321
  %v323 = vpop.f32.mrf.mxu0
  %324 = vmatprep.mubr.f32.mxu0 0.0
  %325 = vmatmul.mubr.f32.gmra.mxu0 %v154
  %v326 = vpop.f32.mrf.mxu0
  %v327 = vadd.f32 0.0, %v326
  %v328 = vpop.f32.mrf.mxu0
  %329 = vmatprep.mubr.f32.mxu0 0.0
  %330 = vmatmul.mubr.f32.gmra.mxu0 %v157
  %v331 = vpop.f32.mrf.mxu0
  %v332 = vadd.f32 0.0, %v331
  %v333 = vpop.f32.mrf.mxu0
  %334 = vmatprep.mubr.f32.mxu0 0.0
  %335 = vmatmul.mubr.f32.gmra.mxu0 %v160
  %v336 = vpop.f32.mrf.mxu0
  %v337 = vadd.f32 0.0, %v336
  %v338 = vpop.f32.mrf.mxu0
  %339 = vmatprep.mubr.f32.mxu0 0.0
  %340 = vmatmul.mubr.f32.gmra.mxu0 %v163
  %v341 = vpop.f32.mrf.mxu0
  %v342 = vadd.f32 0.0, %v341
  %v343 = vpop.f32.mrf.mxu0
  %344 = vmatprep.mubr.f32.mxu0 0.0
  %345 = vmatmul.mubr.f32.gmra.mxu0 %v166
  %v346 = vpop.f32.mrf.mxu0
  %v347 = vadd.f32 0.0, %v346
  %v348 = vpop.f32.mrf.mxu0
  %349 = vmatprep.mubr.f32.mxu0 0.0
  %350 = vmatmul.mubr.f32.gmra.mxu0 %v169
  %v351 = vpop.f32.mrf.mxu0
  %v352 = vadd.f32 0.0, %v351
  %v353 = vpop.f32.mrf.mxu0
  %354 = vmatprep.mubr.f32.mxu0 0.0
  %355 = vmatmul.mubr.f32.gmra.mxu0 %v172
  %v356 = vpop.f32.mrf.mxu0
  %v357 = vadd.f32 0.0, %v356
  %v358 = vpop.f32.mrf.mxu0
  %359 = vmatprep.mubr.f32.mxu0 0.0
  %360 = vmatmul.mubr.f32.gmra.mxu0 %v175
  %v361 = vpop.f32.mrf.mxu0
  %v362 = vadd.f32 0.0, %v361
  %v363 = vpop.f32.mrf.mxu0
  %364 = vmatprep.mubr.f32.mxu0 0.0
  %365 = vmatmul.mubr.f32.gmra.mxu0 %v178
  %v366 = vpop.f32.mrf.mxu0
  %v367 = vadd.f32 0.0, %v366
  %v368 = vpop.f32.mrf.mxu0
  %369 = vdwg.mxu0
  %v371 = vsel %vm104, %v36, 0
  %v374 = vsel %vm104, %v37, 0
  %v377 = vsel %vm104, %v38, 0
  %v380 = vsel %vm104, %v39, 0
  %v383 = vsel %vm104, %v40, 0
  %v386 = vsel %vm104, %v41, 0
  %v389 = vsel %vm104, %v42, 0
  %v392 = vsel %vm104, %v43, 0
  %v395 = vsel %vm104, %v44, 0
  %v398 = vsel %vm104, %v45, 0
  %v401 = vsel %vm104, %v46, 0
  %v404 = vsel %vm104, %v47, 0
  %v407 = vsel %vm104, %v48, 0
  %v410 = vsel %vm104, %v49, 0
  %v413 = vsel %vm104, %v50, 0
  %v416 = vsel %vm104, %v51, 0
  %v419 = vsel %vm104, %v52, 0
  %v422 = vsel %vm104, %v53, 0
  %v425 = vsel %vm104, %v54, 0
  %v428 = vsel %vm104, %v55, 0
  %v431 = vsel %vm104, %v56, 0
  %v434 = vsel %vm104, %v57, 0
  %v437 = vsel %vm104, %v58, 0
  %v440 = vsel %vm104, %v59, 0
  %v443 = vsel %vm104, %v60, 0
  %445 = vmatprep.subr.mxu0 0.0
  %446 = vmatpush1.msra.mxu0 0.0
  %447 = vmatprep.subr.mxu0 0.0
  %448 = vmatpush1.msra.mxu0 0.0
  %449 = vmatprep.subr.mxu0 0.0
  %450 = vmatpush1.msra.mxu0 0.0
  %451 = vmatprep.subr.mxu0 0.0
  %452 = vmatpush1.msra.mxu0 0.0
  %453 = vmatprep.subr.mxu0 0.0
  %454 = vmatpush1.msra.mxu0 0.0
  %455 = vmatprep.subr.mxu0 0.0
  %456 = vmatpush1.msra.mxu0 0.0
  %457 = vmatprep.subr.mxu0 0.0
  %458 = vmatpush1.msra.mxu0 0.0
  %459 = vmatprep.subr.mxu0 0.0
  %460 = vmatpush1.msra.mxu0 0.0
  %461 = vmatprep.subr.mxu0 0.0
  %462 = vmatpush1.msra.mxu0 %v68
  %463 = vmatprep.subr.mxu0 0.0
  %464 = vmatpush1.msra.mxu0 %v67
  %465 = vmatprep.subr.mxu0 0.0
  %466 = vmatpush1.msra.mxu0 %v66
  %467 = vmatprep.subr.mxu0 0.0
  %468 = vmatpush1.msra.mxu0 %v65
  %469 = vmatprep.subr.mxu0 0.0
  %470 = vmatpush1.msra.mxu0 %v64
  %471 = vmatprep.subr.mxu0 0.0
  %472 = vmatpush1.msra.mxu0 %v63
  %473 = vmatprep.subr.mxu0 0.0
  %474 = vmatpush1.msra.mxu0 %v62
  %475 = vmatprep.subr.mxu0 0.0
  %476 = vmatpush1.msra.mxu0 %v61
  %477 = vmatprep.subr.mxu0 0.0
  %478 = vmatpush2.msra.mxu0 0.0
  %479 = vmatprep.subr.mxu0 0.0
  %480 = vmatpush2.msra.mxu0 0.0
  %481 = vmatprep.subr.mxu0 0.0
  %482 = vmatpush2.msra.mxu0 0.0
  %483 = vmatprep.subr.mxu0 0.0
  %484 = vmatpush2.msra.mxu0 0.0
  %485 = vmatprep.subr.mxu0 0.0
  %486 = vmatpush2.msra.mxu0 0.0
  %487 = vmatprep.subr.mxu0 0.0
  %488 = vmatpush2.msra.mxu0 0.0
  %489 = vmatprep.subr.mxu0 0.0
  %490 = vmatpush2.msra.mxu0 0.0
  %491 = vmatprep.subr.mxu0 0.0
  %492 = vmatpush2.msra.mxu0 0.0
  %493 = vmatprep.subr.mxu0 0.0
  %494 = vmatpush2.msra.mxu0 0.0
  %495 = vmatprep.subr.mxu0 0.0
  %496 = vmatpush2.msra.mxu0 0.0
  %497 = vmatprep.subr.mxu0 0.0
  %498 = vmatpush2.msra.mxu0 0.0
  %499 = vmatprep.subr.mxu0 0.0
  %500 = vmatpush2.msra.mxu0 0.0
  %501 = vmatprep.subr.mxu0 0.0
  %502 = vmatpush2.msra.mxu0 0.0
  %503 = vmatprep.subr.mxu0 0.0
  %504 = vmatpush2.msra.mxu0 0.0
  %505 = vmatprep.subr.mxu0 0.0
  %506 = vmatpush2.msra.mxu0 0.0
  %507 = vmatprep.subr.mxu0 0.0
  %508 = vmatpush2.msra.mxu0 0.0
  %509 = vmatprep.mubr.f32.mxu0 0.0
  %510 = vmatmul.mubr.f32.gmra.mxu0 %v371
  %v511 = vpop.f32.mrf.mxu0
  %v512 = vadd.f32 %v247, %v511
  %v513 = vpop.f32.mrf.mxu0
  %514 = vmatprep.mubr.f32.mxu0 0.0
  %515 = vmatmul.mubr.f32.gmra.mxu0 %v374
  %v516 = vpop.f32.mrf.mxu0
  %v517 = vadd.f32 %v252, %v516
  %v518 = vpop.f32.mrf.mxu0
  %519 = vmatprep.mubr.f32.mxu0 0.0
  %520 = vmatmul.mubr.f32.gmra.mxu0 %v377
  %v521 = vpop.f32.mrf.mxu0
  %v522 = vadd.f32 %v257, %v521
  %v523 = vpop.f32.mrf.mxu0
  %524 = vmatprep.mubr.f32.mxu0 0.0
  %525 = vmatmul.mubr.f32.gmra.mxu0 %v380
  %v526 = vpop.f32.mrf.mxu0
  %v527 = vadd.f32 %v262, %v526
  %v528 = vpop.f32.mrf.mxu0
  %529 = vmatprep.mubr.f32.mxu0 0.0
  %530 = vmatmul.mubr.f32.gmra.mxu0 %v383
  %v531 = vpop.f32.mrf.mxu0
  %v532 = vadd.f32 %v267, %v531
  %v533 = vpop.f32.mrf.mxu0
  %534 = vmatprep.mubr.f32.mxu0 0.0
  %535 = vmatmul.mubr.f32.gmra.mxu0 %v386
  %v536 = vpop.f32.mrf.mxu0
  %v537 = vadd.f32 %v272, %v536
  %v538 = vpop.f32.mrf.mxu0
  %539 = vmatprep.mubr.f32.mxu0 0.0
  %540 = vmatmul.mubr.f32.gmra.mxu0 %v389
  %v541 = vpop.f32.mrf.mxu0
  %v542 = vadd.f32 %v277, %v541
  %v543 = vpop.f32.mrf.mxu0
  %544 = vmatprep.mubr.f32.mxu0 0.0
  %545 = vmatmul.mubr.f32.gmra.mxu0 %v392
  %v546 = vpop.f32.mrf.mxu0
  %v547 = vadd.f32 %v282, %v546
  %v548 = vpop.f32.mrf.mxu0
  %549 = vmatprep.mubr.f32.mxu0 0.0
  %550 = vmatmul.mubr.f32.gmra.mxu0 %v395
  %v551 = vpop.f32.mrf.mxu0
  %v552 = vadd.f32 %v287, %v551
  %v553 = vpop.f32.mrf.mxu0
  %554 = vmatprep.mubr.f32.mxu0 0.0
  %555 = vmatmul.mubr.f32.gmra.mxu0 %v398
  %v556 = vpop.f32.mrf.mxu0
  %v557 = vadd.f32 %v292, %v556
  %v558 = vpop.f32.mrf.mxu0
  %559 = vmatprep.mubr.f32.mxu0 0.0
  %560 = vmatmul.mubr.f32.gmra.mxu0 %v401
  %v561 = vpop.f32.mrf.mxu0
  %v562 = vadd.f32 %v297, %v561
  %v563 = vpop.f32.mrf.mxu0
  %564 = vmatprep.mubr.f32.mxu0 0.0
  %565 = vmatmul.mubr.f32.gmra.mxu0 %v404
  %v566 = vpop.f32.mrf.mxu0
  %v567 = vadd.f32 %v302, %v566
  %v568 = vpop.f32.mrf.mxu0
  %569 = vmatprep.mubr.f32.mxu0 0.0
  %570 = vmatmul.mubr.f32.gmra.mxu0 %v407
  %v571 = vpop.f32.mrf.mxu0
  %v572 = vadd.f32 %v307, %v571
  %v573 = vpop.f32.mrf.mxu0
  %574 = vmatprep.mubr.f32.mxu0 0.0
  %575 = vmatmul.mubr.f32.gmra.mxu0 %v410
  %v576 = vpop.f32.mrf.mxu0
  %v577 = vadd.f32 %v312, %v576
  %v578 = vpop.f32.mrf.mxu0
  %579 = vmatprep.mubr.f32.mxu0 0.0
  %580 = vmatmul.mubr.f32.gmra.mxu0 %v413
  %v581 = vpop.f32.mrf.mxu0
  %v582 = vadd.f32 %v317, %v581
  %v583 = vpop.f32.mrf.mxu0
  %584 = vmatprep.mubr.f32.mxu0 0.0
  %585 = vmatmul.mubr.f32.gmra.mxu0 %v416
  %v586 = vpop.f32.mrf.mxu0
  %v587 = vadd.f32 %v322, %v586
  %v588 = vpop.f32.mrf.mxu0
  %589 = vmatprep.mubr.f32.mxu0 0.0
  %590 = vmatmul.mubr.f32.gmra.mxu0 %v419
  %v591 = vpop.f32.mrf.mxu0
  %v592 = vadd.f32 %v327, %v591
  %v593 = vpop.f32.mrf.mxu0
  %594 = vmatprep.mubr.f32.mxu0 0.0
  %595 = vmatmul.mubr.f32.gmra.mxu0 %v422
  %v596 = vpop.f32.mrf.mxu0
  %v597 = vadd.f32 %v332, %v596
  %v598 = vpop.f32.mrf.mxu0
  %599 = vmatprep.mubr.f32.mxu0 0.0
  %600 = vmatmul.mubr.f32.gmra.mxu0 %v425
  %v601 = vpop.f32.mrf.mxu0
  %v602 = vadd.f32 %v337, %v601
  %v603 = vpop.f32.mrf.mxu0
  %604 = vmatprep.mubr.f32.mxu0 0.0
  %605 = vmatmul.mubr.f32.gmra.mxu0 %v428
  %v606 = vpop.f32.mrf.mxu0
  %v607 = vadd.f32 %v342, %v606
  %v608 = vpop.f32.mrf.mxu0
  %609 = vmatprep.mubr.f32.mxu0 0.0
  %610 = vmatmul.mubr.f32.gmra.mxu0 %v431
  %v611 = vpop.f32.mrf.mxu0
  %v612 = vadd.f32 %v347, %v611
  %v613 = vpop.f32.mrf.mxu0
  %614 = vmatprep.mubr.f32.mxu0 0.0
  %615 = vmatmul.mubr.f32.gmra.mxu0 %v434
  %v616 = vpop.f32.mrf.mxu0
  %v617 = vadd.f32 %v352, %v616
  %v618 = vpop.f32.mrf.mxu0
  %619 = vmatprep.mubr.f32.mxu0 0.0
  %620 = vmatmul.mubr.f32.gmra.mxu0 %v437
  %v621 = vpop.f32.mrf.mxu0
  %v622 = vadd.f32 %v357, %v621
  %v623 = vpop.f32.mrf.mxu0
  %624 = vmatprep.mubr.f32.mxu0 0.0
  %625 = vmatmul.mubr.f32.gmra.mxu0 %v440
  %v626 = vpop.f32.mrf.mxu0
  %v627 = vadd.f32 %v362, %v626
  %v628 = vpop.f32.mrf.mxu0
  %629 = vmatprep.mubr.f32.mxu0 0.0
  %630 = vmatmul.mubr.f32.gmra.mxu0 %v443
  %v631 = vpop.f32.mrf.mxu0
  %v632 = vadd.f32 %v367, %v631
  %v633 = vpop.f32.mrf.mxu0
  %634 = vdwg.mxu0
  %s635 = scalar_lea.vmem %s0, 16
  %v636 = vld [vmem:[%s635] sm:$0xff]
  %v637 = vld [vmem:[%s635 + $0x8] sm:$0xff]
  %v638 = vld [vmem:[%s635 + $0x10] sm:$0xff]
  %v639 = vld [vmem:[%s635 + $0x18] sm:$0xff]
  %v640 = vld [vmem:[%s635 + $0x20] sm:$0xff]
  %v641 = vld [vmem:[%s635 + $0x38] sm:$0xff]
  %v642 = vld [vmem:[%s635 + $0x40] sm:$0xff]
  %v643 = vld [vmem:[%s635 + $0x48] sm:$0xff]
  %v644 = vld [vmem:[%s635 + $0x50] sm:$0xff]
  %v645 = vld [vmem:[%s635 + $0x58] sm:$0xff]
  %v646 = vld [vmem:[%s635 + $0x70] sm:$0xff]
  %v647 = vld [vmem:[%s635 + $0x78] sm:$0xff]
  %v648 = vld [vmem:[%s635 + $0x80] sm:$0xff]
  %v649 = vld [vmem:[%s635 + $0x88] sm:$0xff]
  %v650 = vld [vmem:[%s635 + $0x90] sm:$0xff]
  %v651 = vld [vmem:[%s635 + $0xa8] sm:$0xff]
  %v652 = vld [vmem:[%s635 + $0xb0] sm:$0xff]
  %v653 = vld [vmem:[%s635 + $0xb8] sm:$0xff]
  %v654 = vld [vmem:[%s635 + $0xc0] sm:$0xff]
  %v655 = vld [vmem:[%s635 + $0xc8] sm:$0xff]
  %v656 = vld [vmem:[%s635 + $0xe0] sm:$0xff]
  %v657 = vld [vmem:[%s635 + $0xe8] sm:$0xff]
  %v658 = vld [vmem:[%s635 + $0xf0] sm:$0xff]
  %v659 = vld [vmem:[%s635 + $0xf8] sm:$0xff]
  %v660 = vld [vmem:[%s635 + $0x100] sm:$0xff]
  %s661 = scalar_lea.vmem %s1, 128
  %v662 = vld [vmem:[%s661] sm:$0xff]
  %v663 = vld [vmem:[%s661 + $0x8] sm:$0xff]
  %v664 = vld [vmem:[%s661 + $0x10] sm:$0xff]
  %v665 = vld [vmem:[%s661 + $0x18] sm:$0xff]
  %v666 = vld [vmem:[%s661 + $0x20] sm:$0xff]
  %v667 = vld [vmem:[%s661 + $0x28] sm:$0xff]
  %v668 = vld [vmem:[%s661 + $0x30] sm:$0xff]
  %v669 = vld [vmem:[%s661 + $0x38] sm:$0xff]
  %v671 = vsel %vm104, %v636, 0
  %v674 = vsel %vm104, %v637, 0
  %v677 = vsel %vm104, %v638, 0
  %v680 = vsel %vm104, %v639, 0
  %v683 = vsel %vm104, %v640, 0
  %v686 = vsel %vm104, %v641, 0
  %v689 = vsel %vm104, %v642, 0
  %v692 = vsel %vm104, %v643, 0
  %v695 = vsel %vm104, %v644, 0
  %v698 = vsel %vm104, %v645, 0
  %v701 = vsel %vm104, %v646, 0
  %v704 = vsel %vm104, %v647, 0
  %v707 = vsel %vm104, %v648, 0
  %v710 = vsel %vm104, %v649, 0
  %v713 = vsel %vm104, %v650, 0
  %v716 = vsel %vm104, %v651, 0
  %v719 = vsel %vm104, %v652, 0
  %v722 = vsel %vm104, %v653, 0
  %v725 = vsel %vm104, %v654, 0
  %v728 = vsel %vm104, %v655, 0
  %v731 = vsel %vm104, %v656, 0
  %v734 = vsel %vm104, %v657, 0
  %v737 = vsel %vm104, %v658, 0
  %v740 = vsel %vm104, %v659, 0
  %v743 = vsel %vm104, %v660, 0
  %745 = vmatprep.subr.mxu0 0.0
  %746 = vmatpush1.msra.mxu0 0.0
  %747 = vmatprep.subr.mxu0 0.0
  %748 = vmatpush1.msra.mxu0 0.0
  %749 = vmatprep.subr.mxu0 0.0
  %750 = vmatpush1.msra.mxu0 0.0
  %751 = vmatprep.subr.mxu0 0.0
  %752 = vmatpush1.msra.mxu0 0.0
  %753 = vmatprep.subr.mxu0 0.0
  %754 = vmatpush1.msra.mxu0 0.0
  %755 = vmatprep.subr.mxu0 0.0
  %756 = vmatpush1.msra.mxu0 0.0
  %757 = vmatprep.subr.mxu0 0.0
  %758 = vmatpush1.msra.mxu0 0.0
  %759 = vmatprep.subr.mxu0 0.0
  %760 = vmatpush1.msra.mxu0 0.0
  %761 = vmatprep.subr.mxu0 0.0
  %762 = vmatpush1.msra.mxu0 %v669
  %763 = vmatprep.subr.mxu0 0.0
  %764 = vmatpush1.msra.mxu0 %v668
  %765 = vmatprep.subr.mxu0 0.0
  %766 = vmatpush1.msra.mxu0 %v667
  %767 = vmatprep.subr.mxu0 0.0
  %768 = vmatpush1.msra.mxu0 %v666
  %769 = vmatprep.subr.mxu0 0.0
  %770 = vmatpush1.msra.mxu0 %v665
  %771 = vmatprep.subr.mxu0 0.0
  %772 = vmatpush1.msra.mxu0 %v664
  %773 = vmatprep.subr.mxu0 0.0
  %774 = vmatpush1.msra.mxu0 %v663
  %775 = vmatprep.subr.mxu0 0.0
  %776 = vmatpush1.msra.mxu0 %v662
  %777 = vmatprep.subr.mxu0 0.0
  %778 = vmatpush2.msra.mxu0 0.0
  %779 = vmatprep.subr.mxu0 0.0
  %780 = vmatpush2.msra.mxu0 0.0
  %781 = vmatprep.subr.mxu0 0.0
  %782 = vmatpush2.msra.mxu0 0.0
  %783 = vmatprep.subr.mxu0 0.0
  %784 = vmatpush2.msra.mxu0 0.0
  %785 = vmatprep.subr.mxu0 0.0
  %786 = vmatpush2.msra.mxu0 0.0
  %787 = vmatprep.subr.mxu0 0.0
  %788 = vmatpush2.msra.mxu0 0.0
  %789 = vmatprep.subr.mxu0 0.0
  %790 = vmatpush2.msra.mxu0 0.0
  %791 = vmatprep.subr.mxu0 0.0
  %792 = vmatpush2.msra.mxu0 0.0
  %793 = vmatprep.subr.mxu0 0.0
  %794 = vmatpush2.msra.mxu0 0.0
  %795 = vmatprep.subr.mxu0 0.0
  %796 = vmatpush2.msra.mxu0 0.0
  %797 = vmatprep.subr.mxu0 0.0
  %798 = vmatpush2.msra.mxu0 0.0
  %799 = vmatprep.subr.mxu0 0.0
  %800 = vmatpush2.msra.mxu0 0.0
  %801 = vmatprep.subr.mxu0 0.0
  %802 = vmatpush2.msra.mxu0 0.0
  %803 = vmatprep.subr.mxu0 0.0
  %804 = vmatpush2.msra.mxu0 0.0
  %805 = vmatprep.subr.mxu0 0.0
  %806 = vmatpush2.msra.mxu0 0.0
  %807 = vmatprep.subr.mxu0 0.0
  %808 = vmatpush2.msra.mxu0 0.0
  %809 = vmatprep.mubr.f32.mxu0 0.0
  %810 = vmatmul.mubr.f32.gmra.mxu0 %v671
  %v811 = vpop.f32.mrf.mxu0
  %v812 = vadd.f32 0.0, %v811
  %v813 = vpop.f32.mrf.mxu0
  %814 = vmatprep.mubr.f32.mxu0 0.0
  %815 = vmatmul.mubr.f32.gmra.mxu0 %v674
  %v816 = vpop.f32.mrf.mxu0
  %v817 = vadd.f32 0.0, %v816
  %v818 = vpop.f32.mrf.mxu0
  %819 = vmatprep.mubr.f32.mxu0 0.0
  %820 = vmatmul.mubr.f32.gmra.mxu0 %v677
  %v821 = vpop.f32.mrf.mxu0
  %v822 = vadd.f32 0.0, %v821
  %v823 = vpop.f32.mrf.mxu0
  %824 = vmatprep.mubr.f32.mxu0 0.0
  %825 = vmatmul.mubr.f32.gmra.mxu0 %v680
  %v826 = vpop.f32.mrf.mxu0
  %v827 = vadd.f32 0.0, %v826
  %v828 = vpop.f32.mrf.mxu0
  %829 = vmatprep.mubr.f32.mxu0 0.0
  %830 = vmatmul.mubr.f32.gmra.mxu0 %v683
  %v831 = vpop.f32.mrf.mxu0
  %v832 = vadd.f32 0.0, %v831
  %v833 = vpop.f32.mrf.mxu0
  %834 = vmatprep.mubr.f32.mxu0 0.0
  %835 = vmatmul.mubr.f32.gmra.mxu0 %v686
  %v836 = vpop.f32.mrf.mxu0
  %v837 = vadd.f32 0.0, %v836
  %v838 = vpop.f32.mrf.mxu0
  %839 = vmatprep.mubr.f32.mxu0 0.0
  %840 = vmatmul.mubr.f32.gmra.mxu0 %v689
  %v841 = vpop.f32.mrf.mxu0
  %v842 = vadd.f32 0.0, %v841
  %v843 = vpop.f32.mrf.mxu0
  %844 = vmatprep.mubr.f32.mxu0 0.0
  %845 = vmatmul.mubr.f32.gmra.mxu0 %v692
  %v846 = vpop.f32.mrf.mxu0
  %v847 = vadd.f32 0.0, %v846
  %v848 = vpop.f32.mrf.mxu0
  %849 = vmatprep.mubr.f32.mxu0 0.0
  %850 = vmatmul.mubr.f32.gmra.mxu0 %v695
  %v851 = vpop.f32.mrf.mxu0
  %v852 = vadd.f32 0.0, %v851
  %v853 = vpop.f32.mrf.mxu0
  %854 = vmatprep.mubr.f32.mxu0 0.0
  %855 = vmatmul.mubr.f32.gmra.mxu0 %v698
  %v856 = vpop.f32.mrf.mxu0
  %v857 = vadd.f32 0.0, %v856
  %v858 = vpop.f32.mrf.mxu0
  %859 = vmatprep.mubr.f32.mxu0 0.0
  %860 = vmatmul.mubr.f32.gmra.mxu0 %v701
  %v861 = vpop.f32.mrf.mxu0
  %v862 = vadd.f32 0.0, %v861
  %v863 = vpop.f32.mrf.mxu0
  %864 = vmatprep.mubr.f32.mxu0 0.0
  %865 = vmatmul.mubr.f32.gmra.mxu0 %v704
  %v866 = vpop.f32.mrf.mxu0
  %v867 = vadd.f32 0.0, %v866
  %v868 = vpop.f32.mrf.mxu0
  %869 = vmatprep.mubr.f32.mxu0 0.0
  %870 = vmatmul.mubr.f32.gmra.mxu0 %v707
  %v871 = vpop.f32.mrf.mxu0
  %v872 = vadd.f32 0.0, %v871
  %v873 = vpop.f32.mrf.mxu0
  %874 = vmatprep.mubr.f32.mxu0 0.0
  %875 = vmatmul.mubr.f32.gmra.mxu0 %v710
  %v876 = vpop.f32.mrf.mxu0
  %v877 = vadd.f32 0.0, %v876
  %v878 = vpop.f32.mrf.mxu0
  %879 = vmatprep.mubr.f32.mxu0 0.0
  %880 = vmatmul.mubr.f32.gmra.mxu0 %v713
  %v881 = vpop.f32.mrf.mxu0
  %v882 = vadd.f32 0.0, %v881
  %v883 = vpop.f32.mrf.mxu0
  %884 = vmatprep.mubr.f32.mxu0 0.0
  %885 = vmatmul.mubr.f32.gmra.mxu0 %v716
  %v886 = vpop.f32.mrf.mxu0
  %v887 = vadd.f32 0.0, %v886
  %v888 = vpop.f32.mrf.mxu0
  %889 = vmatprep.mubr.f32.mxu0 0.0
  %890 = vmatmul.mubr.f32.gmra.mxu0 %v719
  %v891 = vpop.f32.mrf.mxu0
  %v892 = vadd.f32 0.0, %v891
  %v893 = vpop.f32.mrf.mxu0
  %894 = vmatprep.mubr.f32.mxu0 0.0
  %895 = vmatmul.mubr.f32.gmra.mxu0 %v722
  %v896 = vpop.f32.mrf.mxu0
  %v897 = vadd.f32 0.0, %v896
  %v898 = vpop.f32.mrf.mxu0
  %899 = vmatprep.mubr.f32.mxu0 0.0
  %900 = vmatmul.mubr.f32.gmra.mxu0 %v725
  %v901 = vpop.f32.mrf.mxu0
  %v902 = vadd.f32 0.0, %v901
  %v903 = vpop.f32.mrf.mxu0
  %904 = vmatprep.mubr.f32.mxu0 0.0
  %905 = vmatmul.mubr.f32.gmra.mxu0 %v728
  %v906 = vpop.f32.mrf.mxu0
  %v907 = vadd.f32 0.0, %v906
  %v908 = vpop.f32.mrf.mxu0
  %909 = vmatprep.mubr.f32.mxu0 0.0
  %910 = vmatmul.mubr.f32.gmra.mxu0 %v731
  %v911 = vpop.f32.mrf.mxu0
  %v912 = vadd.f32 0.0, %v911
  %v913 = vpop.f32.mrf.mxu0
  %914 = vmatprep.mubr.f32.mxu0 0.0
  %915 = vmatmul.mubr.f32.gmra.mxu0 %v734
  %v916 = vpop.f32.mrf.mxu0
  %v917 = vadd.f32 0.0, %v916
  %v918 = vpop.f32.mrf.mxu0
  %919 = vmatprep.mubr.f32.mxu0 0.0
  %920 = vmatmul.mubr.f32.gmra.mxu0 %v737
  %v921 = vpop.f32.mrf.mxu0
  %v922 = vadd.f32 0.0, %v921
  %v923 = vpop.f32.mrf.mxu0
  %924 = vmatprep.mubr.f32.mxu0 0.0
  %925 = vmatmul.mubr.f32.gmra.mxu0 %v740
  %v926 = vpop.f32.mrf.mxu0
  %v927 = vadd.f32 0.0, %v926
  %v928 = vpop.f32.mrf.mxu0
  %929 = vmatprep.mubr.f32.mxu0 0.0
  %930 = vmatmul.mubr.f32.gmra.mxu0 %v743
  %v931 = vpop.f32.mrf.mxu0
  %v932 = vadd.f32 0.0, %v931
  %v933 = vpop.f32.mrf.mxu0
  %934 = vdwg.mxu0
  %v935 = vadd.f32 %v512, %v812
  %v936 = vadd.f32 %v517, %v817
  %v937 = vadd.f32 %v522, %v822
  %v938 = vadd.f32 %v527, %v827
  %v939 = vadd.f32 %v532, %v832
  %v940 = vadd.f32 %v537, %v837
  %v941 = vadd.f32 %v542, %v842
  %v942 = vadd.f32 %v547, %v847
  %v943 = vadd.f32 %v552, %v852
  %v944 = vadd.f32 %v557, %v857
  %v945 = vadd.f32 %v562, %v862
  %v946 = vadd.f32 %v567, %v867
  %v947 = vadd.f32 %v572, %v872
  %v948 = vadd.f32 %v577, %v877
  %v949 = vadd.f32 %v582, %v882
  %v950 = vadd.f32 %v587, %v887
  %v951 = vadd.f32 %v592, %v892
  %v952 = vadd.f32 %v597, %v897
  %v953 = vadd.f32 %v602, %v902
  %v954 = vadd.f32 %v607, %v907
  %v955 = vadd.f32 %v612, %v912
  %v956 = vadd.f32 %v617, %v917
  %v957 = vadd.f32 %v622, %v922
  %v958 = vadd.f32 %v627, %v927
  %v959 = vadd.f32 %v632, %v932
  %s960 = scalar_lea.vmem %s0, 56
  %v961 = vld [vmem:[%s960] sm:$0xff]
  %v962 = vld [vmem:[%s960 + $0x8] sm:$0xff]
  %v963 = vld [vmem:[%s960 + $0x10] sm:$0xff]
  %v964 = vld [vmem:[%s960 + $0x18] sm:$0xff]
  %v965 = vld [vmem:[%s960 + $0x20] sm:$0xff]
  %v966 = vld [vmem:[%s960 + $0x38] sm:$0xff]
  %v967 = vld [vmem:[%s960 + $0x40] sm:$0xff]
  %v968 = vld [vmem:[%s960 + $0x48] sm:$0xff]
  %v969 = vld [vmem:[%s960 + $0x50] sm:$0xff]
  %v970 = vld [vmem:[%s960 + $0x58] sm:$0xff]
  %v971 = vld [vmem:[%s960 + $0x70] sm:$0xff]
  %v972 = vld [vmem:[%s960 + $0x78] sm:$0xff]
  %v973 = vld [vmem:[%s960 + $0x80] sm:$0xff]
  %v974 = vld [vmem:[%s960 + $0x88] sm:$0xff]
  %v975 = vld [vmem:[%s960 + $0x90] sm:$0xff]
  %v976 = vld [vmem:[%s960 + $0xa8] sm:$0xff]
  %v977 = vld [vmem:[%s960 + $0xb0] sm:$0xff]
  %v978 = vld [vmem:[%s960 + $0xb8] sm:$0xff]
  %v979 = vld [vmem:[%s960 + $0xc0] sm:$0xff]
  %v980 = vld [vmem:[%s960 + $0xc8] sm:$0xff]
  %v981 = vld [vmem:[%s960 + $0xe0] sm:$0xff]
  %v982 = vld [vmem:[%s960 + $0xe8] sm:$0xff]
  %v983 = vld [vmem:[%s960 + $0xf0] sm:$0xff]
  %v984 = vld [vmem:[%s960 + $0xf8] sm:$0xff]
  %v985 = vld [vmem:[%s960 + $0x100] sm:$0xff]
  %s986 = scalar_lea.vmem %s1, 192
  %v987 = vld [vmem:[%s986] sm:$0xff]
  %v988 = vld [vmem:[%s986 + $0x8] sm:$0xff]
  %v989 = vld [vmem:[%s986 + $0x10] sm:$0xff]
  %v990 = vld [vmem:[%s986 + $0x18] sm:$0xff]
  %v991 = vld [vmem:[%s986 + $0x20] sm:$0xff]
  %v992 = vld [vmem:[%s986 + $0x28] sm:$0xff]
  %v993 = vld [vmem:[%s986 + $0x30] sm:$0xff]
  %v994 = vld [vmem:[%s986 + $0x38] sm:$0xff]
  %v996 = vsel %vm104, %v961, 0
  %v999 = vsel %vm104, %v962, 0
  %v1002 = vsel %vm104, %v963, 0
  %v1005 = vsel %vm104, %v964, 0
  %v1008 = vsel %vm104, %v965, 0
  %v1011 = vsel %vm104, %v966, 0
  %v1014 = vsel %vm104, %v967, 0
  %v1017 = vsel %vm104, %v968, 0
  %v1020 = vsel %vm104, %v969, 0
  %v1023 = vsel %vm104, %v970, 0
  %v1026 = vsel %vm104, %v971, 0
  %v1029 = vsel %vm104, %v972, 0
  %v1032 = vsel %vm104, %v973, 0
  %v1035 = vsel %vm104, %v974, 0
  %v1038 = vsel %vm104, %v975, 0
  %v1041 = vsel %vm104, %v976, 0
  %v1044 = vsel %vm104, %v977, 0
  %v1047 = vsel %vm104, %v978, 0
  %v1050 = vsel %vm104, %v979, 0
  %v1053 = vsel %vm104, %v980, 0
  %v1056 = vsel %vm104, %v981, 0
  %v1059 = vsel %vm104, %v982, 0
  %v1062 = vsel %vm104, %v983, 0
  %v1065 = vsel %vm104, %v984, 0
  %v1068 = vsel %vm104, %v985, 0
  %1070 = vmatprep.subr.mxu0 0.0
  %1071 = vmatpush1.msra.mxu0 0.0
  %1072 = vmatprep.subr.mxu0 0.0
  %1073 = vmatpush1.msra.mxu0 0.0
  %1074 = vmatprep.subr.mxu0 0.0
  %1075 = vmatpush1.msra.mxu0 0.0
  %1076 = vmatprep.subr.mxu0 0.0
  %1077 = vmatpush1.msra.mxu0 0.0
  %1078 = vmatprep.subr.mxu0 0.0
  %1079 = vmatpush1.msra.mxu0 0.0
  %1080 = vmatprep.subr.mxu0 0.0
  %1081 = vmatpush1.msra.mxu0 0.0
  %1082 = vmatprep.subr.mxu0 0.0
  %1083 = vmatpush1.msra.mxu0 0.0
  %1084 = vmatprep.subr.mxu0 0.0
  %1085 = vmatpush1.msra.mxu0 0.0
  %1086 = vmatprep.subr.mxu0 0.0
  %1087 = vmatpush1.msra.mxu0 %v994
  %1088 = vmatprep.subr.mxu0 0.0
  %1089 = vmatpush1.msra.mxu0 %v993
  %1090 = vmatprep.subr.mxu0 0.0
  %1091 = vmatpush1.msra.mxu0 %v992
  %1092 = vmatprep.subr.mxu0 0.0
  %1093 = vmatpush1.msra.mxu0 %v991
  %1094 = vmatprep.subr.mxu0 0.0
  %1095 = vmatpush1.msra.mxu0 %v990
  %1096 = vmatprep.subr.mxu0 0.0
  %1097 = vmatpush1.msra.mxu0 %v989
  %1098 = vmatprep.subr.mxu0 0.0
  %1099 = vmatpush1.msra.mxu0 %v988
  %1100 = vmatprep.subr.mxu0 0.0
  %1101 = vmatpush1.msra.mxu0 %v987
  %1102 = vmatprep.subr.mxu0 0.0
  %1103 = vmatpush2.msra.mxu0 0.0
  %1104 = vmatprep.subr.mxu0 0.0
  %1105 = vmatpush2.msra.mxu0 0.0
  %1106 = vmatprep.subr.mxu0 0.0
  %1107 = vmatpush2.msra.mxu0 0.0
  %1108 = vmatprep.subr.mxu0 0.0
  %1109 = vmatpush2.msra.mxu0 0.0
  %1110 = vmatprep.subr.mxu0 0.0
  %1111 = vmatpush2.msra.mxu0 0.0
  %1112 = vmatprep.subr.mxu0 0.0
  %1113 = vmatpush2.msra.mxu0 0.0
  %1114 = vmatprep.subr.mxu0 0.0
  %1115 = vmatpush2.msra.mxu0 0.0
  %1116 = vmatprep.subr.mxu0 0.0
  %1117 = vmatpush2.msra.mxu0 0.0
  %1118 = vmatprep.subr.mxu0 0.0
  %1119 = vmatpush2.msra.mxu0 0.0
  %1120 = vmatprep.subr.mxu0 0.0
  %1121 = vmatpush2.msra.mxu0 0.0
  %1122 = vmatprep.subr.mxu0 0.0
  %1123 = vmatpush2.msra.mxu0 0.0
  %1124 = vmatprep.subr.mxu0 0.0
  %1125 = vmatpush2.msra.mxu0 0.0
  %1126 = vmatprep.subr.mxu0 0.0
  %1127 = vmatpush2.msra.mxu0 0.0
  %1128 = vmatprep.subr.mxu0 0.0
  %1129 = vmatpush2.msra.mxu0 0.0
  %1130 = vmatprep.subr.mxu0 0.0
  %1131 = vmatpush2.msra.mxu0 0.0
  %1132 = vmatprep.subr.mxu0 0.0
  %1133 = vmatpush2.msra.mxu0 0.0
  %1134 = vmatprep.mubr.f32.mxu0 0.0
  %1135 = vmatmul.mubr.f32.gmra.mxu0 %v996
  %v1136 = vpop.f32.mrf.mxu0
  %v1137 = vadd.f32 0.0, %v1136
  %v1138 = vpop.f32.mrf.mxu0
  %1139 = vmatprep.mubr.f32.mxu0 0.0
  %1140 = vmatmul.mubr.f32.gmra.mxu0 %v999
  %v1141 = vpop.f32.mrf.mxu0
  %v1142 = vadd.f32 0.0, %v1141
  %v1143 = vpop.f32.mrf.mxu0
  %1144 = vmatprep.mubr.f32.mxu0 0.0
  %1145 = vmatmul.mubr.f32.gmra.mxu0 %v1002
  %v1146 = vpop.f32.mrf.mxu0
  %v1147 = vadd.f32 0.0, %v1146
  %v1148 = vpop.f32.mrf.mxu0
  %1149 = vmatprep.mubr.f32.mxu0 0.0
  %1150 = vmatmul.mubr.f32.gmra.mxu0 %v1005
  %v1151 = vpop.f32.mrf.mxu0
  %v1152 = vadd.f32 0.0, %v1151
  %v1153 = vpop.f32.mrf.mxu0
  %1154 = vmatprep.mubr.f32.mxu0 0.0
  %1155 = vmatmul.mubr.f32.gmra.mxu0 %v1008
  %v1156 = vpop.f32.mrf.mxu0
  %v1157 = vadd.f32 0.0, %v1156
  %v1158 = vpop.f32.mrf.mxu0
  %1159 = vmatprep.mubr.f32.mxu0 0.0
  %1160 = vmatmul.mubr.f32.gmra.mxu0 %v1011
  %v1161 = vpop.f32.mrf.mxu0
  %v1162 = vadd.f32 0.0, %v1161
  %v1163 = vpop.f32.mrf.mxu0
  %1164 = vmatprep.mubr.f32.mxu0 0.0
  %1165 = vmatmul.mubr.f32.gmra.mxu0 %v1014
  %v1166 = vpop.f32.mrf.mxu0
  %v1167 = vadd.f32 0.0, %v1166
  %v1168 = vpop.f32.mrf.mxu0
  %1169 = vmatprep.mubr.f32.mxu0 0.0
  %1170 = vmatmul.mubr.f32.gmra.mxu0 %v1017
  %v1171 = vpop.f32.mrf.mxu0
  %v1172 = vadd.f32 0.0, %v1171
  %v1173 = vpop.f32.mrf.mxu0
  %1174 = vmatprep.mubr.f32.mxu0 0.0
  %1175 = vmatmul.mubr.f32.gmra.mxu0 %v1020
  %v1176 = vpop.f32.mrf.mxu0
  %v1177 = vadd.f32 0.0, %v1176
  %v1178 = vpop.f32.mrf.mxu0
  %1179 = vmatprep.mubr.f32.mxu0 0.0
  %1180 = vmatmul.mubr.f32.gmra.mxu0 %v1023
  %v1181 = vpop.f32.mrf.mxu0
  %v1182 = vadd.f32 0.0, %v1181
  %v1183 = vpop.f32.mrf.mxu0
  %1184 = vmatprep.mubr.f32.mxu0 0.0
  %1185 = vmatmul.mubr.f32.gmra.mxu0 %v1026
  %v1186 = vpop.f32.mrf.mxu0
  %v1187 = vadd.f32 0.0, %v1186
  %v1188 = vpop.f32.mrf.mxu0
  %1189 = vmatprep.mubr.f32.mxu0 0.0
  %1190 = vmatmul.mubr.f32.gmra.mxu0 %v1029
  %v1191 = vpop.f32.mrf.mxu0
  %v1192 = vadd.f32 0.0, %v1191
  %v1193 = vpop.f32.mrf.mxu0
  %1194 = vmatprep.mubr.f32.mxu0 0.0
  %1195 = vmatmul.mubr.f32.gmra.mxu0 %v1032
  %v1196 = vpop.f32.mrf.mxu0
  %v1197 = vadd.f32 0.0, %v1196
  %v1198 = vpop.f32.mrf.mxu0
  %1199 = vmatprep.mubr.f32.mxu0 0.0
  %1200 = vmatmul.mubr.f32.gmra.mxu0 %v1035
  %v1201 = vpop.f32.mrf.mxu0
  %v1202 = vadd.f32 0.0, %v1201
  %v1203 = vpop.f32.mrf.mxu0
  %1204 = vmatprep.mubr.f32.mxu0 0.0
  %1205 = vmatmul.mubr.f32.gmra.mxu0 %v1038
  %v1206 = vpop.f32.mrf.mxu0
  %v1207 = vadd.f32 0.0, %v1206
  %v1208 = vpop.f32.mrf.mxu0
  %1209 = vmatprep.mubr.f32.mxu0 0.0
  %1210 = vmatmul.mubr.f32.gmra.mxu0 %v1041
  %v1211 = vpop.f32.mrf.mxu0
  %v1212 = vadd.f32 0.0, %v1211
  %v1213 = vpop.f32.mrf.mxu0
  %1214 = vmatprep.mubr.f32.mxu0 0.0
  %1215 = vmatmul.mubr.f32.gmra.mxu0 %v1044
  %v1216 = vpop.f32.mrf.mxu0
  %v1217 = vadd.f32 0.0, %v1216
  %v1218 = vpop.f32.mrf.mxu0
  %1219 = vmatprep.mubr.f32.mxu0 0.0
  %1220 = vmatmul.mubr.f32.gmra.mxu0 %v1047
  %v1221 = vpop.f32.mrf.mxu0
  %v1222 = vadd.f32 0.0, %v1221
  %v1223 = vpop.f32.mrf.mxu0
  %1224 = vmatprep.mubr.f32.mxu0 0.0
  %1225 = vmatmul.mubr.f32.gmra.mxu0 %v1050
  %v1226 = vpop.f32.mrf.mxu0
  %v1227 = vadd.f32 0.0, %v1226
  %v1228 = vpop.f32.mrf.mxu0
  %1229 = vmatprep.mubr.f32.mxu0 0.0
  %1230 = vmatmul.mubr.f32.gmra.mxu0 %v1053
  %v1231 = vpop.f32.mrf.mxu0
  %v1232 = vadd.f32 0.0, %v1231
  %v1233 = vpop.f32.mrf.mxu0
  %1234 = vmatprep.mubr.f32.mxu0 0.0
  %1235 = vmatmul.mubr.f32.gmra.mxu0 %v1056
  %v1236 = vpop.f32.mrf.mxu0
  %v1237 = vadd.f32 0.0, %v1236
  %v1238 = vpop.f32.mrf.mxu0
  %1239 = vmatprep.mubr.f32.mxu0 0.0
  %1240 = vmatmul.mubr.f32.gmra.mxu0 %v1059
  %v1241 = vpop.f32.mrf.mxu0
  %v1242 = vadd.f32 0.0, %v1241
  %v1243 = vpop.f32.mrf.mxu0
  %1244 = vmatprep.mubr.f32.mxu0 0.0
  %1245 = vmatmul.mubr.f32.gmra.mxu0 %v1062
  %v1246 = vpop.f32.mrf.mxu0
  %v1247 = vadd.f32 0.0, %v1246
  %v1248 = vpop.f32.mrf.mxu0
  %1249 = vmatprep.mubr.f32.mxu0 0.0
  %1250 = vmatmul.mubr.f32.gmra.mxu0 %v1065
  %v1251 = vpop.f32.mrf.mxu0
  %v1252 = vadd.f32 0.0, %v1251
  %v1253 = vpop.f32.mrf.mxu0
  %1254 = vmatprep.mubr.f32.mxu0 0.0
  %1255 = vmatmul.mubr.f32.gmra.mxu0 %v1068
  %v1256 = vpop.f32.mrf.mxu0
  %v1257 = vadd.f32 0.0, %v1256
  %v1258 = vpop.f32.mrf.mxu0
  %1259 = vdwg.mxu0
  %v1260 = vadd.f32 %v935, %v1137
  %v1261 = vadd.f32 %v936, %v1142
  %v1262 = vadd.f32 %v937, %v1147
  %v1263 = vadd.f32 %v938, %v1152
  %v1264 = vadd.f32 %v939, %v1157
  %v1265 = vadd.f32 %v940, %v1162
  %v1266 = vadd.f32 %v941, %v1167
  %v1267 = vadd.f32 %v942, %v1172
  %v1268 = vadd.f32 %v943, %v1177
  %v1269 = vadd.f32 %v944, %v1182
  %v1270 = vadd.f32 %v945, %v1187
  %v1271 = vadd.f32 %v946, %v1192
  %v1272 = vadd.f32 %v947, %v1197
  %v1273 = vadd.f32 %v948, %v1202
  %v1274 = vadd.f32 %v949, %v1207
  %v1275 = vadd.f32 %v950, %v1212
  %v1276 = vadd.f32 %v951, %v1217
  %v1277 = vadd.f32 %v952, %v1222
  %v1278 = vadd.f32 %v953, %v1227
  %v1279 = vadd.f32 %v954, %v1232
  %v1280 = vadd.f32 %v955, %v1237
  %v1281 = vadd.f32 %v956, %v1242
  %v1282 = vadd.f32 %v957, %v1247
  %v1283 = vadd.f32 %v958, %v1252
  %v1284 = vadd.f32 %v959, %v1257
  %s1285 = scalar_lea.vmem %s0, 64
  %v1286 = vld [vmem:[%s1285] sm:$0xff]
  %v1287 = vld [vmem:[%s1285 + $0x8] sm:$0xff]
  %v1288 = vld [vmem:[%s1285 + $0x10] sm:$0xff]
  %v1289 = vld [vmem:[%s1285 + $0x18] sm:$0xff]
  %v1290 = vld [vmem:[%s1285 + $0x20] sm:$0xff]
  %v1291 = vld [vmem:[%s1285 + $0x38] sm:$0xff]
  %v1292 = vld [vmem:[%s1285 + $0x40] sm:$0xff]
  %v1293 = vld [vmem:[%s1285 + $0x48] sm:$0xff]
  %v1294 = vld [vmem:[%s1285 + $0x50] sm:$0xff]
  %v1295 = vld [vmem:[%s1285 + $0x58] sm:$0xff]
  %v1296 = vld [vmem:[%s1285 + $0x70] sm:$0xff]
  %v1297 = vld [vmem:[%s1285 + $0x78] sm:$0xff]
  %v1298 = vld [vmem:[%s1285 + $0x80] sm:$0xff]
  %v1299 = vld [vmem:[%s1285 + $0x88] sm:$0xff]
  %v1300 = vld [vmem:[%s1285 + $0x90] sm:$0xff]
  %v1301 = vld [vmem:[%s1285 + $0xa8] sm:$0xff]
  %v1302 = vld [vmem:[%s1285 + $0xb0] sm:$0xff]
  %v1303 = vld [vmem:[%s1285 + $0xb8] sm:$0xff]
  %v1304 = vld [vmem:[%s1285 + $0xc0] sm:$0xff]
  %v1305 = vld [vmem:[%s1285 + $0xc8] sm:$0xff]
  %v1306 = vld [vmem:[%s1285 + $0xe0] sm:$0xff]
  %v1307 = vld [vmem:[%s1285 + $0xe8] sm:$0xff]
  %v1308 = vld [vmem:[%s1285 + $0xf0] sm:$0xff]
  %v1309 = vld [vmem:[%s1285 + $0xf8] sm:$0xff]
  %v1310 = vld [vmem:[%s1285 + $0x100] sm:$0xff]
  %s1311 = scalar_lea.vmem %s1, 256
  %v1312 = vld [vmem:[%s1311] sm:$0xff]
  %v1313 = vld [vmem:[%s1311 + $0x8] sm:$0xff]
  %v1314 = vld [vmem:[%s1311 + $0x10] sm:$0xff]
  %v1315 = vld [vmem:[%s1311 + $0x18] sm:$0xff]
  %v1316 = vld [vmem:[%s1311 + $0x20] sm:$0xff]
  %v1317 = vld [vmem:[%s1311 + $0x28] sm:$0xff]
  %v1318 = vld [vmem:[%s1311 + $0x30] sm:$0xff]
  %v1319 = vld [vmem:[%s1311 + $0x38] sm:$0xff]
  %v1321 = vsel %vm104, %v1286, 0
  %v1324 = vsel %vm104, %v1287, 0
  %v1327 = vsel %vm104, %v1288, 0
  %v1330 = vsel %vm104, %v1289, 0
  %v1333 = vsel %vm104, %v1290, 0
  %v1336 = vsel %vm104, %v1291, 0
  %v1339 = vsel %vm104, %v1292, 0
  %v1342 = vsel %vm104, %v1293, 0
  %v1345 = vsel %vm104, %v1294, 0
  %v1348 = vsel %vm104, %v1295, 0
  %v1351 = vsel %vm104, %v1296, 0
  %v1354 = vsel %vm104, %v1297, 0
  %v1357 = vsel %vm104, %v1298, 0
  %v1360 = vsel %vm104, %v1299, 0
  %v1363 = vsel %vm104, %v1300, 0
  %v1366 = vsel %vm104, %v1301, 0
  %v1369 = vsel %vm104, %v1302, 0
  %v1372 = vsel %vm104, %v1303, 0
  %v1375 = vsel %vm104, %v1304, 0
  %v1378 = vsel %vm104, %v1305, 0
  %v1381 = vsel %vm104, %v1306, 0
  %v1384 = vsel %vm104, %v1307, 0
  %v1387 = vsel %vm104, %v1308, 0
  %v1390 = vsel %vm104, %v1309, 0
  %v1393 = vsel %vm104, %v1310, 0
  %1395 = vmatprep.subr.mxu0 0.0
  %1396 = vmatpush1.msra.mxu0 0.0
  %1397 = vmatprep.subr.mxu0 0.0
  %1398 = vmatpush1.msra.mxu0 0.0
  %1399 = vmatprep.subr.mxu0 0.0
  %1400 = vmatpush1.msra.mxu0 0.0
  %1401 = vmatprep.subr.mxu0 0.0
  %1402 = vmatpush1.msra.mxu0 0.0
  %1403 = vmatprep.subr.mxu0 0.0
  %1404 = vmatpush1.msra.mxu0 0.0
  %1405 = vmatprep.subr.mxu0 0.0
  %1406 = vmatpush1.msra.mxu0 0.0
  %1407 = vmatprep.subr.mxu0 0.0
  %1408 = vmatpush1.msra.mxu0 0.0
  %1409 = vmatprep.subr.mxu0 0.0
  %1410 = vmatpush1.msra.mxu0 0.0
  %1411 = vmatprep.subr.mxu0 0.0
  %1412 = vmatpush1.msra.mxu0 %v1319
  %1413 = vmatprep.subr.mxu0 0.0
  %1414 = vmatpush1.msra.mxu0 %v1318
  %1415 = vmatprep.subr.mxu0 0.0
  %1416 = vmatpush1.msra.mxu0 %v1317
  %1417 = vmatprep.subr.mxu0 0.0
  %1418 = vmatpush1.msra.mxu0 %v1316
  %1419 = vmatprep.subr.mxu0 0.0
  %1420 = vmatpush1.msra.mxu0 %v1315
  %1421 = vmatprep.subr.mxu0 0.0
  %1422 = vmatpush1.msra.mxu0 %v1314
  %1423 = vmatprep.subr.mxu0 0.0
  %1424 = vmatpush1.msra.mxu0 %v1313
  %1425 = vmatprep.subr.mxu0 0.0
  %1426 = vmatpush1.msra.mxu0 %v1312
  %1427 = vmatprep.subr.mxu0 0.0
  %1428 = vmatpush2.msra.mxu0 0.0
  %1429 = vmatprep.subr.mxu0 0.0
  %1430 = vmatpush2.msra.mxu0 0.0
  %1431 = vmatprep.subr.mxu0 0.0
  %1432 = vmatpush2.msra.mxu0 0.0
  %1433 = vmatprep.subr.mxu0 0.0
  %1434 = vmatpush2.msra.mxu0 0.0
  %1435 = vmatprep.subr.mxu0 0.0
  %1436 = vmatpush2.msra.mxu0 0.0
  %1437 = vmatprep.subr.mxu0 0.0
  %1438 = vmatpush2.msra.mxu0 0.0
  %1439 = vmatprep.subr.mxu0 0.0
  %1440 = vmatpush2.msra.mxu0 0.0
  %1441 = vmatprep.subr.mxu0 0.0
  %1442 = vmatpush2.msra.mxu0 0.0
  %1443 = vmatprep.subr.mxu0 0.0
  %1444 = vmatpush2.msra.mxu0 0.0
  %1445 = vmatprep.subr.mxu0 0.0
  %1446 = vmatpush2.msra.mxu0 0.0
  %1447 = vmatprep.subr.mxu0 0.0
  %1448 = vmatpush2.msra.mxu0 0.0
  %1449 = vmatprep.subr.mxu0 0.0
  %1450 = vmatpush2.msra.mxu0 0.0
  %1451 = vmatprep.subr.mxu0 0.0
  %1452 = vmatpush2.msra.mxu0 0.0
  %1453 = vmatprep.subr.mxu0 0.0
  %1454 = vmatpush2.msra.mxu0 0.0
  %1455 = vmatprep.subr.mxu0 0.0
  %1456 = vmatpush2.msra.mxu0 0.0
  %1457 = vmatprep.subr.mxu0 0.0
  %1458 = vmatpush2.msra.mxu0 0.0
  %1459 = vmatprep.mubr.f32.mxu0 0.0
  %1460 = vmatmul.mubr.f32.gmra.mxu0 %v1321
  %v1461 = vpop.f32.mrf.mxu0
  %v1462 = vadd.f32 0.0, %v1461
  %v1463 = vpop.f32.mrf.mxu0
  %1464 = vmatprep.mubr.f32.mxu0 0.0
  %1465 = vmatmul.mubr.f32.gmra.mxu0 %v1324
  %v1466 = vpop.f32.mrf.mxu0
  %v1467 = vadd.f32 0.0, %v1466
  %v1468 = vpop.f32.mrf.mxu0
  %1469 = vmatprep.mubr.f32.mxu0 0.0
  %1470 = vmatmul.mubr.f32.gmra.mxu0 %v1327
  %v1471 = vpop.f32.mrf.mxu0
  %v1472 = vadd.f32 0.0, %v1471
  %v1473 = vpop.f32.mrf.mxu0
  %1474 = vmatprep.mubr.f32.mxu0 0.0
  %1475 = vmatmul.mubr.f32.gmra.mxu0 %v1330
  %v1476 = vpop.f32.mrf.mxu0
  %v1477 = vadd.f32 0.0, %v1476
  %v1478 = vpop.f32.mrf.mxu0
  %1479 = vmatprep.mubr.f32.mxu0 0.0
  %1480 = vmatmul.mubr.f32.gmra.mxu0 %v1333
  %v1481 = vpop.f32.mrf.mxu0
  %v1482 = vadd.f32 0.0, %v1481
  %v1483 = vpop.f32.mrf.mxu0
  %1484 = vmatprep.mubr.f32.mxu0 0.0
  %1485 = vmatmul.mubr.f32.gmra.mxu0 %v1336
  %v1486 = vpop.f32.mrf.mxu0
  %v1487 = vadd.f32 0.0, %v1486
  %v1488 = vpop.f32.mrf.mxu0
  %1489 = vmatprep.mubr.f32.mxu0 0.0
  %1490 = vmatmul.mubr.f32.gmra.mxu0 %v1339
  %v1491 = vpop.f32.mrf.mxu0
  %v1492 = vadd.f32 0.0, %v1491
  %v1493 = vpop.f32.mrf.mxu0
  %1494 = vmatprep.mubr.f32.mxu0 0.0
  %1495 = vmatmul.mubr.f32.gmra.mxu0 %v1342
  %v1496 = vpop.f32.mrf.mxu0
  %v1497 = vadd.f32 0.0, %v1496
  %v1498 = vpop.f32.mrf.mxu0
  %1499 = vmatprep.mubr.f32.mxu0 0.0
  %1500 = vmatmul.mubr.f32.gmra.mxu0 %v1345
  %v1501 = vpop.f32.mrf.mxu0
  %v1502 = vadd.f32 0.0, %v1501
  %v1503 = vpop.f32.mrf.mxu0
  %1504 = vmatprep.mubr.f32.mxu0 0.0
  %1505 = vmatmul.mubr.f32.gmra.mxu0 %v1348
  %v1506 = vpop.f32.mrf.mxu0
  %v1507 = vadd.f32 0.0, %v1506
  %v1508 = vpop.f32.mrf.mxu0
  %1509 = vmatprep.mubr.f32.mxu0 0.0
  %1510 = vmatmul.mubr.f32.gmra.mxu0 %v1351
  %v1511 = vpop.f32.mrf.mxu0
  %v1512 = vadd.f32 0.0, %v1511
  %v1513 = vpop.f32.mrf.mxu0
  %1514 = vmatprep.mubr.f32.mxu0 0.0
  %1515 = vmatmul.mubr.f32.gmra.mxu0 %v1354
  %v1516 = vpop.f32.mrf.mxu0
  %v1517 = vadd.f32 0.0, %v1516
  %v1518 = vpop.f32.mrf.mxu0
  %1519 = vmatprep.mubr.f32.mxu0 0.0
  %1520 = vmatmul.mubr.f32.gmra.mxu0 %v1357
  %v1521 = vpop.f32.mrf.mxu0
  %v1522 = vadd.f32 0.0, %v1521
  %v1523 = vpop.f32.mrf.mxu0
  %1524 = vmatprep.mubr.f32.mxu0 0.0
  %1525 = vmatmul.mubr.f32.gmra.mxu0 %v1360
  %v1526 = vpop.f32.mrf.mxu0
  %v1527 = vadd.f32 0.0, %v1526
  %v1528 = vpop.f32.mrf.mxu0
  %1529 = vmatprep.mubr.f32.mxu0 0.0
  %1530 = vmatmul.mubr.f32.gmra.mxu0 %v1363
  %v1531 = vpop.f32.mrf.mxu0
  %v1532 = vadd.f32 0.0, %v1531
  %v1533 = vpop.f32.mrf.mxu0
  %1534 = vmatprep.mubr.f32.mxu0 0.0
  %1535 = vmatmul.mubr.f32.gmra.mxu0 %v1366
  %v1536 = vpop.f32.mrf.mxu0
  %v1537 = vadd.f32 0.0, %v1536
  %v1538 = vpop.f32.mrf.mxu0
  %1539 = vmatprep.mubr.f32.mxu0 0.0
  %1540 = vmatmul.mubr.f32.gmra.mxu0 %v1369
  %v1541 = vpop.f32.mrf.mxu0
  %v1542 = vadd.f32 0.0, %v1541
  %v1543 = vpop.f32.mrf.mxu0
  %1544 = vmatprep.mubr.f32.mxu0 0.0
  %1545 = vmatmul.mubr.f32.gmra.mxu0 %v1372
  %v1546 = vpop.f32.mrf.mxu0
  %v1547 = vadd.f32 0.0, %v1546
  %v1548 = vpop.f32.mrf.mxu0
  %1549 = vmatprep.mubr.f32.mxu0 0.0
  %1550 = vmatmul.mubr.f32.gmra.mxu0 %v1375
  %v1551 = vpop.f32.mrf.mxu0
  %v1552 = vadd.f32 0.0, %v1551
  %v1553 = vpop.f32.mrf.mxu0
  %1554 = vmatprep.mubr.f32.mxu0 0.0
  %1555 = vmatmul.mubr.f32.gmra.mxu0 %v1378
  %v1556 = vpop.f32.mrf.mxu0
  %v1557 = vadd.f32 0.0, %v1556
  %v1558 = vpop.f32.mrf.mxu0
  %1559 = vmatprep.mubr.f32.mxu0 0.0
  %1560 = vmatmul.mubr.f32.gmra.mxu0 %v1381
  %v1561 = vpop.f32.mrf.mxu0
  %v1562 = vadd.f32 0.0, %v1561
  %v1563 = vpop.f32.mrf.mxu0
  %1564 = vmatprep.mubr.f32.mxu0 0.0
  %1565 = vmatmul.mubr.f32.gmra.mxu0 %v1384
  %v1566 = vpop.f32.mrf.mxu0
  %v1567 = vadd.f32 0.0, %v1566
  %v1568 = vpop.f32.mrf.mxu0
  %1569 = vmatprep.mubr.f32.mxu0 0.0
  %1570 = vmatmul.mubr.f32.gmra.mxu0 %v1387
  %v1571 = vpop.f32.mrf.mxu0
  %v1572 = vadd.f32 0.0, %v1571
  %v1573 = vpop.f32.mrf.mxu0
  %1574 = vmatprep.mubr.f32.mxu0 0.0
  %1575 = vmatmul.mubr.f32.gmra.mxu0 %v1390
  %v1576 = vpop.f32.mrf.mxu0
  %v1577 = vadd.f32 0.0, %v1576
  %v1578 = vpop.f32.mrf.mxu0
  %1579 = vmatprep.mubr.f32.mxu0 0.0
  %1580 = vmatmul.mubr.f32.gmra.mxu0 %v1393
  %v1581 = vpop.f32.mrf.mxu0
  %v1582 = vadd.f32 0.0, %v1581
  %v1583 = vpop.f32.mrf.mxu0
  %1584 = vdwg.mxu0
  %v1585 = vadd.f32 %v1260, %v1462
  %v1586 = vadd.f32 %v1261, %v1467
  %v1587 = vadd.f32 %v1262, %v1472
  %v1588 = vadd.f32 %v1263, %v1477
  %v1589 = vadd.f32 %v1264, %v1482
  %v1590 = vadd.f32 %v1265, %v1487
  %v1591 = vadd.f32 %v1266, %v1492
  %v1592 = vadd.f32 %v1267, %v1497
  %v1593 = vadd.f32 %v1268, %v1502
  %v1594 = vadd.f32 %v1269, %v1507
  %v1595 = vadd.f32 %v1270, %v1512
  %v1596 = vadd.f32 %v1271, %v1517
  %v1597 = vadd.f32 %v1272, %v1522
  %v1598 = vadd.f32 %v1273, %v1527
  %v1599 = vadd.f32 %v1274, %v1532
  %v1600 = vadd.f32 %v1275, %v1537
  %v1601 = vadd.f32 %v1276, %v1542
  %v1602 = vadd.f32 %v1277, %v1547
  %v1603 = vadd.f32 %v1278, %v1552
  %v1604 = vadd.f32 %v1279, %v1557
  %v1605 = vadd.f32 %v1280, %v1562
  %v1606 = vadd.f32 %v1281, %v1567
  %v1607 = vadd.f32 %v1282, %v1572
  %v1608 = vadd.f32 %v1283, %v1577
  %v1609 = vadd.f32 %v1284, %v1582
  %s1610 = scalar_lea.vmem %s0, 72
  %v1611 = vld [vmem:[%s1610] sm:$0xff]
  %v1612 = vld [vmem:[%s1610 + $0x8] sm:$0xff]
  %v1613 = vld [vmem:[%s1610 + $0x10] sm:$0xff]
  %v1614 = vld [vmem:[%s1610 + $0x18] sm:$0xff]
  %v1615 = vld [vmem:[%s1610 + $0x20] sm:$0xff]
  %v1616 = vld [vmem:[%s1610 + $0x38] sm:$0xff]
  %v1617 = vld [vmem:[%s1610 + $0x40] sm:$0xff]
  %v1618 = vld [vmem:[%s1610 + $0x48] sm:$0xff]
  %v1619 = vld [vmem:[%s1610 + $0x50] sm:$0xff]
  %v1620 = vld [vmem:[%s1610 + $0x58] sm:$0xff]
  %v1621 = vld [vmem:[%s1610 + $0x70] sm:$0xff]
  %v1622 = vld [vmem:[%s1610 + $0x78] sm:$0xff]
  %v1623 = vld [vmem:[%s1610 + $0x80] sm:$0xff]
  %v1624 = vld [vmem:[%s1610 + $0x88] sm:$0xff]
  %v1625 = vld [vmem:[%s1610 + $0x90] sm:$0xff]
  %v1626 = vld [vmem:[%s1610 + $0xa8] sm:$0xff]
  %v1627 = vld [vmem:[%s1610 + $0xb0] sm:$0xff]
  %v1628 = vld [vmem:[%s1610 + $0xb8] sm:$0xff]
  %v1629 = vld [vmem:[%s1610 + $0xc0] sm:$0xff]
  %v1630 = vld [vmem:[%s1610 + $0xc8] sm:$0xff]
  %v1631 = vld [vmem:[%s1610 + $0xe0] sm:$0xff]
  %v1632 = vld [vmem:[%s1610 + $0xe8] sm:$0xff]
  %v1633 = vld [vmem:[%s1610 + $0xf0] sm:$0xff]
  %v1634 = vld [vmem:[%s1610 + $0xf8] sm:$0xff]
  %v1635 = vld [vmem:[%s1610 + $0x100] sm:$0xff]
  %s1636 = scalar_lea.vmem %s1, 320
  %v1637 = vld [vmem:[%s1636] sm:$0xff]
  %v1638 = vld [vmem:[%s1636 + $0x8] sm:$0xff]
  %v1639 = vld [vmem:[%s1636 + $0x10] sm:$0xff]
  %v1640 = vld [vmem:[%s1636 + $0x18] sm:$0xff]
  %v1641 = vld [vmem:[%s1636 + $0x20] sm:$0xff]
  %v1642 = vld [vmem:[%s1636 + $0x28] sm:$0xff]
  %v1643 = vld [vmem:[%s1636 + $0x30] sm:$0xff]
  %v1644 = vld [vmem:[%s1636 + $0x38] sm:$0xff]
  %v1646 = vsel %vm104, %v1611, 0
  %v1649 = vsel %vm104, %v1612, 0
  %v1652 = vsel %vm104, %v1613, 0
  %v1655 = vsel %vm104, %v1614, 0
  %v1658 = vsel %vm104, %v1615, 0
  %v1661 = vsel %vm104, %v1616, 0
  %v1664 = vsel %vm104, %v1617, 0
  %v1667 = vsel %vm104, %v1618, 0
  %v1670 = vsel %vm104, %v1619, 0
  %v1673 = vsel %vm104, %v1620, 0
  %v1676 = vsel %vm104, %v1621, 0
  %v1679 = vsel %vm104, %v1622, 0
  %v1682 = vsel %vm104, %v1623, 0
  %v1685 = vsel %vm104, %v1624, 0
  %v1688 = vsel %vm104, %v1625, 0
  %v1691 = vsel %vm104, %v1626, 0
  %v1694 = vsel %vm104, %v1627, 0
  %v1697 = vsel %vm104, %v1628, 0
  %v1700 = vsel %vm104, %v1629, 0
  %v1703 = vsel %vm104, %v1630, 0
  %v1706 = vsel %vm104, %v1631, 0
  %v1709 = vsel %vm104, %v1632, 0
  %v1712 = vsel %vm104, %v1633, 0
  %v1715 = vsel %vm104, %v1634, 0
  %v1718 = vsel %vm104, %v1635, 0
  %1720 = vmatprep.subr.mxu0 0.0
  %1721 = vmatpush1.msra.mxu0 0.0
  %1722 = vmatprep.subr.mxu0 0.0
  %1723 = vmatpush1.msra.mxu0 0.0
  %1724 = vmatprep.subr.mxu0 0.0
  %1725 = vmatpush1.msra.mxu0 0.0
  %1726 = vmatprep.subr.mxu0 0.0
  %1727 = vmatpush1.msra.mxu0 0.0
  %1728 = vmatprep.subr.mxu0 0.0
  %1729 = vmatpush1.msra.mxu0 0.0
  %1730 = vmatprep.subr.mxu0 0.0
  %1731 = vmatpush1.msra.mxu0 0.0
  %1732 = vmatprep.subr.mxu0 0.0
  %1733 = vmatpush1.msra.mxu0 0.0
  %1734 = vmatprep.subr.mxu0 0.0
  %1735 = vmatpush1.msra.mxu0 0.0
  %1736 = vmatprep.subr.mxu0 0.0
  %1737 = vmatpush1.msra.mxu0 %v1644
  %1738 = vmatprep.subr.mxu0 0.0
  %1739 = vmatpush1.msra.mxu0 %v1643
  %1740 = vmatprep.subr.mxu0 0.0
  %1741 = vmatpush1.msra.mxu0 %v1642
  %1742 = vmatprep.subr.mxu0 0.0
  %1743 = vmatpush1.msra.mxu0 %v1641
  %1744 = vmatprep.subr.mxu0 0.0
  %1745 = vmatpush1.msra.mxu0 %v1640
  %1746 = vmatprep.subr.mxu0 0.0
  %1747 = vmatpush1.msra.mxu0 %v1639
  %1748 = vmatprep.subr.mxu0 0.0
  %1749 = vmatpush1.msra.mxu0 %v1638
  %1750 = vmatprep.subr.mxu0 0.0
  %1751 = vmatpush1.msra.mxu0 %v1637
  %1752 = vmatprep.subr.mxu0 0.0
  %1753 = vmatpush2.msra.mxu0 0.0
  %1754 = vmatprep.subr.mxu0 0.0
  %1755 = vmatpush2.msra.mxu0 0.0
  %1756 = vmatprep.subr.mxu0 0.0
  %1757 = vmatpush2.msra.mxu0 0.0
  %1758 = vmatprep.subr.mxu0 0.0
  %1759 = vmatpush2.msra.mxu0 0.0
  %1760 = vmatprep.subr.mxu0 0.0
  %1761 = vmatpush2.msra.mxu0 0.0
  %1762 = vmatprep.subr.mxu0 0.0
  %1763 = vmatpush2.msra.mxu0 0.0
  %1764 = vmatprep.subr.mxu0 0.0
  %1765 = vmatpush2.msra.mxu0 0.0
  %1766 = vmatprep.subr.mxu0 0.0
  %1767 = vmatpush2.msra.mxu0 0.0
  %1768 = vmatprep.subr.mxu0 0.0
  %1769 = vmatpush2.msra.mxu0 0.0
  %1770 = vmatprep.subr.mxu0 0.0
  %1771 = vmatpush2.msra.mxu0 0.0
  %1772 = vmatprep.subr.mxu0 0.0
  %1773 = vmatpush2.msra.mxu0 0.0
  %1774 = vmatprep.subr.mxu0 0.0
  %1775 = vmatpush2.msra.mxu0 0.0
  %1776 = vmatprep.subr.mxu0 0.0
  %1777 = vmatpush2.msra.mxu0 0.0
  %1778 = vmatprep.subr.mxu0 0.0
  %1779 = vmatpush2.msra.mxu0 0.0
  %1780 = vmatprep.subr.mxu0 0.0
  %1781 = vmatpush2.msra.mxu0 0.0
  %1782 = vmatprep.subr.mxu0 0.0
  %1783 = vmatpush2.msra.mxu0 0.0
  %1784 = vmatprep.mubr.f32.mxu0 0.0
  %1785 = vmatmul.mubr.f32.gmra.mxu0 %v1646
  %v1786 = vpop.f32.mrf.mxu0
  %v1787 = vadd.f32 0.0, %v1786
  %v1788 = vpop.f32.mrf.mxu0
  %1789 = vmatprep.mubr.f32.mxu0 0.0
  %1790 = vmatmul.mubr.f32.gmra.mxu0 %v1649
  %v1791 = vpop.f32.mrf.mxu0
  %v1792 = vadd.f32 0.0, %v1791
  %v1793 = vpop.f32.mrf.mxu0
  %1794 = vmatprep.mubr.f32.mxu0 0.0
  %1795 = vmatmul.mubr.f32.gmra.mxu0 %v1652
  %v1796 = vpop.f32.mrf.mxu0
  %v1797 = vadd.f32 0.0, %v1796
  %v1798 = vpop.f32.mrf.mxu0
  %1799 = vmatprep.mubr.f32.mxu0 0.0
  %1800 = vmatmul.mubr.f32.gmra.mxu0 %v1655
  %v1801 = vpop.f32.mrf.mxu0
  %v1802 = vadd.f32 0.0, %v1801
  %v1803 = vpop.f32.mrf.mxu0
  %1804 = vmatprep.mubr.f32.mxu0 0.0
  %1805 = vmatmul.mubr.f32.gmra.mxu0 %v1658
  %v1806 = vpop.f32.mrf.mxu0
  %v1807 = vadd.f32 0.0, %v1806
  %v1808 = vpop.f32.mrf.mxu0
  %1809 = vmatprep.mubr.f32.mxu0 0.0
  %1810 = vmatmul.mubr.f32.gmra.mxu0 %v1661
  %v1811 = vpop.f32.mrf.mxu0
  %v1812 = vadd.f32 0.0, %v1811
  %v1813 = vpop.f32.mrf.mxu0
  %1814 = vmatprep.mubr.f32.mxu0 0.0
  %1815 = vmatmul.mubr.f32.gmra.mxu0 %v1664
  %v1816 = vpop.f32.mrf.mxu0
  %v1817 = vadd.f32 0.0, %v1816
  %v1818 = vpop.f32.mrf.mxu0
  %1819 = vmatprep.mubr.f32.mxu0 0.0
  %1820 = vmatmul.mubr.f32.gmra.mxu0 %v1667
  %v1821 = vpop.f32.mrf.mxu0
  %v1822 = vadd.f32 0.0, %v1821
  %v1823 = vpop.f32.mrf.mxu0
  %1824 = vmatprep.mubr.f32.mxu0 0.0
  %1825 = vmatmul.mubr.f32.gmra.mxu0 %v1670
  %v1826 = vpop.f32.mrf.mxu0
  %v1827 = vadd.f32 0.0, %v1826
  %v1828 = vpop.f32.mrf.mxu0
  %1829 = vmatprep.mubr.f32.mxu0 0.0
  %1830 = vmatmul.mubr.f32.gmra.mxu0 %v1673
  %v1831 = vpop.f32.mrf.mxu0
  %v1832 = vadd.f32 0.0, %v1831
  %v1833 = vpop.f32.mrf.mxu0
  %1834 = vmatprep.mubr.f32.mxu0 0.0
  %1835 = vmatmul.mubr.f32.gmra.mxu0 %v1676
  %v1836 = vpop.f32.mrf.mxu0
  %v1837 = vadd.f32 0.0, %v1836
  %v1838 = vpop.f32.mrf.mxu0
  %1839 = vmatprep.mubr.f32.mxu0 0.0
  %1840 = vmatmul.mubr.f32.gmra.mxu0 %v1679
  %v1841 = vpop.f32.mrf.mxu0
  %v1842 = vadd.f32 0.0, %v1841
  %v1843 = vpop.f32.mrf.mxu0
  %1844 = vmatprep.mubr.f32.mxu0 0.0
  %1845 = vmatmul.mubr.f32.gmra.mxu0 %v1682
  %v1846 = vpop.f32.mrf.mxu0
  %v1847 = vadd.f32 0.0, %v1846
  %v1848 = vpop.f32.mrf.mxu0
  %1849 = vmatprep.mubr.f32.mxu0 0.0
  %1850 = vmatmul.mubr.f32.gmra.mxu0 %v1685
  %v1851 = vpop.f32.mrf.mxu0
  %v1852 = vadd.f32 0.0, %v1851
  %v1853 = vpop.f32.mrf.mxu0
  %1854 = vmatprep.mubr.f32.mxu0 0.0
  %1855 = vmatmul.mubr.f32.gmra.mxu0 %v1688
  %v1856 = vpop.f32.mrf.mxu0
  %v1857 = vadd.f32 0.0, %v1856
  %v1858 = vpop.f32.mrf.mxu0
  %1859 = vmatprep.mubr.f32.mxu0 0.0
  %1860 = vmatmul.mubr.f32.gmra.mxu0 %v1691
  %v1861 = vpop.f32.mrf.mxu0
  %v1862 = vadd.f32 0.0, %v1861
  %v1863 = vpop.f32.mrf.mxu0
  %1864 = vmatprep.mubr.f32.mxu0 0.0
  %1865 = vmatmul.mubr.f32.gmra.mxu0 %v1694
  %v1866 = vpop.f32.mrf.mxu0
  %v1867 = vadd.f32 0.0, %v1866
  %v1868 = vpop.f32.mrf.mxu0
  %1869 = vmatprep.mubr.f32.mxu0 0.0
  %1870 = vmatmul.mubr.f32.gmra.mxu0 %v1697
  %v1871 = vpop.f32.mrf.mxu0
  %v1872 = vadd.f32 0.0, %v1871
  %v1873 = vpop.f32.mrf.mxu0
  %1874 = vmatprep.mubr.f32.mxu0 0.0
  %1875 = vmatmul.mubr.f32.gmra.mxu0 %v1700
  %v1876 = vpop.f32.mrf.mxu0
  %v1877 = vadd.f32 0.0, %v1876
  %v1878 = vpop.f32.mrf.mxu0
  %1879 = vmatprep.mubr.f32.mxu0 0.0
  %1880 = vmatmul.mubr.f32.gmra.mxu0 %v1703
  %v1881 = vpop.f32.mrf.mxu0
  %v1882 = vadd.f32 0.0, %v1881
  %v1883 = vpop.f32.mrf.mxu0
  %1884 = vmatprep.mubr.f32.mxu0 0.0
  %1885 = vmatmul.mubr.f32.gmra.mxu0 %v1706
  %v1886 = vpop.f32.mrf.mxu0
  %v1887 = vadd.f32 0.0, %v1886
  %v1888 = vpop.f32.mrf.mxu0
  %1889 = vmatprep.mubr.f32.mxu0 0.0
  %1890 = vmatmul.mubr.f32.gmra.mxu0 %v1709
  %v1891 = vpop.f32.mrf.mxu0
  %v1892 = vadd.f32 0.0, %v1891
  %v1893 = vpop.f32.mrf.mxu0
  %1894 = vmatprep.mubr.f32.mxu0 0.0
  %1895 = vmatmul.mubr.f32.gmra.mxu0 %v1712
  %v1896 = vpop.f32.mrf.mxu0
  %v1897 = vadd.f32 0.0, %v1896
  %v1898 = vpop.f32.mrf.mxu0
  %1899 = vmatprep.mubr.f32.mxu0 0.0
  %1900 = vmatmul.mubr.f32.gmra.mxu0 %v1715
  %v1901 = vpop.f32.mrf.mxu0
  %v1902 = vadd.f32 0.0, %v1901
  %v1903 = vpop.f32.mrf.mxu0
  %1904 = vmatprep.mubr.f32.mxu0 0.0
  %1905 = vmatmul.mubr.f32.gmra.mxu0 %v1718
  %v1906 = vpop.f32.mrf.mxu0
  %v1907 = vadd.f32 0.0, %v1906
  %v1908 = vpop.f32.mrf.mxu0
  %1909 = vdwg.mxu0
  %v1910 = vadd.f32 %v1585, %v1787
  %v1911 = vadd.f32 %v1586, %v1792
  %v1912 = vadd.f32 %v1587, %v1797
  %v1913 = vadd.f32 %v1588, %v1802
  %v1914 = vadd.f32 %v1589, %v1807
  %v1915 = vadd.f32 %v1590, %v1812
  %v1916 = vadd.f32 %v1591, %v1817
  %v1917 = vadd.f32 %v1592, %v1822
  %v1918 = vadd.f32 %v1593, %v1827
  %v1919 = vadd.f32 %v1594, %v1832
  %v1920 = vadd.f32 %v1595, %v1837
  %v1921 = vadd.f32 %v1596, %v1842
  %v1922 = vadd.f32 %v1597, %v1847
  %v1923 = vadd.f32 %v1598, %v1852
  %v1924 = vadd.f32 %v1599, %v1857
  %v1925 = vadd.f32 %v1600, %v1862
  %v1926 = vadd.f32 %v1601, %v1867
  %v1927 = vadd.f32 %v1602, %v1872
  %v1928 = vadd.f32 %v1603, %v1877
  %v1929 = vadd.f32 %v1604, %v1882
  %v1930 = vadd.f32 %v1605, %v1887
  %v1931 = vadd.f32 %v1606, %v1892
  %v1932 = vadd.f32 %v1607, %v1897
  %v1933 = vadd.f32 %v1608, %v1902
  %v1934 = vadd.f32 %v1609, %v1907
  %s1935 = scalar_lea.vmem %s0, 112
  %v1936 = vld [vmem:[%s1935] sm:$0xff]
  %v1937 = vld [vmem:[%s1935 + $0x8] sm:$0xff]
  %v1938 = vld [vmem:[%s1935 + $0x10] sm:$0xff]
  %v1939 = vld [vmem:[%s1935 + $0x18] sm:$0xff]
  %v1940 = vld [vmem:[%s1935 + $0x20] sm:$0xff]
  %v1941 = vld [vmem:[%s1935 + $0x38] sm:$0xff]
  %v1942 = vld [vmem:[%s1935 + $0x40] sm:$0xff]
  %v1943 = vld [vmem:[%s1935 + $0x48] sm:$0xff]
  %v1944 = vld [vmem:[%s1935 + $0x50] sm:$0xff]
  %v1945 = vld [vmem:[%s1935 + $0x58] sm:$0xff]
  %v1946 = vld [vmem:[%s1935 + $0x70] sm:$0xff]
  %v1947 = vld [vmem:[%s1935 + $0x78] sm:$0xff]
  %v1948 = vld [vmem:[%s1935 + $0x80] sm:$0xff]
  %v1949 = vld [vmem:[%s1935 + $0x88] sm:$0xff]
  %v1950 = vld [vmem:[%s1935 + $0x90] sm:$0xff]
  %v1951 = vld [vmem:[%s1935 + $0xa8] sm:$0xff]
  %v1952 = vld [vmem:[%s1935 + $0xb0] sm:$0xff]
  %v1953 = vld [vmem:[%s1935 + $0xb8] sm:$0xff]
  %v1954 = vld [vmem:[%s1935 + $0xc0] sm:$0xff]
  %v1955 = vld [vmem:[%s1935 + $0xc8] sm:$0xff]
  %v1956 = vld [vmem:[%s1935 + $0xe0] sm:$0xff]
  %v1957 = vld [vmem:[%s1935 + $0xe8] sm:$0xff]
  %v1958 = vld [vmem:[%s1935 + $0xf0] sm:$0xff]
  %v1959 = vld [vmem:[%s1935 + $0xf8] sm:$0xff]
  %v1960 = vld [vmem:[%s1935 + $0x100] sm:$0xff]
  %s1961 = scalar_lea.vmem %s1, 384
  %v1962 = vld [vmem:[%s1961] sm:$0xff]
  %v1963 = vld [vmem:[%s1961 + $0x8] sm:$0xff]
  %v1964 = vld [vmem:[%s1961 + $0x10] sm:$0xff]
  %v1965 = vld [vmem:[%s1961 + $0x18] sm:$0xff]
  %v1966 = vld [vmem:[%s1961 + $0x20] sm:$0xff]
  %v1967 = vld [vmem:[%s1961 + $0x28] sm:$0xff]
  %v1968 = vld [vmem:[%s1961 + $0x30] sm:$0xff]
  %v1969 = vld [vmem:[%s1961 + $0x38] sm:$0xff]
  %v1971 = vsel %vm104, %v1936, 0
  %v1974 = vsel %vm104, %v1937, 0
  %v1977 = vsel %vm104, %v1938, 0
  %v1980 = vsel %vm104, %v1939, 0
  %v1983 = vsel %vm104, %v1940, 0
  %v1986 = vsel %vm104, %v1941, 0
  %v1989 = vsel %vm104, %v1942, 0
  %v1992 = vsel %vm104, %v1943, 0
  %v1995 = vsel %vm104, %v1944, 0
  %v1998 = vsel %vm104, %v1945, 0
  %v2001 = vsel %vm104, %v1946, 0
  %v2004 = vsel %vm104, %v1947, 0
  %v2007 = vsel %vm104, %v1948, 0
  %v2010 = vsel %vm104, %v1949, 0
  %v2013 = vsel %vm104, %v1950, 0
  %v2016 = vsel %vm104, %v1951, 0
  %v2019 = vsel %vm104, %v1952, 0
  %v2022 = vsel %vm104, %v1953, 0
  %v2025 = vsel %vm104, %v1954, 0
  %v2028 = vsel %vm104, %v1955, 0
  %v2031 = vsel %vm104, %v1956, 0
  %v2034 = vsel %vm104, %v1957, 0
  %v2037 = vsel %vm104, %v1958, 0
  %v2040 = vsel %vm104, %v1959, 0
  %v2043 = vsel %vm104, %v1960, 0
  %2045 = vmatprep.subr.mxu0 0.0
  %2046 = vmatpush1.msra.mxu0 0.0
  %2047 = vmatprep.subr.mxu0 0.0
  %2048 = vmatpush1.msra.mxu0 0.0
  %2049 = vmatprep.subr.mxu0 0.0
  %2050 = vmatpush1.msra.mxu0 0.0
  %2051 = vmatprep.subr.mxu0 0.0
  %2052 = vmatpush1.msra.mxu0 0.0
  %2053 = vmatprep.subr.mxu0 0.0
  %2054 = vmatpush1.msra.mxu0 0.0
  %2055 = vmatprep.subr.mxu0 0.0
  %2056 = vmatpush1.msra.mxu0 0.0
  %2057 = vmatprep.subr.mxu0 0.0
  %2058 = vmatpush1.msra.mxu0 0.0
  %2059 = vmatprep.subr.mxu0 0.0
  %2060 = vmatpush1.msra.mxu0 0.0
  %2061 = vmatprep.subr.mxu0 0.0
  %2062 = vmatpush1.msra.mxu0 %v1969
  %2063 = vmatprep.subr.mxu0 0.0
  %2064 = vmatpush1.msra.mxu0 %v1968
  %2065 = vmatprep.subr.mxu0 0.0
  %2066 = vmatpush1.msra.mxu0 %v1967
  %2067 = vmatprep.subr.mxu0 0.0
  %2068 = vmatpush1.msra.mxu0 %v1966
  %2069 = vmatprep.subr.mxu0 0.0
  %2070 = vmatpush1.msra.mxu0 %v1965
  %2071 = vmatprep.subr.mxu0 0.0
  %2072 = vmatpush1.msra.mxu0 %v1964
  %2073 = vmatprep.subr.mxu0 0.0
  %2074 = vmatpush1.msra.mxu0 %v1963
  %2075 = vmatprep.subr.mxu0 0.0
  %2076 = vmatpush1.msra.mxu0 %v1962
  %2077 = vmatprep.subr.mxu0 0.0
  %2078 = vmatpush2.msra.mxu0 0.0
  %2079 = vmatprep.subr.mxu0 0.0
  %2080 = vmatpush2.msra.mxu0 0.0
  %2081 = vmatprep.subr.mxu0 0.0
  %2082 = vmatpush2.msra.mxu0 0.0
  %2083 = vmatprep.subr.mxu0 0.0
  %2084 = vmatpush2.msra.mxu0 0.0
  %2085 = vmatprep.subr.mxu0 0.0
  %2086 = vmatpush2.msra.mxu0 0.0
  %2087 = vmatprep.subr.mxu0 0.0
  %2088 = vmatpush2.msra.mxu0 0.0
  %2089 = vmatprep.subr.mxu0 0.0
  %2090 = vmatpush2.msra.mxu0 0.0
  %2091 = vmatprep.subr.mxu0 0.0
  %2092 = vmatpush2.msra.mxu0 0.0
  %2093 = vmatprep.subr.mxu0 0.0
  %2094 = vmatpush2.msra.mxu0 0.0
  %2095 = vmatprep.subr.mxu0 0.0
  %2096 = vmatpush2.msra.mxu0 0.0
  %2097 = vmatprep.subr.mxu0 0.0
  %2098 = vmatpush2.msra.mxu0 0.0
  %2099 = vmatprep.subr.mxu0 0.0
  %2100 = vmatpush2.msra.mxu0 0.0
  %2101 = vmatprep.subr.mxu0 0.0
  %2102 = vmatpush2.msra.mxu0 0.0
  %2103 = vmatprep.subr.mxu0 0.0
  %2104 = vmatpush2.msra.mxu0 0.0
  %2105 = vmatprep.subr.mxu0 0.0
  %2106 = vmatpush2.msra.mxu0 0.0
  %2107 = vmatprep.subr.mxu0 0.0
  %2108 = vmatpush2.msra.mxu0 0.0
  %2109 = vmatprep.mubr.f32.mxu0 0.0
  %2110 = vmatmul.mubr.f32.gmra.mxu0 %v1971
  %v2111 = vpop.f32.mrf.mxu0
  %v2112 = vadd.f32 0.0, %v2111
  %v2113 = vpop.f32.mrf.mxu0
  %2114 = vmatprep.mubr.f32.mxu0 0.0
  %2115 = vmatmul.mubr.f32.gmra.mxu0 %v1974
  %v2116 = vpop.f32.mrf.mxu0
  %v2117 = vadd.f32 0.0, %v2116
  %v2118 = vpop.f32.mrf.mxu0
  %2119 = vmatprep.mubr.f32.mxu0 0.0
  %2120 = vmatmul.mubr.f32.gmra.mxu0 %v1977
  %v2121 = vpop.f32.mrf.mxu0
  %v2122 = vadd.f32 0.0, %v2121
  %v2123 = vpop.f32.mrf.mxu0
  %2124 = vmatprep.mubr.f32.mxu0 0.0
  %2125 = vmatmul.mubr.f32.gmra.mxu0 %v1980
  %v2126 = vpop.f32.mrf.mxu0
  %v2127 = vadd.f32 0.0, %v2126
  %v2128 = vpop.f32.mrf.mxu0
  %2129 = vmatprep.mubr.f32.mxu0 0.0
  %2130 = vmatmul.mubr.f32.gmra.mxu0 %v1983
  %v2131 = vpop.f32.mrf.mxu0
  %v2132 = vadd.f32 0.0, %v2131
  %v2133 = vpop.f32.mrf.mxu0
  %2134 = vmatprep.mubr.f32.mxu0 0.0
  %2135 = vmatmul.mubr.f32.gmra.mxu0 %v1986
  %v2136 = vpop.f32.mrf.mxu0
  %v2137 = vadd.f32 0.0, %v2136
  %v2138 = vpop.f32.mrf.mxu0
  %2139 = vmatprep.mubr.f32.mxu0 0.0
  %2140 = vmatmul.mubr.f32.gmra.mxu0 %v1989
  %v2141 = vpop.f32.mrf.mxu0
  %v2142 = vadd.f32 0.0, %v2141
  %v2143 = vpop.f32.mrf.mxu0
  %2144 = vmatprep.mubr.f32.mxu0 0.0
  %2145 = vmatmul.mubr.f32.gmra.mxu0 %v1992
  %v2146 = vpop.f32.mrf.mxu0
  %v2147 = vadd.f32 0.0, %v2146
  %v2148 = vpop.f32.mrf.mxu0
  %2149 = vmatprep.mubr.f32.mxu0 0.0
  %2150 = vmatmul.mubr.f32.gmra.mxu0 %v1995
  %v2151 = vpop.f32.mrf.mxu0
  %v2152 = vadd.f32 0.0, %v2151
  %v2153 = vpop.f32.mrf.mxu0
  %2154 = vmatprep.mubr.f32.mxu0 0.0
  %2155 = vmatmul.mubr.f32.gmra.mxu0 %v1998
  %v2156 = vpop.f32.mrf.mxu0
  %v2157 = vadd.f32 0.0, %v2156
  %v2158 = vpop.f32.mrf.mxu0
  %2159 = vmatprep.mubr.f32.mxu0 0.0
  %2160 = vmatmul.mubr.f32.gmra.mxu0 %v2001
  %v2161 = vpop.f32.mrf.mxu0
  %v2162 = vadd.f32 0.0, %v2161
  %v2163 = vpop.f32.mrf.mxu0
  %2164 = vmatprep.mubr.f32.mxu0 0.0
  %2165 = vmatmul.mubr.f32.gmra.mxu0 %v2004
  %v2166 = vpop.f32.mrf.mxu0
  %v2167 = vadd.f32 0.0, %v2166
  %v2168 = vpop.f32.mrf.mxu0
  %2169 = vmatprep.mubr.f32.mxu0 0.0
  %2170 = vmatmul.mubr.f32.gmra.mxu0 %v2007
  %v2171 = vpop.f32.mrf.mxu0
  %v2172 = vadd.f32 0.0, %v2171
  %v2173 = vpop.f32.mrf.mxu0
  %2174 = vmatprep.mubr.f32.mxu0 0.0
  %2175 = vmatmul.mubr.f32.gmra.mxu0 %v2010
  %v2176 = vpop.f32.mrf.mxu0
  %v2177 = vadd.f32 0.0, %v2176
  %v2178 = vpop.f32.mrf.mxu0
  %2179 = vmatprep.mubr.f32.mxu0 0.0
  %2180 = vmatmul.mubr.f32.gmra.mxu0 %v2013
  %v2181 = vpop.f32.mrf.mxu0
  %v2182 = vadd.f32 0.0, %v2181
  %v2183 = vpop.f32.mrf.mxu0
  %2184 = vmatprep.mubr.f32.mxu0 0.0
  %2185 = vmatmul.mubr.f32.gmra.mxu0 %v2016
  %v2186 = vpop.f32.mrf.mxu0
  %v2187 = vadd.f32 0.0, %v2186
  %v2188 = vpop.f32.mrf.mxu0
  %2189 = vmatprep.mubr.f32.mxu0 0.0
  %2190 = vmatmul.mubr.f32.gmra.mxu0 %v2019
  %v2191 = vpop.f32.mrf.mxu0
  %v2192 = vadd.f32 0.0, %v2191
  %v2193 = vpop.f32.mrf.mxu0
  %2194 = vmatprep.mubr.f32.mxu0 0.0
  %2195 = vmatmul.mubr.f32.gmra.mxu0 %v2022
  %v2196 = vpop.f32.mrf.mxu0
  %v2197 = vadd.f32 0.0, %v2196
  %v2198 = vpop.f32.mrf.mxu0
  %2199 = vmatprep.mubr.f32.mxu0 0.0
  %2200 = vmatmul.mubr.f32.gmra.mxu0 %v2025
  %v2201 = vpop.f32.mrf.mxu0
  %v2202 = vadd.f32 0.0, %v2201
  %v2203 = vpop.f32.mrf.mxu0
  %2204 = vmatprep.mubr.f32.mxu0 0.0
  %2205 = vmatmul.mubr.f32.gmra.mxu0 %v2028
  %v2206 = vpop.f32.mrf.mxu0
  %v2207 = vadd.f32 0.0, %v2206
  %v2208 = vpop.f32.mrf.mxu0
  %2209 = vmatprep.mubr.f32.mxu0 0.0
  %2210 = vmatmul.mubr.f32.gmra.mxu0 %v2031
  %v2211 = vpop.f32.mrf.mxu0
  %v2212 = vadd.f32 0.0, %v2211
  %v2213 = vpop.f32.mrf.mxu0
  %2214 = vmatprep.mubr.f32.mxu0 0.0
  %2215 = vmatmul.mubr.f32.gmra.mxu0 %v2034
  %v2216 = vpop.f32.mrf.mxu0
  %v2217 = vadd.f32 0.0, %v2216
  %v2218 = vpop.f32.mrf.mxu0
  %2219 = vmatprep.mubr.f32.mxu0 0.0
  %2220 = vmatmul.mubr.f32.gmra.mxu0 %v2037
  %v2221 = vpop.f32.mrf.mxu0
  %v2222 = vadd.f32 0.0, %v2221
  %v2223 = vpop.f32.mrf.mxu0
  %2224 = vmatprep.mubr.f32.mxu0 0.0
  %2225 = vmatmul.mubr.f32.gmra.mxu0 %v2040
  %v2226 = vpop.f32.mrf.mxu0
  %v2227 = vadd.f32 0.0, %v2226
  %v2228 = vpop.f32.mrf.mxu0
  %2229 = vmatprep.mubr.f32.mxu0 0.0
  %2230 = vmatmul.mubr.f32.gmra.mxu0 %v2043
  %v2231 = vpop.f32.mrf.mxu0
  %v2232 = vadd.f32 0.0, %v2231
  %v2233 = vpop.f32.mrf.mxu0
  %2234 = vdwg.mxu0
  %v2235 = vadd.f32 %v1910, %v2112
  %v2236 = vadd.f32 %v1911, %v2117
  %v2237 = vadd.f32 %v1912, %v2122
  %v2238 = vadd.f32 %v1913, %v2127
  %v2239 = vadd.f32 %v1914, %v2132
  %v2240 = vadd.f32 %v1915, %v2137
  %v2241 = vadd.f32 %v1916, %v2142
  %v2242 = vadd.f32 %v1917, %v2147
  %v2243 = vadd.f32 %v1918, %v2152
  %v2244 = vadd.f32 %v1919, %v2157
  %v2245 = vadd.f32 %v1920, %v2162
  %v2246 = vadd.f32 %v1921, %v2167
  %v2247 = vadd.f32 %v1922, %v2172
  %v2248 = vadd.f32 %v1923, %v2177
  %v2249 = vadd.f32 %v1924, %v2182
  %v2250 = vadd.f32 %v1925, %v2187
  %v2251 = vadd.f32 %v1926, %v2192
  %v2252 = vadd.f32 %v1927, %v2197
  %v2253 = vadd.f32 %v1928, %v2202
  %v2254 = vadd.f32 %v1929, %v2207
  %v2255 = vadd.f32 %v1930, %v2212
  %v2256 = vadd.f32 %v1931, %v2217
  %v2257 = vadd.f32 %v1932, %v2222
  %v2258 = vadd.f32 %v1933, %v2227
  %v2259 = vadd.f32 %v1934, %v2232
  %s2260 = scalar_lea.vmem %s0, 120
  %v2261 = vld [vmem:[%s2260] sm:$0xff]
  %v2262 = vld [vmem:[%s2260 + $0x8] sm:$0xff]
  %v2263 = vld [vmem:[%s2260 + $0x10] sm:$0xff]
  %v2264 = vld [vmem:[%s2260 + $0x18] sm:$0xff]
  %v2265 = vld [vmem:[%s2260 + $0x20] sm:$0xff]
  %v2266 = vld [vmem:[%s2260 + $0x38] sm:$0xff]
  %v2267 = vld [vmem:[%s2260 + $0x40] sm:$0xff]
  %v2268 = vld [vmem:[%s2260 + $0x48] sm:$0xff]
  %v2269 = vld [vmem:[%s2260 + $0x50] sm:$0xff]
  %v2270 = vld [vmem:[%s2260 + $0x58] sm:$0xff]
  %v2271 = vld [vmem:[%s2260 + $0x70] sm:$0xff]
  %v2272 = vld [vmem:[%s2260 + $0x78] sm:$0xff]
  %v2273 = vld [vmem:[%s2260 + $0x80] sm:$0xff]
  %v2274 = vld [vmem:[%s2260 + $0x88] sm:$0xff]
  %v2275 = vld [vmem:[%s2260 + $0x90] sm:$0xff]
  %v2276 = vld [vmem:[%s2260 + $0xa8] sm:$0xff]
  %v2277 = vld [vmem:[%s2260 + $0xb0] sm:$0xff]
  %v2278 = vld [vmem:[%s2260 + $0xb8] sm:$0xff]
  %v2279 = vld [vmem:[%s2260 + $0xc0] sm:$0xff]
  %v2280 = vld [vmem:[%s2260 + $0xc8] sm:$0xff]
  %v2281 = vld [vmem:[%s2260 + $0xe0] sm:$0xff]
  %v2282 = vld [vmem:[%s2260 + $0xe8] sm:$0xff]
  %v2283 = vld [vmem:[%s2260 + $0xf0] sm:$0xff]
  %v2284 = vld [vmem:[%s2260 + $0xf8] sm:$0xff]
  %v2285 = vld [vmem:[%s2260 + $0x100] sm:$0xff]
  %s2286 = scalar_lea.vmem %s1, 448
  %v2287 = vld [vmem:[%s2286] sm:$0xff]
  %v2288 = vld [vmem:[%s2286 + $0x8] sm:$0xff]
  %v2289 = vld [vmem:[%s2286 + $0x10] sm:$0xff]
  %v2290 = vld [vmem:[%s2286 + $0x18] sm:$0xff]
  %v2291 = vld [vmem:[%s2286 + $0x20] sm:$0xff]
  %v2292 = vld [vmem:[%s2286 + $0x28] sm:$0xff]
  %v2293 = vld [vmem:[%s2286 + $0x30] sm:$0xff]
  %v2294 = vld [vmem:[%s2286 + $0x38] sm:$0xff]
  %v2296 = vsel %vm104, %v2261, 0
  %v2299 = vsel %vm104, %v2262, 0
  %v2302 = vsel %vm104, %v2263, 0
  %v2305 = vsel %vm104, %v2264, 0
  %v2308 = vsel %vm104, %v2265, 0
  %v2311 = vsel %vm104, %v2266, 0
  %v2314 = vsel %vm104, %v2267, 0
  %v2317 = vsel %vm104, %v2268, 0
  %v2320 = vsel %vm104, %v2269, 0
  %v2323 = vsel %vm104, %v2270, 0
  %v2326 = vsel %vm104, %v2271, 0
  %v2329 = vsel %vm104, %v2272, 0
  %v2332 = vsel %vm104, %v2273, 0
  %v2335 = vsel %vm104, %v2274, 0
  %v2338 = vsel %vm104, %v2275, 0
  %v2341 = vsel %vm104, %v2276, 0
  %v2344 = vsel %vm104, %v2277, 0
  %v2347 = vsel %vm104, %v2278, 0
  %v2350 = vsel %vm104, %v2279, 0
  %v2353 = vsel %vm104, %v2280, 0
  %v2356 = vsel %vm104, %v2281, 0
  %v2359 = vsel %vm104, %v2282, 0
  %v2362 = vsel %vm104, %v2283, 0
  %v2365 = vsel %vm104, %v2284, 0
  %v2368 = vsel %vm104, %v2285, 0
  %2370 = vmatprep.subr.mxu0 0.0
  %2371 = vmatpush1.msra.mxu0 0.0
  %2372 = vmatprep.subr.mxu0 0.0
  %2373 = vmatpush1.msra.mxu0 0.0
  %2374 = vmatprep.subr.mxu0 0.0
  %2375 = vmatpush1.msra.mxu0 0.0
  %2376 = vmatprep.subr.mxu0 0.0
  %2377 = vmatpush1.msra.mxu0 0.0
  %2378 = vmatprep.subr.mxu0 0.0
  %2379 = vmatpush1.msra.mxu0 0.0
  %2380 = vmatprep.subr.mxu0 0.0
  %2381 = vmatpush1.msra.mxu0 0.0
  %2382 = vmatprep.subr.mxu0 0.0
  %2383 = vmatpush1.msra.mxu0 0.0
  %2384 = vmatprep.subr.mxu0 0.0
  %2385 = vmatpush1.msra.mxu0 0.0
  %2386 = vmatprep.subr.mxu0 0.0
  %2387 = vmatpush1.msra.mxu0 %v2294
  %2388 = vmatprep.subr.mxu0 0.0
  %2389 = vmatpush1.msra.mxu0 %v2293
  %2390 = vmatprep.subr.mxu0 0.0
  %2391 = vmatpush1.msra.mxu0 %v2292
  %2392 = vmatprep.subr.mxu0 0.0
  %2393 = vmatpush1.msra.mxu0 %v2291
  %2394 = vmatprep.subr.mxu0 0.0
  %2395 = vmatpush1.msra.mxu0 %v2290
  %2396 = vmatprep.subr.mxu0 0.0
  %2397 = vmatpush1.msra.mxu0 %v2289
  %2398 = vmatprep.subr.mxu0 0.0
  %2399 = vmatpush1.msra.mxu0 %v2288
  %2400 = vmatprep.subr.mxu0 0.0
  %2401 = vmatpush1.msra.mxu0 %v2287
  %2402 = vmatprep.subr.mxu0 0.0
  %2403 = vmatpush2.msra.mxu0 0.0
  %2404 = vmatprep.subr.mxu0 0.0
  %2405 = vmatpush2.msra.mxu0 0.0
  %2406 = vmatprep.subr.mxu0 0.0
  %2407 = vmatpush2.msra.mxu0 0.0
  %2408 = vmatprep.subr.mxu0 0.0
  %2409 = vmatpush2.msra.mxu0 0.0
  %2410 = vmatprep.subr.mxu0 0.0
  %2411 = vmatpush2.msra.mxu0 0.0
  %2412 = vmatprep.subr.mxu0 0.0
  %2413 = vmatpush2.msra.mxu0 0.0
  %2414 = vmatprep.subr.mxu0 0.0
  %2415 = vmatpush2.msra.mxu0 0.0
  %2416 = vmatprep.subr.mxu0 0.0
  %2417 = vmatpush2.msra.mxu0 0.0
  %2418 = vmatprep.subr.mxu0 0.0
  %2419 = vmatpush2.msra.mxu0 0.0
  %2420 = vmatprep.subr.mxu0 0.0
  %2421 = vmatpush2.msra.mxu0 0.0
  %2422 = vmatprep.subr.mxu0 0.0
  %2423 = vmatpush2.msra.mxu0 0.0
  %2424 = vmatprep.subr.mxu0 0.0
  %2425 = vmatpush2.msra.mxu0 0.0
  %2426 = vmatprep.subr.mxu0 0.0
  %2427 = vmatpush2.msra.mxu0 0.0
  %2428 = vmatprep.subr.mxu0 0.0
  %2429 = vmatpush2.msra.mxu0 0.0
  %2430 = vmatprep.subr.mxu0 0.0
  %2431 = vmatpush2.msra.mxu0 0.0
  %2432 = vmatprep.subr.mxu0 0.0
  %2433 = vmatpush2.msra.mxu0 0.0
  %2434 = vmatprep.mubr.f32.mxu0 0.0
  %2435 = vmatmul.mubr.f32.gmra.mxu0 %v2296
  %v2436 = vpop.f32.mrf.mxu0
  %v2437 = vadd.f32 0.0, %v2436
  %v2438 = vpop.f32.mrf.mxu0
  %2439 = vmatprep.mubr.f32.mxu0 0.0
  %2440 = vmatmul.mubr.f32.gmra.mxu0 %v2299
  %v2441 = vpop.f32.mrf.mxu0
  %v2442 = vadd.f32 0.0, %v2441
  %v2443 = vpop.f32.mrf.mxu0
  %2444 = vmatprep.mubr.f32.mxu0 0.0
  %2445 = vmatmul.mubr.f32.gmra.mxu0 %v2302
  %v2446 = vpop.f32.mrf.mxu0
  %v2447 = vadd.f32 0.0, %v2446
  %v2448 = vpop.f32.mrf.mxu0
  %2449 = vmatprep.mubr.f32.mxu0 0.0
  %2450 = vmatmul.mubr.f32.gmra.mxu0 %v2305
  %v2451 = vpop.f32.mrf.mxu0
  %v2452 = vadd.f32 0.0, %v2451
  %v2453 = vpop.f32.mrf.mxu0
  %2454 = vmatprep.mubr.f32.mxu0 0.0
  %2455 = vmatmul.mubr.f32.gmra.mxu0 %v2308
  %v2456 = vpop.f32.mrf.mxu0
  %v2457 = vadd.f32 0.0, %v2456
  %v2458 = vpop.f32.mrf.mxu0
  %2459 = vmatprep.mubr.f32.mxu0 0.0
  %2460 = vmatmul.mubr.f32.gmra.mxu0 %v2311
  %v2461 = vpop.f32.mrf.mxu0
  %v2462 = vadd.f32 0.0, %v2461
  %v2463 = vpop.f32.mrf.mxu0
  %2464 = vmatprep.mubr.f32.mxu0 0.0
  %2465 = vmatmul.mubr.f32.gmra.mxu0 %v2314
  %v2466 = vpop.f32.mrf.mxu0
  %v2467 = vadd.f32 0.0, %v2466
  %v2468 = vpop.f32.mrf.mxu0
  %2469 = vmatprep.mubr.f32.mxu0 0.0
  %2470 = vmatmul.mubr.f32.gmra.mxu0 %v2317
  %v2471 = vpop.f32.mrf.mxu0
  %v2472 = vadd.f32 0.0, %v2471
  %v2473 = vpop.f32.mrf.mxu0
  %2474 = vmatprep.mubr.f32.mxu0 0.0
  %2475 = vmatmul.mubr.f32.gmra.mxu0 %v2320
  %v2476 = vpop.f32.mrf.mxu0
  %v2477 = vadd.f32 0.0, %v2476
  %v2478 = vpop.f32.mrf.mxu0
  %2479 = vmatprep.mubr.f32.mxu0 0.0
  %2480 = vmatmul.mubr.f32.gmra.mxu0 %v2323
  %v2481 = vpop.f32.mrf.mxu0
  %v2482 = vadd.f32 0.0, %v2481
  %v2483 = vpop.f32.mrf.mxu0
  %2484 = vmatprep.mubr.f32.mxu0 0.0
  %2485 = vmatmul.mubr.f32.gmra.mxu0 %v2326
  %v2486 = vpop.f32.mrf.mxu0
  %v2487 = vadd.f32 0.0, %v2486
  %v2488 = vpop.f32.mrf.mxu0
  %2489 = vmatprep.mubr.f32.mxu0 0.0
  %2490 = vmatmul.mubr.f32.gmra.mxu0 %v2329
  %v2491 = vpop.f32.mrf.mxu0
  %v2492 = vadd.f32 0.0, %v2491
  %v2493 = vpop.f32.mrf.mxu0
  %2494 = vmatprep.mubr.f32.mxu0 0.0
  %2495 = vmatmul.mubr.f32.gmra.mxu0 %v2332
  %v2496 = vpop.f32.mrf.mxu0
  %v2497 = vadd.f32 0.0, %v2496
  %v2498 = vpop.f32.mrf.mxu0
  %2499 = vmatprep.mubr.f32.mxu0 0.0
  %2500 = vmatmul.mubr.f32.gmra.mxu0 %v2335
  %v2501 = vpop.f32.mrf.mxu0
  %v2502 = vadd.f32 0.0, %v2501
  %v2503 = vpop.f32.mrf.mxu0
  %2504 = vmatprep.mubr.f32.mxu0 0.0
  %2505 = vmatmul.mubr.f32.gmra.mxu0 %v2338
  %v2506 = vpop.f32.mrf.mxu0
  %v2507 = vadd.f32 0.0, %v2506
  %v2508 = vpop.f32.mrf.mxu0
  %2509 = vmatprep.mubr.f32.mxu0 0.0
  %2510 = vmatmul.mubr.f32.gmra.mxu0 %v2341
  %v2511 = vpop.f32.mrf.mxu0
  %v2512 = vadd.f32 0.0, %v2511
  %v2513 = vpop.f32.mrf.mxu0
  %2514 = vmatprep.mubr.f32.mxu0 0.0
  %2515 = vmatmul.mubr.f32.gmra.mxu0 %v2344
  %v2516 = vpop.f32.mrf.mxu0
  %v2517 = vadd.f32 0.0, %v2516
  %v2518 = vpop.f32.mrf.mxu0
  %2519 = vmatprep.mubr.f32.mxu0 0.0
  %2520 = vmatmul.mubr.f32.gmra.mxu0 %v2347
  %v2521 = vpop.f32.mrf.mxu0
  %v2522 = vadd.f32 0.0, %v2521
  %v2523 = vpop.f32.mrf.mxu0
  %2524 = vmatprep.mubr.f32.mxu0 0.0
  %2525 = vmatmul.mubr.f32.gmra.mxu0 %v2350
  %v2526 = vpop.f32.mrf.mxu0
  %v2527 = vadd.f32 0.0, %v2526
  %v2528 = vpop.f32.mrf.mxu0
  %2529 = vmatprep.mubr.f32.mxu0 0.0
  %2530 = vmatmul.mubr.f32.gmra.mxu0 %v2353
  %v2531 = vpop.f32.mrf.mxu0
  %v2532 = vadd.f32 0.0, %v2531
  %v2533 = vpop.f32.mrf.mxu0
  %2534 = vmatprep.mubr.f32.mxu0 0.0
  %2535 = vmatmul.mubr.f32.gmra.mxu0 %v2356
  %v2536 = vpop.f32.mrf.mxu0
  %v2537 = vadd.f32 0.0, %v2536
  %v2538 = vpop.f32.mrf.mxu0
  %2539 = vmatprep.mubr.f32.mxu0 0.0
  %2540 = vmatmul.mubr.f32.gmra.mxu0 %v2359
  %v2541 = vpop.f32.mrf.mxu0
  %v2542 = vadd.f32 0.0, %v2541
  %v2543 = vpop.f32.mrf.mxu0
  %2544 = vmatprep.mubr.f32.mxu0 0.0
  %2545 = vmatmul.mubr.f32.gmra.mxu0 %v2362
  %v2546 = vpop.f32.mrf.mxu0
  %v2547 = vadd.f32 0.0, %v2546
  %v2548 = vpop.f32.mrf.mxu0
  %2549 = vmatprep.mubr.f32.mxu0 0.0
  %2550 = vmatmul.mubr.f32.gmra.mxu0 %v2365
  %v2551 = vpop.f32.mrf.mxu0
  %v2552 = vadd.f32 0.0, %v2551
  %v2553 = vpop.f32.mrf.mxu0
  %2554 = vmatprep.mubr.f32.mxu0 0.0
  %2555 = vmatmul.mubr.f32.gmra.mxu0 %v2368
  %v2556 = vpop.f32.mrf.mxu0
  %v2557 = vadd.f32 0.0, %v2556
  %v2558 = vpop.f32.mrf.mxu0
  %2559 = vdwg.mxu0
  %v2560 = vadd.f32 %v2235, %v2437
  %v2561 = vadd.f32 %v2236, %v2442
  %v2562 = vadd.f32 %v2237, %v2447
  %v2563 = vadd.f32 %v2238, %v2452
  %v2564 = vadd.f32 %v2239, %v2457
  %v2565 = vadd.f32 %v2240, %v2462
  %v2566 = vadd.f32 %v2241, %v2467
  %v2567 = vadd.f32 %v2242, %v2472
  %v2568 = vadd.f32 %v2243, %v2477
  %v2569 = vadd.f32 %v2244, %v2482
  %v2570 = vadd.f32 %v2245, %v2487
  %v2571 = vadd.f32 %v2246, %v2492
  %v2572 = vadd.f32 %v2247, %v2497
  %v2573 = vadd.f32 %v2248, %v2502
  %v2574 = vadd.f32 %v2249, %v2507
  %v2575 = vadd.f32 %v2250, %v2512
  %v2576 = vadd.f32 %v2251, %v2517
  %v2577 = vadd.f32 %v2252, %v2522
  %v2578 = vadd.f32 %v2253, %v2527
  %v2579 = vadd.f32 %v2254, %v2532
  %v2580 = vadd.f32 %v2255, %v2537
  %v2581 = vadd.f32 %v2256, %v2542
  %v2582 = vadd.f32 %v2257, %v2547
  %v2583 = vadd.f32 %v2258, %v2552
  %v2584 = vadd.f32 %v2259, %v2557
  %s2585 = scalar_lea.vmem %s0, 128
  %v2586 = vld [vmem:[%s2585] sm:$0xff]
  %v2587 = vld [vmem:[%s2585 + $0x8] sm:$0xff]
  %v2588 = vld [vmem:[%s2585 + $0x10] sm:$0xff]
  %v2589 = vld [vmem:[%s2585 + $0x18] sm:$0xff]
  %v2590 = vld [vmem:[%s2585 + $0x20] sm:$0xff]
  %v2591 = vld [vmem:[%s2585 + $0x38] sm:$0xff]
  %v2592 = vld [vmem:[%s2585 + $0x40] sm:$0xff]
  %v2593 = vld [vmem:[%s2585 + $0x48] sm:$0xff]
  %v2594 = vld [vmem:[%s2585 + $0x50] sm:$0xff]
  %v2595 = vld [vmem:[%s2585 + $0x58] sm:$0xff]
  %v2596 = vld [vmem:[%s2585 + $0x70] sm:$0xff]
  %v2597 = vld [vmem:[%s2585 + $0x78] sm:$0xff]
  %v2598 = vld [vmem:[%s2585 + $0x80] sm:$0xff]
  %v2599 = vld [vmem:[%s2585 + $0x88] sm:$0xff]
  %v2600 = vld [vmem:[%s2585 + $0x90] sm:$0xff]
  %v2601 = vld [vmem:[%s2585 + $0xa8] sm:$0xff]
  %v2602 = vld [vmem:[%s2585 + $0xb0] sm:$0xff]
  %v2603 = vld [vmem:[%s2585 + $0xb8] sm:$0xff]
  %v2604 = vld [vmem:[%s2585 + $0xc0] sm:$0xff]
  %v2605 = vld [vmem:[%s2585 + $0xc8] sm:$0xff]
  %v2606 = vld [vmem:[%s2585 + $0xe0] sm:$0xff]
  %v2607 = vld [vmem:[%s2585 + $0xe8] sm:$0xff]
  %v2608 = vld [vmem:[%s2585 + $0xf0] sm:$0xff]
  %v2609 = vld [vmem:[%s2585 + $0xf8] sm:$0xff]
  %v2610 = vld [vmem:[%s2585 + $0x100] sm:$0xff]
  %s2611 = scalar_lea.vmem %s1, 512
  %v2612 = vld [vmem:[%s2611] sm:$0xff]
  %v2613 = vld [vmem:[%s2611 + $0x8] sm:$0xff]
  %v2614 = vld [vmem:[%s2611 + $0x10] sm:$0xff]
  %v2615 = vld [vmem:[%s2611 + $0x18] sm:$0xff]
  %v2616 = vld [vmem:[%s2611 + $0x20] sm:$0xff]
  %v2617 = vld [vmem:[%s2611 + $0x28] sm:$0xff]
  %v2618 = vld [vmem:[%s2611 + $0x30] sm:$0xff]
  %v2619 = vld [vmem:[%s2611 + $0x38] sm:$0xff]
  %v2621 = vsel %vm104, %v2586, 0
  %v2624 = vsel %vm104, %v2587, 0
  %v2627 = vsel %vm104, %v2588, 0
  %v2630 = vsel %vm104, %v2589, 0
  %v2633 = vsel %vm104, %v2590, 0
  %v2636 = vsel %vm104, %v2591, 0
  %v2639 = vsel %vm104, %v2592, 0
  %v2642 = vsel %vm104, %v2593, 0
  %v2645 = vsel %vm104, %v2594, 0
  %v2648 = vsel %vm104, %v2595, 0
  %v2651 = vsel %vm104, %v2596, 0
  %v2654 = vsel %vm104, %v2597, 0
  %v2657 = vsel %vm104, %v2598, 0
  %v2660 = vsel %vm104, %v2599, 0
  %v2663 = vsel %vm104, %v2600, 0
  %v2666 = vsel %vm104, %v2601, 0
  %v2669 = vsel %vm104, %v2602, 0
  %v2672 = vsel %vm104, %v2603, 0
  %v2675 = vsel %vm104, %v2604, 0
  %v2678 = vsel %vm104, %v2605, 0
  %v2681 = vsel %vm104, %v2606, 0
  %v2684 = vsel %vm104, %v2607, 0
  %v2687 = vsel %vm104, %v2608, 0
  %v2690 = vsel %vm104, %v2609, 0
  %v2693 = vsel %vm104, %v2610, 0
  %2695 = vmatprep.subr.mxu0 0.0
  %2696 = vmatpush1.msra.mxu0 0.0
  %2697 = vmatprep.subr.mxu0 0.0
  %2698 = vmatpush1.msra.mxu0 0.0
  %2699 = vmatprep.subr.mxu0 0.0
  %2700 = vmatpush1.msra.mxu0 0.0
  %2701 = vmatprep.subr.mxu0 0.0
  %2702 = vmatpush1.msra.mxu0 0.0
  %2703 = vmatprep.subr.mxu0 0.0
  %2704 = vmatpush1.msra.mxu0 0.0
  %2705 = vmatprep.subr.mxu0 0.0
  %2706 = vmatpush1.msra.mxu0 0.0
  %2707 = vmatprep.subr.mxu0 0.0
  %2708 = vmatpush1.msra.mxu0 0.0
  %2709 = vmatprep.subr.mxu0 0.0
  %2710 = vmatpush1.msra.mxu0 0.0
  %2711 = vmatprep.subr.mxu0 0.0
  %2712 = vmatpush1.msra.mxu0 %v2619
  %2713 = vmatprep.subr.mxu0 0.0
  %2714 = vmatpush1.msra.mxu0 %v2618
  %2715 = vmatprep.subr.mxu0 0.0
  %2716 = vmatpush1.msra.mxu0 %v2617
  %2717 = vmatprep.subr.mxu0 0.0
  %2718 = vmatpush1.msra.mxu0 %v2616
  %2719 = vmatprep.subr.mxu0 0.0
  %2720 = vmatpush1.msra.mxu0 %v2615
  %2721 = vmatprep.subr.mxu0 0.0
  %2722 = vmatpush1.msra.mxu0 %v2614
  %2723 = vmatprep.subr.mxu0 0.0
  %2724 = vmatpush1.msra.mxu0 %v2613
  %2725 = vmatprep.subr.mxu0 0.0
  %2726 = vmatpush1.msra.mxu0 %v2612
  %2727 = vmatprep.subr.mxu0 0.0
  %2728 = vmatpush2.msra.mxu0 0.0
  %2729 = vmatprep.subr.mxu0 0.0
  %2730 = vmatpush2.msra.mxu0 0.0
  %2731 = vmatprep.subr.mxu0 0.0
  %2732 = vmatpush2.msra.mxu0 0.0
  %2733 = vmatprep.subr.mxu0 0.0
  %2734 = vmatpush2.msra.mxu0 0.0
  %2735 = vmatprep.subr.mxu0 0.0
  %2736 = vmatpush2.msra.mxu0 0.0
  %2737 = vmatprep.subr.mxu0 0.0
  %2738 = vmatpush2.msra.mxu0 0.0
  %2739 = vmatprep.subr.mxu0 0.0
  %2740 = vmatpush2.msra.mxu0 0.0
  %2741 = vmatprep.subr.mxu0 0.0
  %2742 = vmatpush2.msra.mxu0 0.0
  %2743 = vmatprep.subr.mxu0 0.0
  %2744 = vmatpush2.msra.mxu0 0.0
  %2745 = vmatprep.subr.mxu0 0.0
  %2746 = vmatpush2.msra.mxu0 0.0
  %2747 = vmatprep.subr.mxu0 0.0
  %2748 = vmatpush2.msra.mxu0 0.0
  %2749 = vmatprep.subr.mxu0 0.0
  %2750 = vmatpush2.msra.mxu0 0.0
  %2751 = vmatprep.subr.mxu0 0.0
  %2752 = vmatpush2.msra.mxu0 0.0
  %2753 = vmatprep.subr.mxu0 0.0
  %2754 = vmatpush2.msra.mxu0 0.0
  %2755 = vmatprep.subr.mxu0 0.0
  %2756 = vmatpush2.msra.mxu0 0.0
  %2757 = vmatprep.subr.mxu0 0.0
  %2758 = vmatpush2.msra.mxu0 0.0
  %2759 = vmatprep.mubr.f32.mxu0 0.0
  %2760 = vmatmul.mubr.f32.gmra.mxu0 %v2621
  %v2761 = vpop.f32.mrf.mxu0
  %v2762 = vadd.f32 0.0, %v2761
  %v2763 = vpop.f32.mrf.mxu0
  %2764 = vmatprep.mubr.f32.mxu0 0.0
  %2765 = vmatmul.mubr.f32.gmra.mxu0 %v2624
  %v2766 = vpop.f32.mrf.mxu0
  %v2767 = vadd.f32 0.0, %v2766
  %v2768 = vpop.f32.mrf.mxu0
  %2769 = vmatprep.mubr.f32.mxu0 0.0
  %2770 = vmatmul.mubr.f32.gmra.mxu0 %v2627
  %v2771 = vpop.f32.mrf.mxu0
  %v2772 = vadd.f32 0.0, %v2771
  %v2773 = vpop.f32.mrf.mxu0
  %2774 = vmatprep.mubr.f32.mxu0 0.0
  %2775 = vmatmul.mubr.f32.gmra.mxu0 %v2630
  %v2776 = vpop.f32.mrf.mxu0
  %v2777 = vadd.f32 0.0, %v2776
  %v2778 = vpop.f32.mrf.mxu0
  %2779 = vmatprep.mubr.f32.mxu0 0.0
  %2780 = vmatmul.mubr.f32.gmra.mxu0 %v2633
  %v2781 = vpop.f32.mrf.mxu0
  %v2782 = vadd.f32 0.0, %v2781
  %v2783 = vpop.f32.mrf.mxu0
  %2784 = vmatprep.mubr.f32.mxu0 0.0
  %2785 = vmatmul.mubr.f32.gmra.mxu0 %v2636
  %v2786 = vpop.f32.mrf.mxu0
  %v2787 = vadd.f32 0.0, %v2786
  %v2788 = vpop.f32.mrf.mxu0
  %2789 = vmatprep.mubr.f32.mxu0 0.0
  %2790 = vmatmul.mubr.f32.gmra.mxu0 %v2639
  %v2791 = vpop.f32.mrf.mxu0
  %v2792 = vadd.f32 0.0, %v2791
  %v2793 = vpop.f32.mrf.mxu0
  %2794 = vmatprep.mubr.f32.mxu0 0.0
  %2795 = vmatmul.mubr.f32.gmra.mxu0 %v2642
  %v2796 = vpop.f32.mrf.mxu0
  %v2797 = vadd.f32 0.0, %v2796
  %v2798 = vpop.f32.mrf.mxu0
  %2799 = vmatprep.mubr.f32.mxu0 0.0
  %2800 = vmatmul.mubr.f32.gmra.mxu0 %v2645
  %v2801 = vpop.f32.mrf.mxu0
  %v2802 = vadd.f32 0.0, %v2801
  %v2803 = vpop.f32.mrf.mxu0
  %2804 = vmatprep.mubr.f32.mxu0 0.0
  %2805 = vmatmul.mubr.f32.gmra.mxu0 %v2648
  %v2806 = vpop.f32.mrf.mxu0
  %v2807 = vadd.f32 0.0, %v2806
  %v2808 = vpop.f32.mrf.mxu0
  %2809 = vmatprep.mubr.f32.mxu0 0.0
  %2810 = vmatmul.mubr.f32.gmra.mxu0 %v2651
  %v2811 = vpop.f32.mrf.mxu0
  %v2812 = vadd.f32 0.0, %v2811
  %v2813 = vpop.f32.mrf.mxu0
  %2814 = vmatprep.mubr.f32.mxu0 0.0
  %2815 = vmatmul.mubr.f32.gmra.mxu0 %v2654
  %v2816 = vpop.f32.mrf.mxu0
  %v2817 = vadd.f32 0.0, %v2816
  %v2818 = vpop.f32.mrf.mxu0
  %2819 = vmatprep.mubr.f32.mxu0 0.0
  %2820 = vmatmul.mubr.f32.gmra.mxu0 %v2657
  %v2821 = vpop.f32.mrf.mxu0
  %v2822 = vadd.f32 0.0, %v2821
  %v2823 = vpop.f32.mrf.mxu0
  %2824 = vmatprep.mubr.f32.mxu0 0.0
  %2825 = vmatmul.mubr.f32.gmra.mxu0 %v2660
  %v2826 = vpop.f32.mrf.mxu0
  %v2827 = vadd.f32 0.0, %v2826
  %v2828 = vpop.f32.mrf.mxu0
  %2829 = vmatprep.mubr.f32.mxu0 0.0
  %2830 = vmatmul.mubr.f32.gmra.mxu0 %v2663
  %v2831 = vpop.f32.mrf.mxu0
  %v2832 = vadd.f32 0.0, %v2831
  %v2833 = vpop.f32.mrf.mxu0
  %2834 = vmatprep.mubr.f32.mxu0 0.0
  %2835 = vmatmul.mubr.f32.gmra.mxu0 %v2666
  %v2836 = vpop.f32.mrf.mxu0
  %v2837 = vadd.f32 0.0, %v2836
  %v2838 = vpop.f32.mrf.mxu0
  %2839 = vmatprep.mubr.f32.mxu0 0.0
  %2840 = vmatmul.mubr.f32.gmra.mxu0 %v2669
  %v2841 = vpop.f32.mrf.mxu0
  %v2842 = vadd.f32 0.0, %v2841
  %v2843 = vpop.f32.mrf.mxu0
  %2844 = vmatprep.mubr.f32.mxu0 0.0
  %2845 = vmatmul.mubr.f32.gmra.mxu0 %v2672
  %v2846 = vpop.f32.mrf.mxu0
  %v2847 = vadd.f32 0.0, %v2846
  %v2848 = vpop.f32.mrf.mxu0
  %2849 = vmatprep.mubr.f32.mxu0 0.0
  %2850 = vmatmul.mubr.f32.gmra.mxu0 %v2675
  %v2851 = vpop.f32.mrf.mxu0
  %v2852 = vadd.f32 0.0, %v2851
  %v2853 = vpop.f32.mrf.mxu0
  %2854 = vmatprep.mubr.f32.mxu0 0.0
  %2855 = vmatmul.mubr.f32.gmra.mxu0 %v2678
  %v2856 = vpop.f32.mrf.mxu0
  %v2857 = vadd.f32 0.0, %v2856
  %v2858 = vpop.f32.mrf.mxu0
  %2859 = vmatprep.mubr.f32.mxu0 0.0
  %2860 = vmatmul.mubr.f32.gmra.mxu0 %v2681
  %v2861 = vpop.f32.mrf.mxu0
  %v2862 = vadd.f32 0.0, %v2861
  %v2863 = vpop.f32.mrf.mxu0
  %2864 = vmatprep.mubr.f32.mxu0 0.0
  %2865 = vmatmul.mubr.f32.gmra.mxu0 %v2684
  %v2866 = vpop.f32.mrf.mxu0
  %v2867 = vadd.f32 0.0, %v2866
  %v2868 = vpop.f32.mrf.mxu0
  %2869 = vmatprep.mubr.f32.mxu0 0.0
  %2870 = vmatmul.mubr.f32.gmra.mxu0 %v2687
  %v2871 = vpop.f32.mrf.mxu0
  %v2872 = vadd.f32 0.0, %v2871
  %v2873 = vpop.f32.mrf.mxu0
  %2874 = vmatprep.mubr.f32.mxu0 0.0
  %2875 = vmatmul.mubr.f32.gmra.mxu0 %v2690
  %v2876 = vpop.f32.mrf.mxu0
  %v2877 = vadd.f32 0.0, %v2876
  %v2878 = vpop.f32.mrf.mxu0
  %2879 = vmatprep.mubr.f32.mxu0 0.0
  %2880 = vmatmul.mubr.f32.gmra.mxu0 %v2693
  %v2881 = vpop.f32.mrf.mxu0
  %v2882 = vadd.f32 0.0, %v2881
  %v2883 = vpop.f32.mrf.mxu0
  %2884 = vdwg.mxu0
  %v2885 = vadd.f32 %v2560, %v2762
  %v2886 = vadd.f32 %v2561, %v2767
  %v2887 = vadd.f32 %v2562, %v2772
  %v2888 = vadd.f32 %v2563, %v2777
  %v2889 = vadd.f32 %v2564, %v2782
  %v2890 = vadd.f32 %v2565, %v2787
  %v2891 = vadd.f32 %v2566, %v2792
  %v2892 = vadd.f32 %v2567, %v2797
  %v2893 = vadd.f32 %v2568, %v2802
  %v2894 = vadd.f32 %v2569, %v2807
  %v2895 = vadd.f32 %v2570, %v2812
  %v2896 = vadd.f32 %v2571, %v2817
  %v2897 = vadd.f32 %v2572, %v2822
  %v2898 = vadd.f32 %v2573, %v2827
  %v2899 = vadd.f32 %v2574, %v2832
  %v2900 = vadd.f32 %v2575, %v2837
  %v2901 = vadd.f32 %v2576, %v2842
  %v2902 = vadd.f32 %v2577, %v2847
  %v2903 = vadd.f32 %v2578, %v2852
  %v2904 = vadd.f32 %v2579, %v2857
  %v2905 = vadd.f32 %v2580, %v2862
  %v2906 = vadd.f32 %v2581, %v2867
  %v2907 = vadd.f32 %v2582, %v2872
  %v2908 = vadd.f32 %v2583, %v2877
  %v2909 = vadd.f32 %v2584, %v2882
  %v2910 = vld [vmem:[%s2] sm:$0x1]
  %v2912 = vlaneseq
  %v2913 = vshrl.u32 %v2912, 7
  %v2914 = vsub.s32 0, %v2913
  %v2915 = vrot.slane %v2910, %v2914
  %v2917 = vadd.f32 %v2885, %v2915
  %v2918 = vadd.f32 %v2886, %v2915
  %v2919 = vadd.f32 %v2887, %v2915
  %v2920 = vadd.f32 %v2888, %v2915
  %v2921 = vadd.f32 %v2889, %v2915
  %v2922 = vadd.f32 %v2890, %v2915
  %v2923 = vadd.f32 %v2891, %v2915
  %v2924 = vadd.f32 %v2892, %v2915
  %v2925 = vadd.f32 %v2893, %v2915
  %v2926 = vadd.f32 %v2894, %v2915
  %v2927 = vadd.f32 %v2895, %v2915
  %v2928 = vadd.f32 %v2896, %v2915
  %v2929 = vadd.f32 %v2897, %v2915
  %v2930 = vadd.f32 %v2898, %v2915
  %v2931 = vadd.f32 %v2899, %v2915
  %v2932 = vadd.f32 %v2900, %v2915
  %v2933 = vadd.f32 %v2901, %v2915
  %v2934 = vadd.f32 %v2902, %v2915
  %v2935 = vadd.f32 %v2903, %v2915
  %v2936 = vadd.f32 %v2904, %v2915
  %v2937 = vadd.f32 %v2905, %v2915
  %v2938 = vadd.f32 %v2906, %v2915
  %v2939 = vadd.f32 %v2907, %v2915
  %v2940 = vadd.f32 %v2908, %v2915
  %v2941 = vadd.f32 %v2909, %v2915
  %v2942 = vmax.f32 %v2917, 0.0
  %v2943 = vmax.f32 %v2918, 0.0
  %v2944 = vmax.f32 %v2919, 0.0
  %v2945 = vmax.f32 %v2920, 0.0
  %v2946 = vmax.f32 %v2921, 0.0
  %v2947 = vmax.f32 %v2922, 0.0
  %v2948 = vmax.f32 %v2923, 0.0
  %v2949 = vmax.f32 %v2924, 0.0
  %v2950 = vmax.f32 %v2925, 0.0
  %v2951 = vmax.f32 %v2926, 0.0
  %v2952 = vmax.f32 %v2927, 0.0
  %v2953 = vmax.f32 %v2928, 0.0
  %v2954 = vmax.f32 %v2929, 0.0
  %v2955 = vmax.f32 %v2930, 0.0
  %v2956 = vmax.f32 %v2931, 0.0
  %v2957 = vmax.f32 %v2932, 0.0
  %v2958 = vmax.f32 %v2933, 0.0
  %v2959 = vmax.f32 %v2934, 0.0
  %v2960 = vmax.f32 %v2935, 0.0
  %v2961 = vmax.f32 %v2936, 0.0
  %v2962 = vmax.f32 %v2937, 0.0
  %v2963 = vmax.f32 %v2938, 0.0
  %v2964 = vmax.f32 %v2939, 0.0
  %v2965 = vmax.f32 %v2940, 0.0
  %v2966 = vmax.f32 %v2941, 0.0
  %v2967 = vmax.f32 %v2947, %v2952
  %v2968 = vmax.f32 %v2948, %v2953
  %v2969 = vmax.f32 %v2949, %v2954
  %v2970 = vmax.f32 %v2950, %v2955
  %v2971 = vmax.f32 %v2951, %v2956
  %v2972 = vmax.f32 %v2957, %v2962
  %v2973 = vmax.f32 %v2958, %v2963
  %v2974 = vmax.f32 %v2959, %v2964
  %v2975 = vmax.f32 %v2960, %v2965
  %v2976 = vmax.f32 %v2961, %v2966
  %2977 = vst.msk [vmem:[#allocation2] sm:$0xff] %vm104, 0.0
  %2978 = vst.msk [vmem:[#allocation2 + $0x8] sm:$0xff] %vm104, 0.0
  %2979 = vst.msk [vmem:[#allocation2 + $0x10] sm:$0xff] %vm104, 0.0
  %2980 = vst.msk [vmem:[#allocation2 + $0x18] sm:$0xff] %vm104, 0.0
  %2981 = vst.msk [vmem:[#allocation2 + $0x20] sm:$0xff] %vm104, 0.0
  %s2982 = scalar_lea.vmem [#allocation2], 160
  %2983 = vst.msk [vmem:[%s2982] sm:$0xff] %vm104, 0.0
  %2984 = vst.msk [vmem:[%s2982 + $0x8] sm:$0xff] %vm104, 0.0
  %2985 = vst.msk [vmem:[%s2982 + $0x10] sm:$0xff] %vm104, 0.0
  %2986 = vst.msk [vmem:[%s2982 + $0x18] sm:$0xff] %vm104, 0.0
  %2987 = vst.msk [vmem:[%s2982 + $0x20] sm:$0xff] %vm104, 0.0
  %s2988 = scalar_lea.vmem [#allocation2], 40
  %2989 = vst.msk [vmem:[%s2988] sm:$0xff] %vm104, 0.0
  %2990 = vst.msk [vmem:[%s2988 + $0x28] sm:$0xff] %vm104, 0.0
  %2991 = vst.msk [vmem:[%s2988 + $0x50] sm:$0xff] %vm104, 0.0
  %s2992 = scalar_lea.vmem [#allocation2], 72
  %2993 = vst.msk [vmem:[%s2992] sm:$0xff] %vm104, 0.0
  %2994 = vst.msk [vmem:[%s2992 + $0x28] sm:$0xff] %vm104, 0.0
  %2995 = vst.msk [vmem:[%s2992 + $0x50] sm:$0xff] %vm104, 0.0
  %s2996 = scalar_lea.vmem [#allocation2], 48
  %2997 = vst.msk [vmem:[%s2996] sm:$0xff] %vm104, %v2942
  %v2998 = vmax.f32 %v2943, %v2944
  %s2999 = scalar_lea.vmem [#allocation2], 56
  %3000 = vst.msk [vmem:[%s2999] sm:$0xff] %vm104, %v2998
  %v3001 = vmax.f32 %v2945, %v2946
  %s3002 = scalar_lea.vmem [#allocation2], 64
  %3003 = vst.msk [vmem:[%s3002] sm:$0xff] %vm104, %v3001
  %s3004 = scalar_lea.vmem [#allocation2], 88
  %3005 = vst.msk [vmem:[%s3004] sm:$0xff] %vm104, %v2967
  %v3006 = vmax.f32 %v2968, %v2969
  %s3007 = scalar_lea.vmem [#allocation2], 96
  %3008 = vst.msk [vmem:[%s3007] sm:$0xff] %vm104, %v3006
  %v3009 = vmax.f32 %v2970, %v2971
  %s3010 = scalar_lea.vmem [#allocation2], 104
  %3011 = vst.msk [vmem:[%s3010] sm:$0xff] %vm104, %v3009
  %s3012 = scalar_lea.vmem [#allocation2], 128
  %3013 = vst.msk [vmem:[%s3012] sm:$0xff] %vm104, %v2972
  %v3014 = vmax.f32 %v2973, %v2974
  %s3015 = scalar_lea.vmem [#allocation2], 136
  %3016 = vst.msk [vmem:[%s3015] sm:$0xff] %vm104, %v3014
  %v3017 = vmax.f32 %v2975, %v2976
  %s3018 = scalar_lea.vmem [#allocation2], 144
  %3019 = vst.msk [vmem:[%s3018] sm:$0xff] %vm104, %v3017
  %v3020 = vld [vmem:[%s3] sm:$0xff]
  %v3021 = vld [vmem:[%s3 + $0x8] sm:$0x1]
  %v3022 = vld [vmem:[#allocation2] sm:$0xff]
  %v3023 = vld [vmem:[#allocation2 + $0x8] sm:$0xff]
  %v3024 = vld [vmem:[#allocation2 + $0x10] sm:$0xff]
  %v3025 = vld [vmem:[#allocation2 + $0x28] sm:$0xff]
  %v3026 = vld [vmem:[#allocation2 + $0x30] sm:$0xff]
  %v3027 = vld [vmem:[#allocation2 + $0x38] sm:$0xff]
  %v3028 = vld [vmem:[#allocation2 + $0x50] sm:$0xff]
  %v3029 = vld [vmem:[#allocation2 + $0x58] sm:$0xff]
  %v3030 = vld [vmem:[#allocation2 + $0x60] sm:$0xff]
  %v3031 = vlaneseq
  %v3032 = vshrl.u32 %v3031, 7
  %v3033 = vsub.s32 0, %v3032
  %v3034 = vrot.slane %v3020, %v3033
  %v3035 = vmul.f32 %v3022, %v3034
  %v3036 = vmul.f32 %v3023, %v3034
  %v3037 = vmul.f32 %v3024, %v3034
  %v3038 = vmul.f32 %v3025, %v3034
  %v3039 = vmul.f32 %v3026, %v3034
  %v3040 = vmul.f32 %v3027, %v3034
  %v3041 = vmul.f32 %v3028, %v3034
  %v3042 = vmul.f32 %v3029, %v3034
  %v3043 = vmul.f32 %v3030, %v3034
  %v3044 = vadd.f32 %v3035, 0.0
  %v3045 = vadd.f32 %v3036, 0.0
  %v3046 = vadd.f32 %v3037, 0.0
  %v3047 = vadd.f32 %v3038, 0.0
  %v3048 = vadd.f32 %v3039, 0.0
  %v3049 = vadd.f32 %v3040, 0.0
  %v3050 = vadd.f32 %v3041, 0.0
  %v3051 = vadd.f32 %v3042, 0.0
  %v3052 = vadd.f32 %v3043, 0.0
  %s3053 = scalar_lea.vmem [#allocation2], 8
  %v3054 = vld [vmem:[%s3053] sm:$0xff]
  %v3055 = vld [vmem:[%s3053 + $0x8] sm:$0xff]
  %v3056 = vld [vmem:[%s3053 + $0x10] sm:$0xff]
  %v3057 = vld [vmem:[%s3053 + $0x28] sm:$0xff]
  %v3058 = vld [vmem:[%s3053 + $0x30] sm:$0xff]
  %v3059 = vld [vmem:[%s3053 + $0x38] sm:$0xff]
  %v3060 = vld [vmem:[%s3053 + $0x50] sm:$0xff]
  %v3061 = vld [vmem:[%s3053 + $0x58] sm:$0xff]
  %v3062 = vld [vmem:[%s3053 + $0x60] sm:$0xff]
  %v3063 = vlaneseq
  %v3064 = vshrl.u32 %v3063, 7
  %v3065 = vsub.s32 1, %v3064
  %v3066 = vrot.slane %v3020, %v3065
  %v3067 = vmul.f32 %v3054, %v3066
  %v3068 = vmul.f32 %v3055, %v3066
  %v3069 = vmul.f32 %v3056, %v3066
  %v3070 = vmul.f32 %v3057, %v3066
  %v3071 = vmul.f32 %v3058, %v3066
  %v3072 = vmul.f32 %v3059, %v3066
  %v3073 = vmul.f32 %v3060, %v3066
  %v3074 = vmul.f32 %v3061, %v3066
  %v3075 = vmul.f32 %v3062, %v3066
  %v3076 = vadd.f32 %v3044, %v3067
  %v3077 = vadd.f32 %v3045, %v3068
  %v3078 = vadd.f32 %v3046, %v3069
  %v3079 = vadd.f32 %v3047, %v3070
  %v3080 = vadd.f32 %v3048, %v3071
  %v3081 = vadd.f32 %v3049, %v3072
  %v3082 = vadd.f32 %v3050, %v3073
  %v3083 = vadd.f32 %v3051, %v3074
  %v3084 = vadd.f32 %v3052, %v3075
  %s3085 = scalar_lea.vmem [#allocation2], 16
  %v3086 = vld [vmem:[%s3085] sm:$0xff]
  %v3087 = vld [vmem:[%s3085 + $0x8] sm:$0xff]
  %v3088 = vld [vmem:[%s3085 + $0x10] sm:$0xff]
  %v3089 = vld [vmem:[%s3085 + $0x28] sm:$0xff]
  %v3090 = vld [vmem:[%s3085 + $0x30] sm:$0xff]
  %v3091 = vld [vmem:[%s3085 + $0x38] sm:$0xff]
  %v3092 = vld [vmem:[%s3085 + $0x50] sm:$0xff]
  %v3093 = vld [vmem:[%s3085 + $0x58] sm:$0xff]
  %v3094 = vld [vmem:[%s3085 + $0x60] sm:$0xff]
  %v3095 = vlaneseq
  %v3096 = vshrl.u32 %v3095, 7
  %v3097 = vsub.s32 2, %v3096
  %v3098 = vrot.slane %v3020, %v3097
  %v3099 = vmul.f32 %v3086, %v3098
  %v3100 = vmul.f32 %v3087, %v3098
  %v3101 = vmul.f32 %v3088, %v3098
  %v3102 = vmul.f32 %v3089, %v3098
  %v3103 = vmul.f32 %v3090, %v3098
  %v3104 = vmul.f32 %v3091, %v3098
  %v3105 = vmul.f32 %v3092, %v3098
  %v3106 = vmul.f32 %v3093, %v3098
  %v3107 = vmul.f32 %v3094, %v3098
  %v3108 = vadd.f32 %v3076, %v3099
  %v3109 = vadd.f32 %v3077, %v3100
  %v3110 = vadd.f32 %v3078, %v3101
  %v3111 = vadd.f32 %v3079, %v3102
  %v3112 = vadd.f32 %v3080, %v3103
  %v3113 = vadd.f32 %v3081, %v3104
  %v3114 = vadd.f32 %v3082, %v3105
  %v3115 = vadd.f32 %v3083, %v3106
  %v3116 = vadd.f32 %v3084, %v3107
  %v3117 = vld [vmem:[%s2988] sm:$0xff]
  %v3118 = vld [vmem:[%s2988 + $0x8] sm:$0xff]
  %v3119 = vld [vmem:[%s2988 + $0x10] sm:$0xff]
  %v3120 = vld [vmem:[%s2988 + $0x28] sm:$0xff]
  %v3121 = vld [vmem:[%s2988 + $0x30] sm:$0xff]
  %v3122 = vld [vmem:[%s2988 + $0x38] sm:$0xff]
  %v3123 = vld [vmem:[%s2988 + $0x50] sm:$0xff]
  %v3124 = vld [vmem:[%s2988 + $0x58] sm:$0xff]
  %v3125 = vld [vmem:[%s2988 + $0x60] sm:$0xff]
  %v3126 = vlaneseq
  %v3127 = vshrl.u32 %v3126, 7
  %v3128 = vsub.s32 3, %v3127
  %v3129 = vrot.slane %v3020, %v3128
  %v3130 = vmul.f32 %v3117, %v3129
  %v3131 = vmul.f32 %v3118, %v3129
  %v3132 = vmul.f32 %v3119, %v3129
  %v3133 = vmul.f32 %v3120, %v3129
  %v3134 = vmul.f32 %v3121, %v3129
  %v3135 = vmul.f32 %v3122, %v3129
  %v3136 = vmul.f32 %v3123, %v3129
  %v3137 = vmul.f32 %v3124, %v3129
  %v3138 = vmul.f32 %v3125, %v3129
  %v3139 = vadd.f32 %v3108, %v3130
  %v3140 = vadd.f32 %v3109, %v3131
  %v3141 = vadd.f32 %v3110, %v3132
  %v3142 = vadd.f32 %v3111, %v3133
  %v3143 = vadd.f32 %v3112, %v3134
  %v3144 = vadd.f32 %v3113, %v3135
  %v3145 = vadd.f32 %v3114, %v3136
  %v3146 = vadd.f32 %v3115, %v3137
  %v3147 = vadd.f32 %v3116, %v3138
  %v3148 = vld [vmem:[%s2996] sm:$0xff]
  %v3149 = vld [vmem:[%s2996 + $0x8] sm:$0xff]
  %v3150 = vld [vmem:[%s2996 + $0x10] sm:$0xff]
  %v3151 = vld [vmem:[%s2996 + $0x28] sm:$0xff]
  %v3152 = vld [vmem:[%s2996 + $0x30] sm:$0xff]
  %v3153 = vld [vmem:[%s2996 + $0x38] sm:$0xff]
  %v3154 = vld [vmem:[%s2996 + $0x50] sm:$0xff]
  %v3155 = vld [vmem:[%s2996 + $0x58] sm:$0xff]
  %v3156 = vld [vmem:[%s2996 + $0x60] sm:$0xff]
  %v3157 = vlaneseq
  %v3158 = vshrl.u32 %v3157, 7
  %v3159 = vsub.s32 4, %v3158
  %v3160 = vrot.slane %v3020, %v3159
  %v3161 = vmul.f32 %v3148, %v3160
  %v3162 = vmul.f32 %v3149, %v3160
  %v3163 = vmul.f32 %v3150, %v3160
  %v3164 = vmul.f32 %v3151, %v3160
  %v3165 = vmul.f32 %v3152, %v3160
  %v3166 = vmul.f32 %v3153, %v3160
  %v3167 = vmul.f32 %v3154, %v3160
  %v3168 = vmul.f32 %v3155, %v3160
  %v3169 = vmul.f32 %v3156, %v3160
  %v3170 = vadd.f32 %v3139, %v3161
  %v3171 = vadd.f32 %v3140, %v3162
  %v3172 = vadd.f32 %v3141, %v3163
  %v3173 = vadd.f32 %v3142, %v3164
  %v3174 = vadd.f32 %v3143, %v3165
  %v3175 = vadd.f32 %v3144, %v3166
  %v3176 = vadd.f32 %v3145, %v3167
  %v3177 = vadd.f32 %v3146, %v3168
  %v3178 = vadd.f32 %v3147, %v3169
  %v3179 = vld [vmem:[%s2999] sm:$0xff]
  %v3180 = vld [vmem:[%s2999 + $0x8] sm:$0xff]
  %v3181 = vld [vmem:[%s2999 + $0x10] sm:$0xff]
  %v3182 = vld [vmem:[%s2999 + $0x28] sm:$0xff]
  %v3183 = vld [vmem:[%s2999 + $0x30] sm:$0xff]
  %v3184 = vld [vmem:[%s2999 + $0x38] sm:$0xff]
  %v3185 = vld [vmem:[%s2999 + $0x50] sm:$0xff]
  %v3186 = vld [vmem:[%s2999 + $0x58] sm:$0xff]
  %v3187 = vld [vmem:[%s2999 + $0x60] sm:$0xff]
  %v3188 = vlaneseq
  %v3189 = vshrl.u32 %v3188, 7
  %v3190 = vsub.s32 5, %v3189
  %v3191 = vrot.slane %v3020, %v3190
  %v3192 = vmul.f32 %v3179, %v3191
  %v3193 = vmul.f32 %v3180, %v3191
  %v3194 = vmul.f32 %v3181, %v3191
  %v3195 = vmul.f32 %v3182, %v3191
  %v3196 = vmul.f32 %v3183, %v3191
  %v3197 = vmul.f32 %v3184, %v3191
  %v3198 = vmul.f32 %v3185, %v3191
  %v3199 = vmul.f32 %v3186, %v3191
  %v3200 = vmul.f32 %v3187, %v3191
  %v3201 = vadd.f32 %v3170, %v3192
  %v3202 = vadd.f32 %v3171, %v3193
  %v3203 = vadd.f32 %v3172, %v3194
  %v3204 = vadd.f32 %v3173, %v3195
  %v3205 = vadd.f32 %v3174, %v3196
  %v3206 = vadd.f32 %v3175, %v3197
  %v3207 = vadd.f32 %v3176, %v3198
  %v3208 = vadd.f32 %v3177, %v3199
  %v3209 = vadd.f32 %v3178, %v3200
  %s3210 = scalar_lea.vmem [#allocation2], 80
  %v3211 = vld [vmem:[%s3210] sm:$0xff]
  %v3212 = vld [vmem:[%s3210 + $0x8] sm:$0xff]
  %v3213 = vld [vmem:[%s3210 + $0x10] sm:$0xff]
  %v3214 = vld [vmem:[%s3210 + $0x28] sm:$0xff]
  %v3215 = vld [vmem:[%s3210 + $0x30] sm:$0xff]
  %v3216 = vld [vmem:[%s3210 + $0x38] sm:$0xff]
  %v3217 = vld [vmem:[%s3210 + $0x50] sm:$0xff]
  %v3218 = vld [vmem:[%s3210 + $0x58] sm:$0xff]
  %v3219 = vld [vmem:[%s3210 + $0x60] sm:$0xff]
  %v3220 = vlaneseq
  %v3221 = vshrl.u32 %v3220, 7
  %v3222 = vsub.s32 6, %v3221
  %v3223 = vrot.slane %v3020, %v3222
  %v3224 = vmul.f32 %v3211, %v3223
  %v3225 = vmul.f32 %v3212, %v3223
  %v3226 = vmul.f32 %v3213, %v3223
  %v3227 = vmul.f32 %v3214, %v3223
  %v3228 = vmul.f32 %v3215, %v3223
  %v3229 = vmul.f32 %v3216, %v3223
  %v3230 = vmul.f32 %v3217, %v3223
  %v3231 = vmul.f32 %v3218, %v3223
  %v3232 = vmul.f32 %v3219, %v3223
  %v3233 = vadd.f32 %v3201, %v3224
  %v3234 = vadd.f32 %v3202, %v3225
  %v3235 = vadd.f32 %v3203, %v3226
  %v3236 = vadd.f32 %v3204, %v3227
  %v3237 = vadd.f32 %v3205, %v3228
  %v3238 = vadd.f32 %v3206, %v3229
  %v3239 = vadd.f32 %v3207, %v3230
  %v3240 = vadd.f32 %v3208, %v3231
  %v3241 = vadd.f32 %v3209, %v3232
  %v3242 = vld [vmem:[%s3004] sm:$0xff]
  %v3243 = vld [vmem:[%s3004 + $0x8] sm:$0xff]
  %v3244 = vld [vmem:[%s3004 + $0x10] sm:$0xff]
  %v3245 = vld [vmem:[%s3004 + $0x28] sm:$0xff]
  %v3246 = vld [vmem:[%s3004 + $0x30] sm:$0xff]
  %v3247 = vld [vmem:[%s3004 + $0x38] sm:$0xff]
  %v3248 = vld [vmem:[%s3004 + $0x50] sm:$0xff]
  %v3249 = vld [vmem:[%s3004 + $0x58] sm:$0xff]
  %v3250 = vld [vmem:[%s3004 + $0x60] sm:$0xff]
  %v3251 = vlaneseq
  %v3252 = vshrl.u32 %v3251, 7
  %v3253 = vsub.s32 7, %v3252
  %v3254 = vrot.slane %v3020, %v3253
  %v3255 = vmul.f32 %v3242, %v3254
  %v3256 = vmul.f32 %v3243, %v3254
  %v3257 = vmul.f32 %v3244, %v3254
  %v3258 = vmul.f32 %v3245, %v3254
  %v3259 = vmul.f32 %v3246, %v3254
  %v3260 = vmul.f32 %v3247, %v3254
  %v3261 = vmul.f32 %v3248, %v3254
  %v3262 = vmul.f32 %v3249, %v3254
  %v3263 = vmul.f32 %v3250, %v3254
  %v3264 = vadd.f32 %v3233, %v3255
  %v3265 = vadd.f32 %v3234, %v3256
  %v3266 = vadd.f32 %v3235, %v3257
  %v3267 = vadd.f32 %v3236, %v3258
  %v3268 = vadd.f32 %v3237, %v3259
  %v3269 = vadd.f32 %v3238, %v3260
  %v3270 = vadd.f32 %v3239, %v3261
  %v3271 = vadd.f32 %v3240, %v3262
  %v3272 = vadd.f32 %v3241, %v3263
  %v3273 = vld [vmem:[%s3007] sm:$0xff]
  %v3274 = vld [vmem:[%s3007 + $0x8] sm:$0xff]
  %v3275 = vld [vmem:[%s3007 + $0x10] sm:$0xff]
  %v3276 = vld [vmem:[%s3007 + $0x28] sm:$0xff]
  %v3277 = vld [vmem:[%s3007 + $0x30] sm:$0xff]
  %v3278 = vld [vmem:[%s3007 + $0x38] sm:$0xff]
  %v3279 = vld [vmem:[%s3007 + $0x50] sm:$0xff]
  %v3280 = vld [vmem:[%s3007 + $0x58] sm:$0xff]
  %v3281 = vld [vmem:[%s3007 + $0x60] sm:$0xff]
  %v3282 = vlaneseq
  %v3283 = vshrl.u32 %v3282, 7
  %v3284 = vsub.s32 0, %v3283
  %v3285 = vrot.slane %v3021, %v3284
  %v3286 = vmul.f32 %v3273, %v3285
  %v3287 = vmul.f32 %v3274, %v3285
  %v3288 = vmul.f32 %v3275, %v3285
  %v3289 = vmul.f32 %v3276, %v3285
  %v3290 = vmul.f32 %v3277, %v3285
  %v3291 = vmul.f32 %v3278, %v3285
  %v3292 = vmul.f32 %v3279, %v3285
  %v3293 = vmul.f32 %v3280, %v3285
  %v3294 = vmul.f32 %v3281, %v3285
  %v3295 = vadd.f32 %v3264, %v3286
  %v3296 = vadd.f32 %v3265, %v3287
  %v3297 = vadd.f32 %v3266, %v3288
  %v3298 = vadd.f32 %v3267, %v3289
  %v3299 = vadd.f32 %v3268, %v3290
  %v3300 = vadd.f32 %v3269, %v3291
  %v3301 = vadd.f32 %v3270, %v3292
  %v3302 = vadd.f32 %v3271, %v3293
  %v3303 = vadd.f32 %v3272, %v3294
  %v3304 = vsel %vm104, %v3295, 0.0
  %3305 = vadd.xlane.f32.xlu0 %v3304
  %v3306 = vpop.xlane.xlu0 %3305
  %v3307 = vsel %vm104, %v3296, 0.0
  %3308 = vadd.xlane.f32.xlu0 %v3307
  %v3309 = vpop.xlane.xlu0 %3308
  %v3310 = vsel %vm104, %v3297, 0.0
  %3311 = vadd.xlane.f32.xlu0 %v3310
  %v3312 = vpop.xlane.xlu0 %3311
  %v3313 = vsel %vm104, %v3298, 0.0
  %3314 = vadd.xlane.f32.xlu0 %v3313
  %v3315 = vpop.xlane.xlu0 %3314
  %v3316 = vsel %vm104, %v3299, 0.0
  %3317 = vadd.xlane.f32.xlu0 %v3316
  %v3318 = vpop.xlane.xlu0 %3317
  %v3319 = vsel %vm104, %v3300, 0.0
  %3320 = vadd.xlane.f32.xlu0 %v3319
  %v3321 = vpop.xlane.xlu0 %3320
  %v3322 = vsel %vm104, %v3301, 0.0
  %3323 = vadd.xlane.f32.xlu0 %v3322
  %v3324 = vpop.xlane.xlu0 %3323
  %v3325 = vsel %vm104, %v3302, 0.0
  %3326 = vadd.xlane.f32.xlu0 %v3325
  %v3327 = vpop.xlane.xlu0 %3326
  %v3328 = vsel %vm104, %v3303, 0.0
  %3329 = vadd.xlane.f32.xlu0 %v3328
  %v3330 = vpop.xlane.xlu0 %3329
  %v3331 = vld [vmem:[#allocation3] sm:$0x1]
  %v3333 = vlaneseq
  %v3334 = vshrl.u32 %v3333, 7
  %v3335 = vsub.s32 0, %v3334
  %v3336 = vrot.slane %v3331, %v3335
  %3337 = vset.pattern.permute.xlu0 0
  %3338 = vperm.xlu0 %3337, %v3336
  %v3339 = vpop.permute.xlu0 %3338
  %v3341 = vadd.f32 %v3306, %v3339
  %v3342 = vadd.f32 %v3309, %v3339
  %v3343 = vadd.f32 %v3312, %v3339
  %v3344 = vadd.f32 %v3315, %v3339
  %v3345 = vadd.f32 %v3318, %v3339
  %v3346 = vadd.f32 %v3321, %v3339
  %v3347 = vadd.f32 %v3324, %v3339
  %v3348 = vadd.f32 %v3327, %v3339
  %v3349 = vadd.f32 %v3330, %v3339
  %v3350 = vmax.f32 %v3341, 0.0
  %v3351 = vmax.f32 %v3342, 0.0
  %v3352 = vmax.f32 %v3343, 0.0
  %v3353 = vmax.f32 %v3344, 0.0
  %v3354 = vmax.f32 %v3345, 0.0
  %v3355 = vmax.f32 %v3346, 0.0
  %v3356 = vmax.f32 %v3347, 0.0
  %v3357 = vmax.f32 %v3348, 0.0
  %v3358 = vmax.f32 %v3349, 0.0
  %v3359 = vmax.f32 %v3351, %v3352
  %v3360 = vmax.f32 %v3353, %v3356
  %v3361 = vmax.f32 %v3354, %v3355
  %v3362 = vmax.f32 %v3357, %v3358
  %v3363 = vmax.f32 %v3361, %v3362
  %v3364 = vld [vmem:[%s5] sm:$0xff]
  %3366 = vset.pattern.permute.xlu0 0
  %3367 = vperm.xlu0 %3366, %v3364
  %v3368 = vpop.permute.xlu0 %3367
  %v3371 = vlaneseq
  %v3372 = vand.u32 %v3371, 127
  %v3373 = vlaneseq
  %v3374 = vshrl.u32 %v3373, 7
  %v3375 = vsub.s32 %v3372, %v3374
  %v3376 = vrot.slane %v3350, %v3375
  %vm3377 = vcmask 1042434
  %v3378 = vsel %vm3377, %v3376, %v3376
  %vm3379 = vcmask 1043459
  %v3380 = vsel %vm3379, %v3376, %v3378
  %vm3381 = vcmask 1044484
  %v3382 = vsel %vm3381, %v3376, %v3380
  %vm3383 = vcmask 1045509
  %v3384 = vsel %vm3383, %v3376, %v3382
  %vm3385 = vcmask 1046534
  %v3386 = vsel %vm3385, %v3376, %v3384
  %vm3387 = vcmask 1047559
  %v3388 = vsel %vm3387, %v3376, %v3386
  %v3390 = vmul.f32 %v3368, %v3388
  %3391 = vset.pattern.permute.xlu0 1
  %3392 = vperm.xlu0 %3391, %v3364
  %v3393 = vpop.permute.xlu0 %3392
  %v3396 = vlaneseq
  %v3397 = vshrl.u32 %v3396, 7
  %v3398 = vsub.s32 %v3372, %v3397
  %v3399 = vrot.slane %v3359, %v3398
  %v3400 = vsel %vm3377, %v3399, %v3399
  %v3401 = vsel %vm3379, %v3399, %v3400
  %v3402 = vsel %vm3381, %v3399, %v3401
  %v3403 = vsel %vm3383, %v3399, %v3402
  %v3404 = vsel %vm3385, %v3399, %v3403
  %v3405 = vsel %vm3387, %v3399, %v3404
  %v3407 = vmul.f32 %v3393, %v3405
  %v3408 = vadd.f32 %v3390, %v3407
  %3409 = vset.pattern.permute.xlu0 2
  %3410 = vperm.xlu0 %3409, %v3364
  %v3411 = vpop.permute.xlu0 %3410
  %v3414 = vlaneseq
  %v3415 = vshrl.u32 %v3414, 7
  %v3416 = vsub.s32 %v3372, %v3415
  %v3417 = vrot.slane %v3360, %v3416
  %v3418 = vsel %vm3377, %v3417, %v3417
  %v3419 = vsel %vm3379, %v3417, %v3418
  %v3420 = vsel %vm3381, %v3417, %v3419
  %v3421 = vsel %vm3383, %v3417, %v3420
  %v3422 = vsel %vm3385, %v3417, %v3421
  %v3423 = vsel %vm3387, %v3417, %v3422
  %v3425 = vmul.f32 %v3411, %v3423
  %v3426 = vadd.f32 %v3408, %v3425
  %3427 = vset.pattern.permute.xlu0 3
  %3428 = vperm.xlu0 %3427, %v3364
  %v3429 = vpop.permute.xlu0 %3428
  %v3432 = vlaneseq
  %v3433 = vshrl.u32 %v3432, 7
  %v3434 = vsub.s32 %v3372, %v3433
  %v3435 = vrot.slane %v3363, %v3434
  %v3436 = vsel %vm3377, %v3435, %v3435
  %v3437 = vsel %vm3379, %v3435, %v3436
  %v3438 = vsel %vm3381, %v3435, %v3437
  %v3439 = vsel %vm3383, %v3435, %v3438
  %v3440 = vsel %vm3385, %v3435, %v3439
  %v3441 = vsel %vm3387, %v3435, %v3440
  %v3443 = vmul.f32 %v3429, %v3441
  %v3444 = vadd.f32 %v3426, %v3443
  %v3445 = vld [vmem:[%s6] sm:$0xff]
  %3447 = vset.pattern.permute.xlu0 0
  %3448 = vperm.xlu0 %3447, %v3445
  %v3449 = vpop.permute.xlu0 %3448
  %v3451 = vadd.f32 %v3444, %v3449
  %v3452 = vmax.f32 %v3451, 0.0
  %v3453 = vld [vmem:[%s7] sm:$0xff]
  %3455 = vset.pattern.permute.xlu0 0
  %3456 = vperm.xlu0 %3455, %v3453
  %v3457 = vpop.permute.xlu0 %3456
  %v3459 = vmul.f32 %v3452, %v3457
  %vm3460 = vcmask 64512
  %v3461 = vsel %vm3460, %v3459, 0.0
  %v3462 = vrot.slane %v3461, 4
  %v3463 = vadd.f32 %v3461, %v3462
  %v3464 = vrot.slane %v3463, 2
  %v3465 = vadd.f32 %v3463, %v3464
  %v3466 = vrot.slane %v3465, 1
  %v3467 = vadd.f32 %v3465, %v3466
  %v3468 = vld [vmem:[#allocation4] sm:$0x1]
  %3470 = vset.pattern.permute.xlu0 0
  %3471 = vperm.xlu0 %3470, %v3468
  %v3472 = vpop.permute.xlu0 %3471
  %v3474 = vlaneseq
  %v3475 = vshrl.u32 %v3474, 7
  %v3476 = vsub.s32 0, %v3475
  %v3477 = vrot.slane %v3472, %v3476
  %v3478 = vadd.f32 %v3467, %v3477
  %vm3479 = vcmask 57344
  %3480 = vst.msk [vmem:[%s9] sm:$0x1] %vm3479, %v3478
  // Predicated region
  $region38: #{relation_network_forward.1} parent=0 // pred_check
    _
  $region39: #{relation_network_forward.1} parent=0 // pred_check_branch
    %3482 = sbr.rel (0) target = $region41
  $region40: #{relation_network_forward.1} parent=0 // pred_region
    _
  $region41: #{relation_network_forward.1} parent=0 // pred_fallthru
    _
  // Predicated region
  $region42: #{relation_network_forward.1} parent=0 // pred_check
    _
  $region43: #{relation_network_forward.1} parent=0 // pred_check_branch
    %3484 = sbr.rel (0) target = $region45
  $region44: #{relation_network_forward.1} parent=0 // pred_region
    _
  $region45: #{relation_network_forward.1} parent=0 // pred_fallthru
    _

</llo_original>
